<compile_context>
chip_gen: v7x
topology: tpu7x:2x2x1
jax: 0.10.0
libtpu: 0.0.40
codegen_flags: <defaults>
</compile_context>

<pallas_src>
import functools

import jax
import jax.numpy as jnp
from jax import lax
from jax.experimental import pallas as pl
from jax.experimental.pallas import tpu as pltpu


# ---------------------------------------------------------------------------
# Spectral-norm weight preprocessing (plain JAX glue — parameter setup only)
# TODO(synk): power-iteration spectral norm is parameter preprocessing, kept in
# plain JAX rather than a Pallas kernel.
# ---------------------------------------------------------------------------
def _l2normalize(v, eps=1e-4):
    return v / (jnp.linalg.norm(v) + eps)


def spectral_norm(w2d, u, v, power_iterations=1):
    # w2d: (Cout, Cin) for a 1x1 conv weight
    for _ in range(power_iterations):
        v = _l2normalize(w2d.T @ u)
        u = _l2normalize(w2d @ v)
    sigma = jnp.dot(u, w2d @ v)
    return w2d / sigma


# ---------------------------------------------------------------------------
# Pallas kernels
# ---------------------------------------------------------------------------
def proj_kernel(x_ref, w_ref, th_ref, pg_ref, *, C8):
    """Fused theta/phi/g 1x1 convs (one weight matrix) + 2x2 max-pool of phi/g.

    x_ref:  (1, 4, TP, C)   f32   -- 4 = 2x2 window position, TP pooled cells
    w_ref:  (C, D)          bf16  -- [theta | phi | g] columns, D = C/8 + C/8 + C/2
    th_ref: (1, 4, TP, C8)  bf16  -- theta at every (window, cell) query position
    pg_ref: (1, TP, C8+C2)  bf16  -- max over the 4 window positions of [phi | g]
    """
    w = w_ref[...]
    pooled = None
    for k in range(4):  # static unroll over the 2x2 pooling window
        xk = x_ref[0, k].astype(jnp.bfloat16)                      # (TP, C)
        yk = jnp.dot(xk, w, preferred_element_type=jnp.float32)    # (TP, D) f32
        th_ref[0, k] = yk[:, :C8].astype(th_ref.dtype)
        pg = yk[:, C8:]
        pooled = pg if pooled is None else jnp.maximum(pooled, pg)
    pg_ref[0] = pooled.astype(pg_ref.dtype)


def attn_kernel(gamma_ref, x_ref, th_ref, pg_ref, wo_ref, out_ref, *, C8):
    """scores -> exp -> attend -> 1/sum (EUP) -> o conv -> gamma*o + x."""
    theta = th_ref[0]                           # (TQ, C8)     bf16
    pg = pg_ref[0]                              # (N4, C8+C2)  bf16
    phi = pg[:, :C8]                            # (N4, C8)
    g = pg[:, C8:]                              # (N4, C2)

    # s[q, m] = theta[q, :] . phi[m, :]
    s = lax.dot_general(theta, phi, (((1,), (1,)), ((), ())),
                        preferred_element_type=jnp.float32)        # (TQ, N4) f32
    s_max = jnp.max(s, axis=-1, keepdims=True)
    e = jnp.exp(s - s_max)                                         # f32 softmax math
    denom = jnp.sum(e, axis=-1, keepdims=True)

    # Attend with the UN-normalized weights, then scale by 1/denom (EUP recip).
    attn_g = jnp.dot(e.astype(jnp.bfloat16), g,
                     preferred_element_type=jnp.float32)           # (TQ, C2)
    attn_g = attn_g * pl.reciprocal(denom, approx=True)

    o = jnp.dot(attn_g.astype(jnp.bfloat16), wo_ref[...],
                preferred_element_type=jnp.float32)                # (TQ, C)
    out_ref[0] = gamma_ref[0] * o + x_ref[0]


# ---------------------------------------------------------------------------
# Wrapper
# ---------------------------------------------------------------------------
def _pick_tile(total, cap):
    """Largest divisor of `total` that is <= cap and a multiple of 8 (else total)."""
    if total <= cap:
        return total
    for t in range(cap, 0, -1):
        if total % t == 0 and t % 8 == 0:
            return t
    return total


def self_attention_forward(x_nchw, params):
    B, C, W, H = x_nchw.shape
    assert C % 8 == 0 and W % 2 == 0 and H % 2 == 0
    C8, C2 = C // 8, C // 2
    D = 2 * C8 + C2
    W2, H2 = W // 2, H // 2
    N4 = W2 * H2
    N = W * H

    # Fused [theta | phi | g] weight and o weight, bf16 for the MXU.
    w_all = jnp.concatenate(
        [params["theta_T"], params["phi_T"], params["g_T"]], axis=1
    ).astype(jnp.bfloat16)                                   # (C, D)
    wo = params["o_T"].astype(jnp.bfloat16)                  # (C2, C)
    gamma = jnp.reshape(params["gamma"], (1,)).astype(jnp.float32)

    # NCHW -> windowed channels-last (B, 4, N4, C):
    #   xw[b, 2*kw+kh, w2*H2+h2, c] == x[b, c, 2*w2+kw, 2*h2+kh]
    xw = x_nchw.astype(jnp.float32).reshape(B, C, W2, 2, H2, 2)
    xw = jnp.transpose(xw, (0, 3, 5, 2, 4, 1)).reshape(B, 4, N4, C)

    # ---- projection + pooling kernel --------------------------------------
    TP = _pick_tile(N4, 64)                 # pooled cells per step (4*TP query rows)
    theta_w, pg = pl.pallas_call(
        functools.partial(proj_kernel, C8=C8),
        out_shape=(
            jax.ShapeDtypeStruct((B, 4, N4, C8), jnp.bfloat16),
            jax.ShapeDtypeStruct((B, N4, C8 + C2), jnp.bfloat16),
        ),
        grid=(B, N4 // TP),
        in_specs=[
            pl.BlockSpec((1, 4, TP, C), lambda b, t: (b, 0, t, 0)),
            pl.BlockSpec((C, D), lambda b, t: (0, 0)),
        ],
        out_specs=(
            pl.BlockSpec((1, 4, TP, C8), lambda b, t: (b, 0, t, 0)),
            pl.BlockSpec((1, TP, C8 + C2), lambda b, t: (b, t, 0)),
        ),
        compiler_params=pltpu.CompilerParams(
            dimension_semantics=("parallel", "parallel")),
    )(xw, w_all)

    # Free contiguous-collapse reshapes: query axis order is (window, cell).
    x_q = xw.reshape(B, N, C)                # f32 residual (aliased to the output)
    theta_q = theta_w.reshape(B, N, C8)      # bf16

    # ---- attention kernel (tiled over the query axis) ----------------------
    TQ = _pick_tile(N, 256)
    out_q = pl.pallas_call(
        functools.partial(attn_kernel, C8=C8),
        out_shape=jax.ShapeDtypeStruct((B, N, C), jnp.float32),
        grid=(B, N // TQ),
        in_specs=[
            pl.BlockSpec(memory_space=pltpu.MemorySpace.SMEM),        # gamma
            pl.BlockSpec((1, TQ, C), lambda b, q: (b, q, 0)),         # x (residual)
            pl.BlockSpec((1, TQ, C8), lambda b, q: (b, q, 0)),        # theta
            pl.BlockSpec((1, N4, C8 + C2), lambda b, q: (b, 0, 0)),   # pooled [phi|g]
            pl.BlockSpec((C2, C), lambda b, q: (0, 0)),               # o weight^T
        ],
        out_specs=pl.BlockSpec((1, TQ, C), lambda b, q: (b, q, 0)),
        input_output_aliases={1: 0},          # write residual in place over x
        compiler_params=pltpu.CompilerParams(
            dimension_semantics=("parallel", "parallel")),
    )(gamma, x_q, theta_q, pg, wo)

    # Windowed query order -> NCHW.
    out = out_q.reshape(B, 2, 2, W2, H2, C)
    out = jnp.transpose(out, (0, 5, 3, 1, 4, 2)).reshape(B, C, W, H)
    return out


# ---------------------------------------------------------------------------
# Deterministic parameter construction (shapes per module __init__)
# ---------------------------------------------------------------------------
def make_params(key, in_dim):
    C = in_dim
    C8, C2 = C // 8, C // 2
    ks = jax.random.split(key, 12)

    def sn_weight(kw, ku, kv, cout, cin):
        w = 0.1 * jax.random.normal(kw, (cout, cin), jnp.float32)
        u = _l2normalize(jax.random.normal(ku, (cout,), jnp.float32))
        v = _l2normalize(jax.random.normal(kv, (cin,), jnp.float32))
        return spectral_norm(w, u, v, power_iterations=1)

    w_theta = sn_weight(ks[0], ks[1], ks[2], C8, C)   # theta: Conv2d(C -> C//8, 1x1)
    w_phi = sn_weight(ks[3], ks[4], ks[5], C8, C)     # phi:   Conv2d(C -> C//8, 1x1)
    w_g = sn_weight(ks[6], ks[7], ks[8], C2, C)       # g:     Conv2d(C -> C//2, 1x1)
    w_o = sn_weight(ks[9], ks[10], ks[11], C, C2)     # o:     Conv2d(C//2 -> C, 1x1)

    return {
        "theta_T": w_theta.T,            # (C, C8)
        "phi_T": w_phi.T,                # (C, C8)
        "g_T": w_g.T,                    # (C, C2)
        "o_T": w_o.T,                    # (C2, C)
        "gamma": jnp.zeros((), jnp.float32),   # module init: torch.tensor(0.)
    }


# ---------------------------------------------------------------------------
# Pure-JAX reference (mirrors the PyTorch forward in NCHW, f32 throughout)
# ---------------------------------------------------------------------------
def reference_forward(x, params):
    B, C, W, H = x.shape
    N = W * H
    wt, wp = params["theta_T"].T, params["phi_T"].T
    wg, wo = params["g_T"].T, params["o_T"].T
    gamma = params["gamma"]

    def conv1x1(inp, w):  # inp (B, Ci, W_, H_), w (Co, Ci)
        return jnp.einsum("oc,bcwh->bowh", w, inp)

    def maxpool2(inp):
        b, cc, w_, h_ = inp.shape
        return jnp.max(inp.reshape(b, cc, w_ // 2, 2, h_ // 2, 2), axis=(3, 5))

    theta = conv1x1(x, wt).reshape(B, -1, N)                  # (B, C8, N)
    phi = maxpool2(conv1x1(x, wp)).reshape(B, -1, N // 4)     # (B, C8, N4)
    attention = jax.nn.softmax(jnp.einsum("bcn,bcm->bnm", theta, phi), axis=-1)
    g = maxpool2(conv1x1(x, wg)).reshape(B, -1, N // 4)       # (B, C2, N4)
    attn_g = jnp.einsum("bcm,bnm->bcn", g, attention).reshape(B, -1, W, H)
    out = conv1x1(attn_g, wo)
    return gamma * out + x


if __name__ == "__main__":
    # in_dim=32 -> C//8=4, C//2=16; 32x32 image -> N=1024, N4=256
    # (large enough that both pallas_calls actually exercise the tiled grid).
    B, C, W, H = 2, 32, 32, 32
    key = jax.random.PRNGKey(0)
    kx, kp = jax.random.split(key)
    x = jax.random.normal(kx, (B, C, W, H), jnp.float32)
    params = make_params(kp, C)

    forward = jax.jit(self_attention_forward)

    # Module-default forward (gamma initialized to zero => output == input exactly).
    out0 = jax.block_until_ready(forward(x, params))
    ref0 = reference_forward(x, params)
    assert jnp.allclose(out0, ref0, atol=1e-5, rtol=1e-5)

    # Nonzero gamma exercises the full bf16 attention path (looser tolerance).
    params_nz = dict(params, gamma=jnp.asarray(0.5, jnp.float32))
    out1 = jax.block_until_ready(forward(x, params_nz))
    ref1 = reference_forward(x, params_nz)
    rel = jnp.linalg.norm(out1 - ref1) / jnp.linalg.norm(ref1)
    assert float(rel) < 3e-2, f"relative error too large: {float(rel)}"

    print("KERNEL_OK")
</pallas_src>

<mosaic_0001>
module attributes {stable_mosaic.version = 11 : i64} {
  func.func @proj_kernel(%arg0: i32, %arg1: i32, %arg2: memref<1x4x64x32xf32, #tpu.memory_space<vmem>>, %arg3: memref<32x24xbf16, #tpu.memory_space<vmem>>, %arg4: memref<1x4x64x4xbf16, #tpu.memory_space<vmem>>, %arg5: memref<1x64x20xbf16, #tpu.memory_space<vmem>>) attributes {dimension_semantics = [#tpu.dimension_semantics<parallel>, #tpu.dimension_semantics<parallel>], iteration_bounds = array<i64: 2, 4>, scalar_prefetch = 0 : i64, scratch_operands = 0 : i64, tpu.core_type = #tpu.core_type<tc>, window_params = [{transform_indices = @transform_0, window_bounds = array<i64: 1, 4, 64, 32>}, {pipeline_mode = #tpu.pipeline_mode<synchronous>, transform_indices = @transform_1, window_bounds = array<i64: 32, 24>}, {transform_indices = @transform_2, window_bounds = array<i64: 1, 4, 64, 4>}, {transform_indices = @transform_3, window_bounds = array<i64: 1, 64, 20>}]} {
    %c0 = arith.constant 0 : index
    %c0_0 = arith.constant 0 : index
    %0 = vector.load %arg3[%c0, %c0_0] : memref<32x24xbf16, #tpu.memory_space<vmem>>, vector<32x24xbf16>
    %c0_1 = arith.constant 0 : index
    %c0_2 = arith.constant 0 : index
    %c0_3 = arith.constant 0 : index
    %c0_4 = arith.constant 0 : index
    %1 = vector.load %arg2[%c0_1, %c0_2, %c0_3, %c0_4] : memref<1x4x64x32xf32, #tpu.memory_space<vmem>>, vector<1x1x64x32xf32>
    %2 = vector.shape_cast %1 : vector<1x1x64x32xf32> to vector<64x32xf32>
    %3 = arith.truncf %2 : vector<64x32xf32> to vector<64x32xbf16>
    %cst = arith.constant dense<0.000000e+00> : vector<64x24xf32>
    %4 = tpu.matmul %3, %0, %cst {dimension_numbers = #tpu.dot_dimension_numbers<[1], [0], [0], [1], [0, 0, 1, 1], [], []>} : vector<64x32xbf16>, vector<32x24xbf16>, vector<64x24xf32> -> vector<64x24xf32>
    %5 = vector.extract_strided_slice %4 {offsets = [0, 0], sizes = [64, 4], strides = [1, 1]} : vector<64x24xf32> to vector<64x4xf32>
    %6 = arith.truncf %5 : vector<64x4xf32> to vector<64x4xbf16>
    %c0_5 = arith.constant 0 : index
    %c0_6 = arith.constant 0 : index
    %c0_7 = arith.constant 0 : index
    %c0_8 = arith.constant 0 : index
    %7 = vector.load %arg4[%c0_5, %c0_6, %c0_7, %c0_8] : memref<1x4x64x4xbf16, #tpu.memory_space<vmem>>, vector<1x1x64x4xbf16>
    %8 = vector.shape_cast %7 : vector<1x1x64x4xbf16> to vector<64x4xbf16>
    %9 = vector.shape_cast %6 : vector<64x4xbf16> to vector<1x1x64x4xbf16>
    tpu.vector_store %arg4[%c0_5, %c0_6, %c0_7, %c0_8], %9 {strides = array<i32>} : memref<1x4x64x4xbf16, #tpu.memory_space<vmem>>, vector<1x1x64x4xbf16>,
    %10 = vector.extract_strided_slice %4 {offsets = [0, 4], sizes = [64, 20], strides = [1, 1]} : vector<64x24xf32> to vector<64x20xf32>
    %c0_9 = arith.constant 0 : index
    %c1 = arith.constant 1 : index
    %c0_10 = arith.constant 0 : index
    %c0_11 = arith.constant 0 : index
    %11 = vector.load %arg2[%c0_9, %c1, %c0_10, %c0_11] : memref<1x4x64x32xf32, #tpu.memory_space<vmem>>, vector<1x1x64x32xf32>
    %12 = vector.shape_cast %11 : vector<1x1x64x32xf32> to vector<64x32xf32>
    %13 = arith.truncf %12 : vector<64x32xf32> to vector<64x32xbf16>
    %cst_12 = arith.constant dense<0.000000e+00> : vector<64x24xf32>
    %14 = tpu.matmul %13, %0, %cst_12 {dimension_numbers = #tpu.dot_dimension_numbers<[1], [0], [0], [1], [0, 0, 1, 1], [], []>} : vector<64x32xbf16>, vector<32x24xbf16>, vector<64x24xf32> -> vector<64x24xf32>
    %15 = vector.extract_strided_slice %14 {offsets = [0, 0], sizes = [64, 4], strides = [1, 1]} : vector<64x24xf32> to vector<64x4xf32>
    %16 = arith.truncf %15 : vector<64x4xf32> to vector<64x4xbf16>
    %c0_13 = arith.constant 0 : index
    %c1_14 = arith.constant 1 : index
    %c0_15 = arith.constant 0 : index
    %c0_16 = arith.constant 0 : index
    %17 = vector.load %arg4[%c0_13, %c1_14, %c0_15, %c0_16] : memref<1x4x64x4xbf16, #tpu.memory_space<vmem>>, vector<1x1x64x4xbf16>
    %18 = vector.shape_cast %17 : vector<1x1x64x4xbf16> to vector<64x4xbf16>
    %19 = vector.shape_cast %16 : vector<64x4xbf16> to vector<1x1x64x4xbf16>
    tpu.vector_store %arg4[%c0_13, %c1_14, %c0_15, %c0_16], %19 {strides = array<i32>} : memref<1x4x64x4xbf16, #tpu.memory_space<vmem>>, vector<1x1x64x4xbf16>,
    %20 = vector.extract_strided_slice %14 {offsets = [0, 4], sizes = [64, 20], strides = [1, 1]} : vector<64x24xf32> to vector<64x20xf32>
    %21 = arith.maximumf %10, %20 : vector<64x20xf32>
    %c0_17 = arith.constant 0 : index
    %c2 = arith.constant 2 : index
    %c0_18 = arith.constant 0 : index
    %c0_19 = arith.constant 0 : index
    %22 = vector.load %arg2[%c0_17, %c2, %c0_18, %c0_19] : memref<1x4x64x32xf32, #tpu.memory_space<vmem>>, vector<1x1x64x32xf32>
    %23 = vector.shape_cast %22 : vector<1x1x64x32xf32> to vector<64x32xf32>
    %24 = arith.truncf %23 : vector<64x32xf32> to vector<64x32xbf16>
    %cst_20 = arith.constant dense<0.000000e+00> : vector<64x24xf32>
    %25 = tpu.matmul %24, %0, %cst_20 {dimension_numbers = #tpu.dot_dimension_numbers<[1], [0], [0], [1], [0, 0, 1, 1], [], []>} : vector<64x32xbf16>, vector<32x24xbf16>, vector<64x24xf32> -> vector<64x24xf32>
    %26 = vector.extract_strided_slice %25 {offsets = [0, 0], sizes = [64, 4], strides = [1, 1]} : vector<64x24xf32> to vector<64x4xf32>
    %27 = arith.truncf %26 : vector<64x4xf32> to vector<64x4xbf16>
    %c0_21 = arith.constant 0 : index
    %c2_22 = arith.constant 2 : index
    %c0_23 = arith.constant 0 : index
    %c0_24 = arith.constant 0 : index
    %28 = vector.load %arg4[%c0_21, %c2_22, %c0_23, %c0_24] : memref<1x4x64x4xbf16, #tpu.memory_space<vmem>>, vector<1x1x64x4xbf16>
    %29 = vector.shape_cast %28 : vector<1x1x64x4xbf16> to vector<64x4xbf16>
    %30 = vector.shape_cast %27 : vector<64x4xbf16> to vector<1x1x64x4xbf16>
    tpu.vector_store %arg4[%c0_21, %c2_22, %c0_23, %c0_24], %30 {strides = array<i32>} : memref<1x4x64x4xbf16, #tpu.memory_space<vmem>>, vector<1x1x64x4xbf16>,
    %31 = vector.extract_strided_slice %25 {offsets = [0, 4], sizes = [64, 20], strides = [1, 1]} : vector<64x24xf32> to vector<64x20xf32>
    %32 = arith.maximumf %21, %31 : vector<64x20xf32>
    %c0_25 = arith.constant 0 : index
    %c3 = arith.constant 3 : index
    %c0_26 = arith.constant 0 : index
    %c0_27 = arith.constant 0 : index
    %33 = vector.load %arg2[%c0_25, %c3, %c0_26, %c0_27] : memref<1x4x64x32xf32, #tpu.memory_space<vmem>>, vector<1x1x64x32xf32>
    %34 = vector.shape_cast %33 : vector<1x1x64x32xf32> to vector<64x32xf32>
    %35 = arith.truncf %34 : vector<64x32xf32> to vector<64x32xbf16>
    %cst_28 = arith.constant dense<0.000000e+00> : vector<64x24xf32>
    %36 = tpu.matmul %35, %0, %cst_28 {dimension_numbers = #tpu.dot_dimension_numbers<[1], [0], [0], [1], [0, 0, 1, 1], [], []>} : vector<64x32xbf16>, vector<32x24xbf16>, vector<64x24xf32> -> vector<64x24xf32>
    %37 = vector.extract_strided_slice %36 {offsets = [0, 0], sizes = [64, 4], strides = [1, 1]} : vector<64x24xf32> to vector<64x4xf32>
    %38 = arith.truncf %37 : vector<64x4xf32> to vector<64x4xbf16>
    %c0_29 = arith.constant 0 : index
    %c3_30 = arith.constant 3 : index
    %c0_31 = arith.constant 0 : index
    %c0_32 = arith.constant 0 : index
    %39 = vector.load %arg4[%c0_29, %c3_30, %c0_31, %c0_32] : memref<1x4x64x4xbf16, #tpu.memory_space<vmem>>, vector<1x1x64x4xbf16>
    %40 = vector.shape_cast %39 : vector<1x1x64x4xbf16> to vector<64x4xbf16>
    %41 = vector.shape_cast %38 : vector<64x4xbf16> to vector<1x1x64x4xbf16>
    tpu.vector_store %arg4[%c0_29, %c3_30, %c0_31, %c0_32], %41 {strides = array<i32>} : memref<1x4x64x4xbf16, #tpu.memory_space<vmem>>, vector<1x1x64x4xbf16>,
    %42 = vector.extract_strided_slice %36 {offsets = [0, 4], sizes = [64, 20], strides = [1, 1]} : vector<64x24xf32> to vector<64x20xf32>
    %43 = arith.maximumf %32, %42 : vector<64x20xf32>
    %44 = arith.truncf %43 : vector<64x20xf32> to vector<64x20xbf16>
    %c0_33 = arith.constant 0 : index
    %c0_34 = arith.constant 0 : index
    %c0_35 = arith.constant 0 : index
    %45 = vector.load %arg5[%c0_33, %c0_34, %c0_35] : memref<1x64x20xbf16, #tpu.memory_space<vmem>>, vector<1x64x20xbf16>
    %46 = vector.shape_cast %45 : vector<1x64x20xbf16> to vector<64x20xbf16>
    %47 = vector.shape_cast %44 : vector<64x20xbf16> to vector<1x64x20xbf16>
    tpu.vector_store %arg5[%c0_33, %c0_34, %c0_35], %47 {strides = array<i32>} : memref<1x64x20xbf16, #tpu.memory_space<vmem>>, vector<1x64x20xbf16>,
    return
  }
  func.func @transform_0(%arg0: i32, %arg1: i32) -> (i32, i32, i32, i32) {
    %c0_i32 = arith.constant 0 : i32
    %c0_i32_0 = arith.constant 0 : i32
    %c0_i32_1 = arith.constant 0 : i32
    return %arg0, %c0_i32, %arg1, %c0_i32_0 : i32, i32, i32, i32
  }
  func.func @transform_1(%arg0: i32, %arg1: i32) -> (i32, i32) {
    %c0_i32 = arith.constant 0 : i32
    %c0_i32_0 = arith.constant 0 : i32
    %c0_i32_1 = arith.constant 0 : i32
    return %c0_i32, %c0_i32_0 : i32, i32
  }
  func.func @transform_2(%arg0: i32, %arg1: i32) -> (i32, i32, i32, i32) {
    %c0_i32 = arith.constant 0 : i32
    %c0_i32_0 = arith.constant 0 : i32
    %c0_i32_1 = arith.constant 0 : i32
    return %arg0, %c0_i32, %arg1, %c0_i32_0 : i32, i32, i32, i32
  }
  func.func @transform_3(%arg0: i32, %arg1: i32) -> (i32, i32, i32) {
    %c0_i32 = arith.constant 0 : i32
    %c0_i32_0 = arith.constant 0 : i32
    return %arg0, %arg1, %c0_i32 : i32, i32, i32
  }
}

module attributes {stable_mosaic.version = 11 : i64} {
  func.func @attn_kernel(%arg0: i32, %arg1: i32, %arg2: memref<1xf32, #tpu.memory_space<smem>>, %arg3: memref<1x256x32xf32, #tpu.memory_space<vmem>>, %arg4: memref<1x256x4xbf16, #tpu.memory_space<vmem>>, %arg5: memref<1x256x20xbf16, #tpu.memory_space<vmem>>, %arg6: memref<16x32xbf16, #tpu.memory_space<vmem>>, %arg7: memref<1x256x32xf32, #tpu.memory_space<vmem>>) attributes {dimension_semantics = [#tpu.dimension_semantics<parallel>, #tpu.dimension_semantics<parallel>], iteration_bounds = array<i64: 2, 4>, scalar_prefetch = 0 : i64, scratch_operands = 0 : i64, tpu.core_type = #tpu.core_type<tc>, window_params = [{transform_indices = @transform_0, window_bounds = array<i64: 1>}, {transform_indices = @transform_1, window_bounds = array<i64: 1, 256, 32>}, {transform_indices = @transform_2, window_bounds = array<i64: 1, 256, 4>}, {transform_indices = @transform_3, window_bounds = array<i64: 1, 256, 20>}, {pipeline_mode = #tpu.pipeline_mode<synchronous>, transform_indices = @transform_4, window_bounds = array<i64: 16, 32>}, {transform_indices = @transform_5, window_bounds = array<i64: 1, 256, 32>}]} {
    %c0 = arith.constant 0 : index
    %c0_0 = arith.constant 0 : index
    %c0_1 = arith.constant 0 : index
    %0 = vector.load %arg4[%c0, %c0_0, %c0_1] : memref<1x256x4xbf16, #tpu.memory_space<vmem>>, vector<1x256x4xbf16>
    %1 = vector.shape_cast %0 : vector<1x256x4xbf16> to vector<256x4xbf16>
    %c0_2 = arith.constant 0 : index
    %c0_3 = arith.constant 0 : index
    %c0_4 = arith.constant 0 : index
    %2 = vector.load %arg5[%c0_2, %c0_3, %c0_4] : memref<1x256x20xbf16, #tpu.memory_space<vmem>>, vector<1x256x20xbf16>
    %3 = vector.shape_cast %2 : vector<1x256x20xbf16> to vector<256x20xbf16>
    %4 = vector.extract_strided_slice %3 {offsets = [0, 0], sizes = [256, 4], strides = [1, 1]} : vector<256x20xbf16> to vector<256x4xbf16>
    %5 = vector.extract_strided_slice %3 {offsets = [0, 4], sizes = [256, 16], strides = [1, 1]} : vector<256x20xbf16> to vector<256x16xbf16>
    %cst = arith.constant dense<0.000000e+00> : vector<256x256xf32>
    %6 = tpu.matmul %1, %4, %cst {dimension_numbers = #tpu.dot_dimension_numbers<[1], [1], [0], [0], [0, 0, 1, 0], [], []>} : vector<256x4xbf16>, vector<256x4xbf16>, vector<256x256xf32> -> vector<256x256xf32>
    %cst_5 = arith.constant dense<0xFF800000> : vector<256xf32>
    %7 = vector.multi_reduction <maximumf>, %6, %cst_5 [1] : vector<256x256xf32> to vector<256xf32>
    %8 = vector.shape_cast %7 : vector<256xf32> to vector<256x1xf32>
    %9 = vector.broadcast %8 : vector<256x1xf32> to vector<256x256xf32>
    %10 = arith.subf %6, %9 : vector<256x256xf32>
    %11 = math.exp %10 : vector<256x256xf32>
    %cst_6 = arith.constant dense<0.000000e+00> : vector<256xf32>
    %12 = vector.multi_reduction <add>, %11, %cst_6 [1] : vector<256x256xf32> to vector<256xf32>
    %13 = vector.shape_cast %12 : vector<256xf32> to vector<256x1xf32>
    %14 = arith.truncf %11 : vector<256x256xf32> to vector<256x256xbf16>
    %cst_7 = arith.constant dense<0.000000e+00> : vector<256x16xf32>
    %15 = tpu.matmul %14, %5, %cst_7 {dimension_numbers = #tpu.dot_dimension_numbers<[1], [0], [0], [1], [0, 0, 1, 1], [], []>} : vector<256x256xbf16>, vector<256x16xbf16>, vector<256x16xf32> -> vector<256x16xf32>
    %16 = tpu.reciprocal %13 {approx = true} : vector<256x1xf32> -> vector<256x1xf32>
    %17 = vector.broadcast %16 : vector<256x1xf32> to vector<256x16xf32>
    %18 = arith.mulf %15, %17 : vector<256x16xf32>
    %19 = arith.truncf %18 : vector<256x16xf32> to vector<256x16xbf16>
    %c0_8 = arith.constant 0 : index
    %c0_9 = arith.constant 0 : index
    %20 = vector.load %arg6[%c0_8, %c0_9] : memref<16x32xbf16, #tpu.memory_space<vmem>>, vector<16x32xbf16>
    %cst_10 = arith.constant dense<0.000000e+00> : vector<256x32xf32>
    %21 = tpu.matmul %19, %20, %cst_10 {dimension_numbers = #tpu.dot_dimension_numbers<[1], [0], [0], [1], [0, 0, 1, 1], [], []>} : vector<256x16xbf16>, vector<16x32xbf16>, vector<256x32xf32> -> vector<256x32xf32>
    %c0_11 = arith.constant 0 : index
    %22 = memref.load %arg2[%c0_11] : memref<1xf32, #tpu.memory_space<smem>>
    %23 = vector.broadcast %22 : f32 to vector<256x32xf32>
    %24 = arith.mulf %23, %21 : vector<256x32xf32>
    %c0_12 = arith.constant 0 : index
    %c0_13 = arith.constant 0 : index
    %c0_14 = arith.constant 0 : index
    %25 = vector.load %arg3[%c0_12, %c0_13, %c0_14] : memref<1x256x32xf32, #tpu.memory_space<vmem>>, vector<1x256x32xf32>
    %26 = vector.shape_cast %25 : vector<1x256x32xf32> to vector<256x32xf32>
    %27 = arith.addf %24, %26 : vector<256x32xf32>
    %c0_15 = arith.constant 0 : index
    %c0_16 = arith.constant 0 : index
    %c0_17 = arith.constant 0 : index
    %28 = vector.load %arg7[%c0_15, %c0_16, %c0_17] : memref<1x256x32xf32, #tpu.memory_space<vmem>>, vector<1x256x32xf32>
    %29 = vector.shape_cast %28 : vector<1x256x32xf32> to vector<256x32xf32>
    %30 = vector.shape_cast %27 : vector<256x32xf32> to vector<1x256x32xf32>
    tpu.vector_store %arg7[%c0_15, %c0_16, %c0_17], %30 {strides = array<i32>} : memref<1x256x32xf32, #tpu.memory_space<vmem>>, vector<1x256x32xf32>,
    return
  }
  func.func @transform_0(%arg0: i32, %arg1: i32) -> i32 {
    %c0_i32 = arith.constant 0 : i32
    %c0_i32_0 = arith.constant 0 : i32
    return %c0_i32 : i32
  }
  func.func @transform_1(%arg0: i32, %arg1: i32) -> (i32, i32, i32) {
    %c0_i32 = arith.constant 0 : i32
    %c0_i32_0 = arith.constant 0 : i32
    return %arg0, %arg1, %c0_i32 : i32, i32, i32
  }
  func.func @transform_2(%arg0: i32, %arg1: i32) -> (i32, i32, i32) {
    %c0_i32 = arith.constant 0 : i32
    %c0_i32_0 = arith.constant 0 : i32
    return %arg0, %arg1, %c0_i32 : i32, i32, i32
  }
  func.func @transform_3(%arg0: i32, %arg1: i32) -> (i32, i32, i32) {
    %c0_i32 = arith.constant 0 : i32
    %c0_i32_0 = arith.constant 0 : i32
    %c0_i32_1 = arith.constant 0 : i32
    return %arg0, %c0_i32, %c0_i32_0 : i32, i32, i32
  }
  func.func @transform_4(%arg0: i32, %arg1: i32) -> (i32, i32) {
    %c0_i32 = arith.constant 0 : i32
    %c0_i32_0 = arith.constant 0 : i32
    %c0_i32_1 = arith.constant 0 : i32
    return %c0_i32, %c0_i32_0 : i32, i32
  }
  func.func @transform_5(%arg0: i32, %arg1: i32) -> (i32, i32, i32) {
    %c0_i32 = arith.constant 0 : i32
    %c0_i32_0 = arith.constant 0 : i32
    return %arg0, %arg1, %c0_i32 : i32, i32, i32
  }
}

</mosaic_0001>

<llo_original>
// kernel: self_attention_forward.2
$region0: #{self_attention_forward.2}
  #allocation0 [shape = 'u32[]', space=smem, size = 0x4, offset = 0x4, fixed_abs, tag = 'smem constant byte address 0x4 - core index']
  #allocation1 [shape = 'u32[144,128]{1,0:T(1,128)}', space=vmem, size = 0x12000, scoped, tag = 'internal scratch']
  %s0 = inlined_call_operand.vmem [shape: f32[2,4,256,32], index: 0, kind: input, shape index: {}]
  %s1 = inlined_call_operand.vmem [shape: bf16[32,24], index: 1, kind: input, shape index: {}]
  %s2 = inlined_call_operand.vmem [shape: bf16[2,4,256,4], index: 2, kind: output, shape index: {0}]
  %s3 = inlined_call_operand.vmem [shape: bf16[2,256,20], index: 3, kind: output, shape index: {1}]
  %4 = xla_tuple %s2, %s3
  %s5 = sld [smem:[#allocation0]]
  $region124: #{self_attention_forward.2} parent=0
    _
  %s7 = ssub.s32 1, %s5
  %s8 = scalar_select 0, %s7, %s5
  $region1: #{self_attention_forward.2} parent=0
    #allocation2 [shape = 'u8[262144]{0}', space=vmem, size = 0x40000, scoped, tag = 'input window, operand 0']
    #allocation3 [shape = 'u8[131072]{0}', space=vmem, size = 0x20000, scoped, tag = 'output window, operand 0']
    loop: start=0, step=1, limit=10
    $region2: #{self_attention_forward.2} parent=1 // loop_pre_header
      _
    $region3: #{self_attention_forward.2} parent=1 // loop_header
      %s10 = sphi 0, %s14
      %p11 = scmp.ge.s32.totalorder %s10, 10
      %s17 = sphi 0, %s29
      %s18 = sphi 0, %s25
      %s19 = sphi 0, %s17
      %s20 = sphi 0, %s18
      %s21 = sphi 0, %s19
      %s22 = sphi 0, %s20
      %s34 = sphi 0, %s36
      %s37 = sphi 0, %s34
      %s38 = sphi 0, %s37
      %s54 = sphi 0, %s38
      %s58 = sphi 0, %s58
      %s60 = sphi 0, %s58
      %s61 = sphi 0, %s60
      %s75 = sphi 0, %s61
      %s83 = sphi 0, %s85
      %s86 = sphi 0, %s83
      %s87 = sphi 0, %s86
      %s103 = sphi 0, %s87
      %s111 = sphi 0, %s113
      %s114 = sphi 0, %s111
      %s115 = sphi 0, %s114
      %s131 = sphi 0, %s115
    $region4: #{self_attention_forward.2} parent=1 // loop_header_branch
      %13 = sbr.rel (%p11) target = $region8
    $region5: #{self_attention_forward.2} parent=1 // loop_body
      %s15 = ssub.s32 %s10, 1
      %s16 = ssub.s32 %s10, 2
      %s23 = sadd.s32 1, %s18
      %p24 = scmp.ge.s32.totalorder %s23, 4
      %s25 = scalar_select %p24, 0, %s23
      %s26 = sadd.s32 1, %s17
      %s27 = scalar_select %p24, %s26, %s17
      %p28 = scmp.ge.s32.totalorder %s27, 2
      %s29 = scalar_select %p28, 0, %s27
      %s30 = ssub.s32 %s17, %s29
      %s31 = ssub.s32 %s18, %s25
      %s32 = sor.u32 %s30, %s31
      %p33 = scmp.eq.s32.totalorder %s32, 0
      %s35 = sadd.s32 %s34, 1
      %s36 = scalar_select %p33, %s34, %s35
      %p39 = pneg %p33
      %p40 = scmp.eq.s32.totalorder %s10, 7
      %p41 = por %p39, %p40
      %p42 = scmp.ne.s32.totalorder %s34, %s37
      %p43 = scmp.eq.s32.totalorder %s10, 0
      %p44 = por %p42, %p43
      %p45 = scmp.ne.s32.totalorder %s34, %s37
      %p46 = scmp.eq.s32.totalorder %s15, 7
      %p47 = por %p45, %p46
      %p48 = scmp.ne.s32.totalorder %s37, %s38
      %p49 = scmp.eq.s32.totalorder %s15, 0
      %p50 = por %p48, %p49
      %p51 = scmp.ne.s32.totalorder %s37, %s38
      %p52 = scmp.eq.s32.totalorder %s16, 7
      %p53 = por %p51, %p52
      %p55 = scmp.ne.s32.totalorder %s38, %s54
      %p56 = scmp.eq.s32.totalorder %s16, 0
      %p57 = por %p55, %p56
      %s59 = sadd.s32 %s58, 1
      %p62 = scmp.eq.s32.totalorder %s10, 7
      %p63 = scmp.ne.s32.totalorder %s58, %s60
      %p64 = scmp.eq.s32.totalorder %s10, 0
      %p65 = por %p63, %p64
      %p66 = scmp.ne.s32.totalorder %s58, %s60
      %p67 = scmp.eq.s32.totalorder %s15, 7
      %p68 = por %p66, %p67
      %p69 = scmp.ne.s32.totalorder %s60, %s61
      %p70 = scmp.eq.s32.totalorder %s15, 0
      %p71 = por %p69, %p70
      %p72 = scmp.ne.s32.totalorder %s60, %s61
      %p73 = scmp.eq.s32.totalorder %s16, 7
      %p74 = por %p72, %p73
      %p76 = scmp.ne.s32.totalorder %s61, %s75
      %p77 = scmp.eq.s32.totalorder %s16, 0
      %p78 = por %p76, %p77
      %s79 = ssub.s32 %s17, %s29
      %s80 = ssub.s32 %s18, %s25
      %s81 = sor.u32 %s79, %s80
      %p82 = scmp.eq.s32.totalorder %s81, 0
      %s84 = sadd.s32 %s83, 1
      %s85 = scalar_select %p82, %s83, %s84
      %p88 = pneg %p82
      %p89 = scmp.eq.s32.totalorder %s10, 7
      %p90 = por %p88, %p89
      %p91 = scmp.ne.s32.totalorder %s83, %s86
      %p92 = scmp.eq.s32.totalorder %s10, 0
      %p93 = por %p91, %p92
      %p94 = scmp.ne.s32.totalorder %s83, %s86
      %p95 = scmp.eq.s32.totalorder %s15, 7
      %p96 = por %p94, %p95
      %p97 = scmp.ne.s32.totalorder %s86, %s87
      %p98 = scmp.eq.s32.totalorder %s15, 0
      %p99 = por %p97, %p98
      %p100 = scmp.ne.s32.totalorder %s86, %s87
      %p101 = scmp.eq.s32.totalorder %s16, 7
      %p102 = por %p100, %p101
      %p104 = scmp.ne.s32.totalorder %s87, %s103
      %p105 = scmp.eq.s32.totalorder %s16, 0
      %p106 = por %p104, %p105
      %s107 = ssub.s32 %s17, %s29
      %s108 = ssub.s32 %s18, %s25
      %s109 = sor.u32 %s107, %s108
      %p110 = scmp.eq.s32.totalorder %s109, 0
      %s112 = sadd.s32 %s111, 1
      %s113 = scalar_select %p110, %s111, %s112
      %p116 = pneg %p110
      %p117 = scmp.eq.s32.totalorder %s10, 7
      %p118 = por %p116, %p117
      %p119 = scmp.ne.s32.totalorder %s111, %s114
      %p120 = scmp.eq.s32.totalorder %s10, 0
      %p121 = por %p119, %p120
      %p122 = scmp.ne.s32.totalorder %s111, %s114
      %p123 = scmp.eq.s32.totalorder %s15, 7
      %p124 = por %p122, %p123
      %p125 = scmp.ne.s32.totalorder %s114, %s115
      %p126 = scmp.eq.s32.totalorder %s15, 0
      %p127 = por %p125, %p126
      %p128 = scmp.ne.s32.totalorder %s114, %s115
      %p129 = scmp.eq.s32.totalorder %s16, 7
      %p130 = por %p128, %p129
      %p132 = scmp.ne.s32.totalorder %s115, %s131
      %p133 = scmp.eq.s32.totalorder %s16, 0
      %p134 = por %p132, %p133
      %p135 = scmp.le.s32.totalorder 1, %s10
      %p136 = scmp.lt.s32.totalorder %s10, 9
      %p137 = pnand %p135, %p136
      %p138 = pneg %p137
      // Predicated region
      $region9: #{self_attention_forward.2} parent=5 // pred_check
        _
      $region10: #{self_attention_forward.2} parent=5 // pred_check_branch
        %140 = sbr.rel (%p137) target = $region12
      $region11: #{self_attention_forward.2} parent=5 // pred_region
        %s141 = ssub.s32 %s10, 1
        // Predicated region
        $region13: #{self_attention_forward.2} parent=11 // pred_check
          %p142 = pneg %p71
        $region14: #{self_attention_forward.2} parent=11 // pred_check_branch
          %144 = sbr.rel (%p142) target = $region16
        $region15: #{self_attention_forward.2} parent=11 // pred_region
          _
        $region16: #{self_attention_forward.2} parent=11 // pred_fallthru
          _
      $region12: #{self_attention_forward.2} parent=5 // pred_fallthru
        _
      %p145 = scmp.lt.s32.totalorder %s10, 8
      // Predicated region
      $region17: #{self_attention_forward.2} parent=5 // pred_check
        %p146 = pneg %p145
      $region18: #{self_attention_forward.2} parent=5 // pred_check_branch
        %148 = sbr.rel (%p146) target = $region20
      $region19: #{self_attention_forward.2} parent=5 // pred_region
        // Predicated region
        $region21: #{self_attention_forward.2} parent=19 // pred_check
          %p149 = pneg %p44
        $region22: #{self_attention_forward.2} parent=19 // pred_check_branch
          %151 = sbr.rel (%p149) target = $region24
        $region23: #{self_attention_forward.2} parent=19 // pred_region
          %s152 = sand.u32 %s34, 1
          %s153 = sand.u32 %s34, 1
          %s154 = smul.addr %s153, 256
          %s155 = scalar_lea.vmem [#allocation2], %s154
          %s156 = smul.u32 8, %s18
          %s157 = smul.addr %s17, 128
          %s158 = sadd.s32 %s156, %s157
          %s159 = smul.addr %s158, 8
          %s160 = scalar_lea.vmem %s0, %s159
          // Predicated region
          $region25: #{self_attention_forward.2} parent=23 // pred_check
            _
          $region26: #{self_attention_forward.2} parent=23 // pred_check_branch
            %162 = sbr.rel (0) target = $region28
          $region27: #{self_attention_forward.2} parent=23 // pred_region
            // Predicated region
            $region29: #{self_attention_forward.2} parent=27 // pred_check
              _
            $region30: #{self_attention_forward.2} parent=27 // pred_check_branch
              %164 = sbr.rel (0) target = $region32
            $region31: #{self_attention_forward.2} parent=27 // pred_region
              // Predicated region
              $region44: #{self_attention_forward.2} parent=31 // pred_check
                _
              $region45: #{self_attention_forward.2} parent=31 // pred_check_branch
                %241 = sbr.rel (0) target = $region47
              $region46: #{self_attention_forward.2} parent=31 // pred_region
                loop: start=0, step=1, limit=1
                $region48: #{self_attention_forward.2} parent=46 // loop_pre_header
                  _
                $region49: #{self_attention_forward.2} parent=46 // loop_header
                  %s243 = sphi 0, %s247
                  %p244 = scmp.ge.s32.totalorder %s243, 1
                  %s248 = sphi %s160, %s160
                  %s249 = sphi %s155, %s155
                $region50: #{self_attention_forward.2} parent=46 // loop_header_branch
                  %246 = sbr.rel (%p244) target = $region54
                $region51: #{self_attention_forward.2} parent=46 // loop_body
                  %v250 = vld [vmem:[%s248] sm:$0xff]
                  %251 = vst [vmem:[%s249] sm:$0xff] %v250
                  %v252 = vld [vmem:[%s248 + $0x8] sm:$0xff]
                  %253 = vst [vmem:[%s249 + $0x8] sm:$0xff] %v252
                  %v254 = vld [vmem:[%s248 + $0x10] sm:$0xff]
                  %255 = vst [vmem:[%s249 + $0x10] sm:$0xff] %v254
                  %v256 = vld [vmem:[%s248 + $0x18] sm:$0xff]
                  %257 = vst [vmem:[%s249 + $0x18] sm:$0xff] %v256
                  %v258 = vld [vmem:[%s248 + $0x20] sm:$0xff]
                  %259 = vst [vmem:[%s249 + $0x20] sm:$0xff] %v258
                  %v260 = vld [vmem:[%s248 + $0x28] sm:$0xff]
                  %261 = vst [vmem:[%s249 + $0x28] sm:$0xff] %v260
                  %v262 = vld [vmem:[%s248 + $0x30] sm:$0xff]
                  %263 = vst [vmem:[%s249 + $0x30] sm:$0xff] %v262
                  %v264 = vld [vmem:[%s248 + $0x38] sm:$0xff]
                  %265 = vst [vmem:[%s249 + $0x38] sm:$0xff] %v264
                  %v266 = vld [vmem:[%s248 + $0x100] sm:$0xff]
                  %267 = vst [vmem:[%s249 + $0x40] sm:$0xff] %v266
                  %v268 = vld [vmem:[%s248 + $0x108] sm:$0xff]
                  %269 = vst [vmem:[%s249 + $0x48] sm:$0xff] %v268
                  %v270 = vld [vmem:[%s248 + $0x110] sm:$0xff]
                  %271 = vst [vmem:[%s249 + $0x50] sm:$0xff] %v270
                  %v272 = vld [vmem:[%s248 + $0x118] sm:$0xff]
                  %273 = vst [vmem:[%s249 + $0x58] sm:$0xff] %v272
                  %v274 = vld [vmem:[%s248 + $0x120] sm:$0xff]
                  %275 = vst [vmem:[%s249 + $0x60] sm:$0xff] %v274
                  %v276 = vld [vmem:[%s248 + $0x128] sm:$0xff]
                  %277 = vst [vmem:[%s249 + $0x68] sm:$0xff] %v276
                  %v278 = vld [vmem:[%s248 + $0x130] sm:$0xff]
                  %279 = vst [vmem:[%s249 + $0x70] sm:$0xff] %v278
                  %v280 = vld [vmem:[%s248 + $0x138] sm:$0xff]
                  %281 = vst [vmem:[%s249 + $0x78] sm:$0xff] %v280
                  %v282 = vld [vmem:[%s248 + $0x200] sm:$0xff]
                  %283 = vst [vmem:[%s249 + $0x80] sm:$0xff] %v282
                  %v284 = vld [vmem:[%s248 + $0x208] sm:$0xff]
                  %285 = vst [vmem:[%s249 + $0x88] sm:$0xff] %v284
                  %v286 = vld [vmem:[%s248 + $0x210] sm:$0xff]
                  %287 = vst [vmem:[%s249 + $0x90] sm:$0xff] %v286
                  %v288 = vld [vmem:[%s248 + $0x218] sm:$0xff]
                  %289 = vst [vmem:[%s249 + $0x98] sm:$0xff] %v288
                  %v290 = vld [vmem:[%s248 + $0x220] sm:$0xff]
                  %291 = vst [vmem:[%s249 + $0xa0] sm:$0xff] %v290
                  %v292 = vld [vmem:[%s248 + $0x228] sm:$0xff]
                  %293 = vst [vmem:[%s249 + $0xa8] sm:$0xff] %v292
                  %v294 = vld [vmem:[%s248 + $0x230] sm:$0xff]
                  %295 = vst [vmem:[%s249 + $0xb0] sm:$0xff] %v294
                  %v296 = vld [vmem:[%s248 + $0x238] sm:$0xff]
                  %297 = vst [vmem:[%s249 + $0xb8] sm:$0xff] %v296
                  %v298 = vld [vmem:[%s248 + $0x300] sm:$0xff]
                  %299 = vst [vmem:[%s249 + $0xc0] sm:$0xff] %v298
                  %v300 = vld [vmem:[%s248 + $0x308] sm:$0xff]
                  %301 = vst [vmem:[%s249 + $0xc8] sm:$0xff] %v300
                  %v302 = vld [vmem:[%s248 + $0x310] sm:$0xff]
                  %303 = vst [vmem:[%s249 + $0xd0] sm:$0xff] %v302
                  %v304 = vld [vmem:[%s248 + $0x318] sm:$0xff]
                  %305 = vst [vmem:[%s249 + $0xd8] sm:$0xff] %v304
                  %v306 = vld [vmem:[%s248 + $0x320] sm:$0xff]
                  %307 = vst [vmem:[%s249 + $0xe0] sm:$0xff] %v306
                  %v308 = vld [vmem:[%s248 + $0x328] sm:$0xff]
                  %309 = vst [vmem:[%s249 + $0xe8] sm:$0xff] %v308
                  %v310 = vld [vmem:[%s248 + $0x330] sm:$0xff]
                  %311 = vst [vmem:[%s249 + $0xf0] sm:$0xff] %v310
                  %v312 = vld [vmem:[%s248 + $0x338] sm:$0xff]
                  %313 = vst [vmem:[%s249 + $0xf8] sm:$0xff] %v312
                $region52: #{self_attention_forward.2} parent=46 // loop_footer
                  %s247 = sadd.s32 1, %s243
                $region53: #{self_attention_forward.2} parent=46 // loop_footer_branch
                  %242 = sbr.rel target = $region49
                $region54: #{self_attention_forward.2} parent=46 // loop_exit
                  _
              $region47: #{self_attention_forward.2} parent=31 // pred_fallthru
                _
              // Predicated region
              $region55: #{self_attention_forward.2} parent=31 // pred_check
                _
              $region56: #{self_attention_forward.2} parent=31 // pred_check_branch
                %315 = sbr.rel target = $region58
              $region57: #{self_attention_forward.2} parent=31 // pred_region
                _
              $region58: #{self_attention_forward.2} parent=31 // pred_fallthru
                _
            $region32: #{self_attention_forward.2} parent=27 // pred_fallthru
              _
            // Predicated region
            $region33: #{self_attention_forward.2} parent=27 // pred_check
              _
            $region34: #{self_attention_forward.2} parent=27 // pred_check_branch
              %166 = sbr.rel target = $region36
            $region35: #{self_attention_forward.2} parent=27 // pred_region
              loop: start=0, step=1, limit=1
              $region37: #{self_attention_forward.2} parent=35 // loop_pre_header
                _
              $region38: #{self_attention_forward.2} parent=35 // loop_header
                %s169 = sphi 0, %s173
                %p170 = scmp.ge.s32.totalorder %s169, 1
                %s174 = sphi %s160, %s160
                %s175 = sphi %s155, %s155
              $region39: #{self_attention_forward.2} parent=35 // loop_header_branch
                %172 = sbr.rel (%p170) target = $region43
              $region40: #{self_attention_forward.2} parent=35 // loop_body
                %v176 = vld [vmem:[%s174] sm:$0xff]
                %177 = vst [vmem:[%s175] sm:$0xff] %v176
                %v178 = vld [vmem:[%s174 + $0x8] sm:$0xff]
                %179 = vst [vmem:[%s175 + $0x8] sm:$0xff] %v178
                %v180 = vld [vmem:[%s174 + $0x10] sm:$0xff]
                %181 = vst [vmem:[%s175 + $0x10] sm:$0xff] %v180
                %v182 = vld [vmem:[%s174 + $0x18] sm:$0xff]
                %183 = vst [vmem:[%s175 + $0x18] sm:$0xff] %v182
                %v184 = vld [vmem:[%s174 + $0x20] sm:$0xff]
                %185 = vst [vmem:[%s175 + $0x20] sm:$0xff] %v184
                %v186 = vld [vmem:[%s174 + $0x28] sm:$0xff]
                %187 = vst [vmem:[%s175 + $0x28] sm:$0xff] %v186
                %v188 = vld [vmem:[%s174 + $0x30] sm:$0xff]
                %189 = vst [vmem:[%s175 + $0x30] sm:$0xff] %v188
                %v190 = vld [vmem:[%s174 + $0x38] sm:$0xff]
                %191 = vst [vmem:[%s175 + $0x38] sm:$0xff] %v190
                %v192 = vld [vmem:[%s174 + $0x100] sm:$0xff]
                %193 = vst [vmem:[%s175 + $0x40] sm:$0xff] %v192
                %v194 = vld [vmem:[%s174 + $0x108] sm:$0xff]
                %195 = vst [vmem:[%s175 + $0x48] sm:$0xff] %v194
                %v196 = vld [vmem:[%s174 + $0x110] sm:$0xff]
                %197 = vst [vmem:[%s175 + $0x50] sm:$0xff] %v196
                %v198 = vld [vmem:[%s174 + $0x118] sm:$0xff]
                %199 = vst [vmem:[%s175 + $0x58] sm:$0xff] %v198
                %v200 = vld [vmem:[%s174 + $0x120] sm:$0xff]
                %201 = vst [vmem:[%s175 + $0x60] sm:$0xff] %v200
                %v202 = vld [vmem:[%s174 + $0x128] sm:$0xff]
                %203 = vst [vmem:[%s175 + $0x68] sm:$0xff] %v202
                %v204 = vld [vmem:[%s174 + $0x130] sm:$0xff]
                %205 = vst [vmem:[%s175 + $0x70] sm:$0xff] %v204
                %v206 = vld [vmem:[%s174 + $0x138] sm:$0xff]
                %207 = vst [vmem:[%s175 + $0x78] sm:$0xff] %v206
                %v208 = vld [vmem:[%s174 + $0x200] sm:$0xff]
                %209 = vst [vmem:[%s175 + $0x80] sm:$0xff] %v208
                %v210 = vld [vmem:[%s174 + $0x208] sm:$0xff]
                %211 = vst [vmem:[%s175 + $0x88] sm:$0xff] %v210
                %v212 = vld [vmem:[%s174 + $0x210] sm:$0xff]
                %213 = vst [vmem:[%s175 + $0x90] sm:$0xff] %v212
                %v214 = vld [vmem:[%s174 + $0x218] sm:$0xff]
                %215 = vst [vmem:[%s175 + $0x98] sm:$0xff] %v214
                %v216 = vld [vmem:[%s174 + $0x220] sm:$0xff]
                %217 = vst [vmem:[%s175 + $0xa0] sm:$0xff] %v216
                %v218 = vld [vmem:[%s174 + $0x228] sm:$0xff]
                %219 = vst [vmem:[%s175 + $0xa8] sm:$0xff] %v218
                %v220 = vld [vmem:[%s174 + $0x230] sm:$0xff]
                %221 = vst [vmem:[%s175 + $0xb0] sm:$0xff] %v220
                %v222 = vld [vmem:[%s174 + $0x238] sm:$0xff]
                %223 = vst [vmem:[%s175 + $0xb8] sm:$0xff] %v222
                %v224 = vld [vmem:[%s174 + $0x300] sm:$0xff]
                %225 = vst [vmem:[%s175 + $0xc0] sm:$0xff] %v224
                %v226 = vld [vmem:[%s174 + $0x308] sm:$0xff]
                %227 = vst [vmem:[%s175 + $0xc8] sm:$0xff] %v226
                %v228 = vld [vmem:[%s174 + $0x310] sm:$0xff]
                %229 = vst [vmem:[%s175 + $0xd0] sm:$0xff] %v228
                %v230 = vld [vmem:[%s174 + $0x318] sm:$0xff]
                %231 = vst [vmem:[%s175 + $0xd8] sm:$0xff] %v230
                %v232 = vld [vmem:[%s174 + $0x320] sm:$0xff]
                %233 = vst [vmem:[%s175 + $0xe0] sm:$0xff] %v232
                %v234 = vld [vmem:[%s174 + $0x328] sm:$0xff]
                %235 = vst [vmem:[%s175 + $0xe8] sm:$0xff] %v234
                %v236 = vld [vmem:[%s174 + $0x330] sm:$0xff]
                %237 = vst [vmem:[%s175 + $0xf0] sm:$0xff] %v236
                %v238 = vld [vmem:[%s174 + $0x338] sm:$0xff]
                %239 = vst [vmem:[%s175 + $0xf8] sm:$0xff] %v238
              $region41: #{self_attention_forward.2} parent=35 // loop_footer
                %s173 = sadd.s32 1, %s169
              $region42: #{self_attention_forward.2} parent=35 // loop_footer_branch
                %168 = sbr.rel target = $region38
              $region43: #{self_attention_forward.2} parent=35 // loop_exit
                _
            $region36: #{self_attention_forward.2} parent=27 // pred_fallthru
              _
          $region28: #{self_attention_forward.2} parent=23 // pred_fallthru
            _
          %316 = vnop
        $region24: #{self_attention_forward.2} parent=19 // pred_fallthru
          _
      $region20: #{self_attention_forward.2} parent=5 // pred_fallthru
        _
      %p317 = scmp.le.s32.totalorder 1, %s10
      %p318 = scmp.lt.s32.totalorder %s10, 9
      %p319 = pnand %p317, %p318
      %p320 = pneg %p319
      // Predicated region
      $region59: #{self_attention_forward.2} parent=5 // pred_check
        _
      $region60: #{self_attention_forward.2} parent=5 // pred_check_branch
        %322 = sbr.rel (%p319) target = $region62
      $region61: #{self_attention_forward.2} parent=5 // pred_region
        %s323 = ssub.s32 %s10, 1
        %s324 = sand.u32 %s37, 1
        %s325 = sand.u32 %s37, 1
        %s326 = smul.addr %s325, 256
        %s327 = scalar_lea.vmem [#allocation2], %s326
        // Predicated region
        $region63: #{self_attention_forward.2} parent=61 // pred_check
          %p328 = pneg %p50
        $region64: #{self_attention_forward.2} parent=61 // pred_check_branch
          %330 = sbr.rel (%p328) target = $region66
        $region65: #{self_attention_forward.2} parent=61 // pred_region
          _
        $region66: #{self_attention_forward.2} parent=61 // pred_fallthru
          _
        %s331 = sand.u32 %s37, 1
        %s332 = sand.u32 %s37, 1
        %s333 = smul.addr %s332, 256
        %s334 = scalar_lea.vmem [#allocation2], %s333
        %p335 = pneg %p50
        %p336 = pneg %p47
        %p337 = pneg %p71
        %p338 = pneg %p68
        %p339 = pneg %p99
        %p340 = pneg %p96
        %s341 = sand.u32 %s86, 1
        %s342 = sand.u32 %s86, 1
        %s343 = smul.addr %s342, 128
        %s344 = scalar_lea.vmem [#allocation3], %s343
        %p345 = pneg %p127
        %p346 = pneg %p124
        %s347 = smul.u32 8, %s20
        %p348 = scmp.lt.s32.totalorder %s19, 1
        %s349 = scalar_select %p348, %s19, 1
        %p350 = scmp.lt.s32.totalorder %s347, 31
        %s351 = scalar_select %p350, %s347, 31
        %s352 = smul.addr %s349, 32
        %s353 = sadd.s32 %s351, %s352
        %s354 = smul.addr %s353, 4
        %s355 = scalar_lea.vmem %s3, %s354
        %s356 = smul.u32 8, %s20
        %s357 = smul.u32 8, %s20
        %s358 = smul.u32 8, %s20
        %p359 = scmp.lt.s32.totalorder %s19, 1
        %s360 = scalar_select %p359, %s19, 1
        %p361 = scmp.lt.s32.totalorder %s358, 31
        %s362 = scalar_select %p361, %s358, 31
        %s363 = smul.addr %s360, 32
        %s364 = sadd.s32 %s362, %s363
        %s365 = smul.addr %s364, 4
        %s366 = scalar_lea.vmem %s3, %s365
        %s367 = smul.u32 8, %s20
        %v369 = vld [vmem:[%s1] sm:$0xf]
        %v370 = vld [vmem:[%s1 + $0x4] sm:$0xf]
        %v371 = vld [vmem:[%s1 + $0x8] sm:$0xf]
        %v372 = vld [vmem:[%s1 + $0xc] sm:$0xf]
        %v373 = vld [vmem:[%s327] sm:$0xff]
        %v374 = vld [vmem:[%s327 + $0x8] sm:$0xff]
        %v375 = vld [vmem:[%s327 + $0x10] sm:$0xff]
        %v376 = vld [vmem:[%s327 + $0x18] sm:$0xff]
        %v377 = vld [vmem:[%s327 + $0x20] sm:$0xff]
        %v378 = vld [vmem:[%s327 + $0x28] sm:$0xff]
        %v379 = vld [vmem:[%s327 + $0x30] sm:$0xff]
        %v380 = vld [vmem:[%s327 + $0x38] sm:$0xff]
        %v381 = vpack.c.bf16 %v374, %v373
        %v382 = vpack.c.bf16 %v376, %v375
        %v383 = vpack.c.bf16 %v378, %v377
        %v384 = vpack.c.bf16 %v380, %v379
        %v389 = vunpack.c.l.b16 %v369
        %v390 = vunpack.c.l.b16 %v370
        %v391 = vunpack.c.l.b16 %v371
        %v392 = vunpack.c.l.b16 %v372
        %v393 = vpack.c.b16 %v390, %v389
        %v394 = vpack.c.b16 %v392, %v391
        %vm397 = vcmask 261120
        %v399 = vsel %vm397, %v381, 0
        %v402 = vsel %vm397, %v382, 0
        %v405 = vsel %vm397, %v383, 0
        %v408 = vsel %vm397, %v384, 0
        %410 = vmatprep.subr.bf16.mxu0 0
        %411 = vmatpush1.bf16.msra.mxu0 %v393
        %412 = vmatprep.subr.bf16.mxu0 0
        %413 = vmatpush1.bf16.msra.mxu0 %v394
        %414 = vmatprep.subr.bf16.mxu0 0
        %415 = vmatpush1.bf16.msra.mxu0 0
        %416 = vmatprep.subr.bf16.mxu0 0
        %417 = vmatpush1.bf16.msra.mxu0 0
        %418 = vmatprep.subr.bf16.mxu0 0
        %419 = vmatpush1.bf16.msra.mxu0 0
        %420 = vmatprep.subr.bf16.mxu0 0
        %421 = vmatpush1.bf16.msra.mxu0 0
        %422 = vmatprep.subr.bf16.mxu0 0
        %423 = vmatpush1.bf16.msra.mxu0 0
        %424 = vmatprep.subr.bf16.mxu0 0
        %425 = vmatpush1.bf16.msra.mxu0 0
        %426 = vmatprep.subr.bf16.mxu0 0
        %427 = vmatpush1.bf16.msra.mxu0 0
        %428 = vmatprep.subr.bf16.mxu0 0
        %429 = vmatpush1.bf16.msra.mxu0 0
        %430 = vmatprep.subr.bf16.mxu0 0
        %431 = vmatpush1.bf16.msra.mxu0 0
        %432 = vmatprep.subr.bf16.mxu0 0
        %433 = vmatpush1.bf16.msra.mxu0 0
        %434 = vmatprep.subr.bf16.mxu0 0
        %435 = vmatpush1.bf16.msra.mxu0 0
        %436 = vmatprep.subr.bf16.mxu0 0
        %437 = vmatpush1.bf16.msra.mxu0 0
        %438 = vmatprep.subr.bf16.mxu0 0
        %439 = vmatpush1.bf16.msra.mxu0 0
        %440 = vmatprep.subr.bf16.mxu0 0
        %441 = vmatpush1.bf16.msra.mxu0 0
        %442 = vmatprep.mubr.bf16.mxu0 0
        %443 = vmatmul.mubr.bf16.gmra.mrb[0].mxu0 %v399
        %v444 = vpop.f32.mrb[0].mxu0
        %v445 = vadd.f32 0.0, %v444
        %v446 = vpop.f32.mrb[0].mxu0
        %v447 = vpop.f32.mrb[0].mxu0
        %v448 = vadd.f32 0.0, %v447
        %v449 = vpop.f32.mrb[0].mxu0
        %450 = vmatprep.mubr.bf16.mxu0 0
        %451 = vmatmul.mubr.bf16.gmra.mrb[0].mxu0 %v402
        %v452 = vpop.f32.mrb[0].mxu0
        %v453 = vadd.f32 0.0, %v452
        %v454 = vpop.f32.mrb[0].mxu0
        %v455 = vpop.f32.mrb[0].mxu0
        %v456 = vadd.f32 0.0, %v455
        %v457 = vpop.f32.mrb[0].mxu0
        %458 = vmatprep.mubr.bf16.mxu0 0
        %459 = vmatmul.mubr.bf16.gmra.mrb[0].mxu0 %v405
        %v460 = vpop.f32.mrb[0].mxu0
        %v461 = vadd.f32 0.0, %v460
        %v462 = vpop.f32.mrb[0].mxu0
        %v463 = vpop.f32.mrb[0].mxu0
        %v464 = vadd.f32 0.0, %v463
        %v465 = vpop.f32.mrb[0].mxu0
        %466 = vmatprep.mubr.bf16.mxu0 0
        %467 = vmatmul.mubr.bf16.gmra.mrb[0].mxu0 %v408
        %v468 = vpop.f32.mrb[0].mxu0
        %v469 = vadd.f32 0.0, %v468
        %v470 = vpop.f32.mrb[0].mxu0
        %v471 = vpop.f32.mrb[0].mxu0
        %v472 = vadd.f32 0.0, %v471
        %v473 = vpop.f32.mrb[0].mxu0
        %474 = vdwg.mxu0
        %v475 = vpack.c.bf16 %v448, %v445
        %v476 = vpack.c.bf16 %v456, %v453
        %v477 = vpack.c.bf16 %v464, %v461
        %v478 = vpack.c.bf16 %v472, %v469
        %v483 = vunpack.c.l.b16 %v475
        %v484 = vunpack.c.h.b16 %v475
        %v485 = vunpack.c.l.b16 %v476
        %v486 = vunpack.c.h.b16 %v476
        %v487 = vunpack.c.l.b16 %v477
        %v488 = vunpack.c.h.b16 %v477
        %v489 = vunpack.c.l.b16 %v478
        %v490 = vunpack.c.h.b16 %v478
        %v491 = vpack.c.b16 %v483, %v483
        %v492 = vpack.c.b16 %v484, %v484
        %v493 = vpack.c.b16 %v485, %v485
        %v494 = vpack.c.b16 %v486, %v486
        %v495 = vpack.c.b16 %v487, %v487
        %v496 = vpack.c.b16 %v488, %v488
        %v497 = vpack.c.b16 %v489, %v489
        %v498 = vpack.c.b16 %v490, %v490
        %vm507 = vcmask 27648
        %508 = vst.msk [vmem:[%s344] sm:$0xf] %vm507, %v491
        %509 = vst.msk [vmem:[%s344 + $0x4] sm:$0xf] %vm507, %v492
        %510 = vst.msk [vmem:[%s344 + $0x8] sm:$0xf] %vm507, %v493
        %511 = vst.msk [vmem:[%s344 + $0xc] sm:$0xf] %vm507, %v494
        %512 = vst.msk [vmem:[%s344 + $0x10] sm:$0xf] %vm507, %v495
        %513 = vst.msk [vmem:[%s344 + $0x14] sm:$0xf] %vm507, %v496
        %514 = vst.msk [vmem:[%s344 + $0x18] sm:$0xf] %vm507, %v497
        %515 = vst.msk [vmem:[%s344 + $0x1c] sm:$0xf] %vm507, %v498
        %s516 = scalar_lea.vmem %s327, 64 [#allocation2]
        %v517 = vld [vmem:[%s516] sm:$0xff]
        %v518 = vld [vmem:[%s516 + $0x8] sm:$0xff]
        %v519 = vld [vmem:[%s516 + $0x10] sm:$0xff]
        %v520 = vld [vmem:[%s516 + $0x18] sm:$0xff]
        %v521 = vld [vmem:[%s516 + $0x20] sm:$0xff]
        %v522 = vld [vmem:[%s516 + $0x28] sm:$0xff]
        %v523 = vld [vmem:[%s516 + $0x30] sm:$0xff]
        %v524 = vld [vmem:[%s516 + $0x38] sm:$0xff]
        %v525 = vpack.c.bf16 %v518, %v517
        %v526 = vpack.c.bf16 %v520, %v519
        %v527 = vpack.c.bf16 %v522, %v521
        %v528 = vpack.c.bf16 %v524, %v523
        %v530 = vsel %vm397, %v525, 0
        %v533 = vsel %vm397, %v526, 0
        %v536 = vsel %vm397, %v527, 0
        %v539 = vsel %vm397, %v528, 0
        %541 = vmatprep.subr.bf16.mxu0 0
        %542 = vmatpush1.bf16.msra.mxu0 %v393
        %543 = vmatprep.subr.bf16.mxu0 0
        %544 = vmatpush1.bf16.msra.mxu0 %v394
        %545 = vmatprep.subr.bf16.mxu0 0
        %546 = vmatpush1.bf16.msra.mxu0 0
        %547 = vmatprep.subr.bf16.mxu0 0
        %548 = vmatpush1.bf16.msra.mxu0 0
        %549 = vmatprep.subr.bf16.mxu0 0
        %550 = vmatpush1.bf16.msra.mxu0 0
        %551 = vmatprep.subr.bf16.mxu0 0
        %552 = vmatpush1.bf16.msra.mxu0 0
        %553 = vmatprep.subr.bf16.mxu0 0
        %554 = vmatpush1.bf16.msra.mxu0 0
        %555 = vmatprep.subr.bf16.mxu0 0
        %556 = vmatpush1.bf16.msra.mxu0 0
        %557 = vmatprep.subr.bf16.mxu0 0
        %558 = vmatpush1.bf16.msra.mxu0 0
        %559 = vmatprep.subr.bf16.mxu0 0
        %560 = vmatpush1.bf16.msra.mxu0 0
        %561 = vmatprep.subr.bf16.mxu0 0
        %562 = vmatpush1.bf16.msra.mxu0 0
        %563 = vmatprep.subr.bf16.mxu0 0
        %564 = vmatpush1.bf16.msra.mxu0 0
        %565 = vmatprep.subr.bf16.mxu0 0
        %566 = vmatpush1.bf16.msra.mxu0 0
        %567 = vmatprep.subr.bf16.mxu0 0
        %568 = vmatpush1.bf16.msra.mxu0 0
        %569 = vmatprep.subr.bf16.mxu0 0
        %570 = vmatpush1.bf16.msra.mxu0 0
        %571 = vmatprep.subr.bf16.mxu0 0
        %572 = vmatpush1.bf16.msra.mxu0 0
        %573 = vmatprep.mubr.bf16.mxu0 0
        %574 = vmatmul.mubr.bf16.gmra.mrb[0].mxu0 %v530
        %v575 = vpop.f32.mrb[0].mxu0
        %v576 = vadd.f32 0.0, %v575
        %v577 = vpop.f32.mrb[0].mxu0
        %v578 = vpop.f32.mrb[0].mxu0
        %v579 = vadd.f32 0.0, %v578
        %v580 = vpop.f32.mrb[0].mxu0
        %581 = vmatprep.mubr.bf16.mxu0 0
        %582 = vmatmul.mubr.bf16.gmra.mrb[0].mxu0 %v533
        %v583 = vpop.f32.mrb[0].mxu0
        %v584 = vadd.f32 0.0, %v583
        %v585 = vpop.f32.mrb[0].mxu0
        %v586 = vpop.f32.mrb[0].mxu0
        %v587 = vadd.f32 0.0, %v586
        %v588 = vpop.f32.mrb[0].mxu0
        %589 = vmatprep.mubr.bf16.mxu0 0
        %590 = vmatmul.mubr.bf16.gmra.mrb[0].mxu0 %v536
        %v591 = vpop.f32.mrb[0].mxu0
        %v592 = vadd.f32 0.0, %v591
        %v593 = vpop.f32.mrb[0].mxu0
        %v594 = vpop.f32.mrb[0].mxu0
        %v595 = vadd.f32 0.0, %v594
        %v596 = vpop.f32.mrb[0].mxu0
        %597 = vmatprep.mubr.bf16.mxu0 0
        %598 = vmatmul.mubr.bf16.gmra.mrb[0].mxu0 %v539
        %v599 = vpop.f32.mrb[0].mxu0
        %v600 = vadd.f32 0.0, %v599
        %v601 = vpop.f32.mrb[0].mxu0
        %v602 = vpop.f32.mrb[0].mxu0
        %v603 = vadd.f32 0.0, %v602
        %v604 = vpop.f32.mrb[0].mxu0
        %605 = vdwg.mxu0
        %v606 = vpack.c.bf16 %v579, %v576
        %v607 = vpack.c.bf16 %v587, %v584
        %v608 = vpack.c.bf16 %v595, %v592
        %v609 = vpack.c.bf16 %v603, %v600
        %v614 = vunpack.c.l.b16 %v606
        %v615 = vunpack.c.h.b16 %v606
        %v616 = vunpack.c.l.b16 %v607
        %v617 = vunpack.c.h.b16 %v607
        %v618 = vunpack.c.l.b16 %v608
        %v619 = vunpack.c.h.b16 %v608
        %v620 = vunpack.c.l.b16 %v609
        %v621 = vunpack.c.h.b16 %v609
        %v622 = vpack.c.b16 %v614, %v614
        %v623 = vpack.c.b16 %v615, %v615
        %v624 = vpack.c.b16 %v616, %v616
        %v625 = vpack.c.b16 %v617, %v617
        %v626 = vpack.c.b16 %v618, %v618
        %v627 = vpack.c.b16 %v619, %v619
        %v628 = vpack.c.b16 %v620, %v620
        %v629 = vpack.c.b16 %v621, %v621
        %s638 = scalar_lea.vmem %s344, 32 [#allocation3]
        %639 = vst.msk [vmem:[%s638] sm:$0xf] %vm507, %v622
        %640 = vst.msk [vmem:[%s638 + $0x4] sm:$0xf] %vm507, %v623
        %641 = vst.msk [vmem:[%s638 + $0x8] sm:$0xf] %vm507, %v624
        %642 = vst.msk [vmem:[%s638 + $0xc] sm:$0xf] %vm507, %v625
        %643 = vst.msk [vmem:[%s638 + $0x10] sm:$0xf] %vm507, %v626
        %644 = vst.msk [vmem:[%s638 + $0x14] sm:$0xf] %vm507, %v627
        %645 = vst.msk [vmem:[%s638 + $0x18] sm:$0xf] %vm507, %v628
        %646 = vst.msk [vmem:[%s638 + $0x1c] sm:$0xf] %vm507, %v629
        %v647 = vmax.f32 %v445, %v576
        %v648 = vmax.f32 %v448, %v579
        %v649 = vmax.f32 %v453, %v584
        %v650 = vmax.f32 %v456, %v587
        %v651 = vmax.f32 %v461, %v592
        %v652 = vmax.f32 %v464, %v595
        %v653 = vmax.f32 %v469, %v600
        %v654 = vmax.f32 %v472, %v603
        %s655 = scalar_lea.vmem %s327, 128 [#allocation2]
        %v656 = vld [vmem:[%s655] sm:$0xff]
        %v657 = vld [vmem:[%s655 + $0x8] sm:$0xff]
        %v658 = vld [vmem:[%s655 + $0x10] sm:$0xff]
        %v659 = vld [vmem:[%s655 + $0x18] sm:$0xff]
        %v660 = vld [vmem:[%s655 + $0x20] sm:$0xff]
        %v661 = vld [vmem:[%s655 + $0x28] sm:$0xff]
        %v662 = vld [vmem:[%s655 + $0x30] sm:$0xff]
        %v663 = vld [vmem:[%s655 + $0x38] sm:$0xff]
        %v664 = vpack.c.bf16 %v657, %v656
        %v665 = vpack.c.bf16 %v659, %v658
        %v666 = vpack.c.bf16 %v661, %v660
        %v667 = vpack.c.bf16 %v663, %v662
        %v669 = vsel %vm397, %v664, 0
        %v672 = vsel %vm397, %v665, 0
        %v675 = vsel %vm397, %v666, 0
        %v678 = vsel %vm397, %v667, 0
        %680 = vmatprep.subr.bf16.mxu0 0
        %681 = vmatpush1.bf16.msra.mxu0 %v393
        %682 = vmatprep.subr.bf16.mxu0 0
        %683 = vmatpush1.bf16.msra.mxu0 %v394
        %684 = vmatprep.subr.bf16.mxu0 0
        %685 = vmatpush1.bf16.msra.mxu0 0
        %686 = vmatprep.subr.bf16.mxu0 0
        %687 = vmatpush1.bf16.msra.mxu0 0
        %688 = vmatprep.subr.bf16.mxu0 0
        %689 = vmatpush1.bf16.msra.mxu0 0
        %690 = vmatprep.subr.bf16.mxu0 0
        %691 = vmatpush1.bf16.msra.mxu0 0
        %692 = vmatprep.subr.bf16.mxu0 0
        %693 = vmatpush1.bf16.msra.mxu0 0
        %694 = vmatprep.subr.bf16.mxu0 0
        %695 = vmatpush1.bf16.msra.mxu0 0
        %696 = vmatprep.subr.bf16.mxu0 0
        %697 = vmatpush1.bf16.msra.mxu0 0
        %698 = vmatprep.subr.bf16.mxu0 0
        %699 = vmatpush1.bf16.msra.mxu0 0
        %700 = vmatprep.subr.bf16.mxu0 0
        %701 = vmatpush1.bf16.msra.mxu0 0
        %702 = vmatprep.subr.bf16.mxu0 0
        %703 = vmatpush1.bf16.msra.mxu0 0
        %704 = vmatprep.subr.bf16.mxu0 0
        %705 = vmatpush1.bf16.msra.mxu0 0
        %706 = vmatprep.subr.bf16.mxu0 0
        %707 = vmatpush1.bf16.msra.mxu0 0
        %708 = vmatprep.subr.bf16.mxu0 0
        %709 = vmatpush1.bf16.msra.mxu0 0
        %710 = vmatprep.subr.bf16.mxu0 0
        %711 = vmatpush1.bf16.msra.mxu0 0
        %712 = vmatprep.mubr.bf16.mxu0 0
        %713 = vmatmul.mubr.bf16.gmra.mrb[0].mxu0 %v669
        %v714 = vpop.f32.mrb[0].mxu0
        %v715 = vadd.f32 0.0, %v714
        %v716 = vpop.f32.mrb[0].mxu0
        %v717 = vpop.f32.mrb[0].mxu0
        %v718 = vadd.f32 0.0, %v717
        %v719 = vpop.f32.mrb[0].mxu0
        %720 = vmatprep.mubr.bf16.mxu0 0
        %721 = vmatmul.mubr.bf16.gmra.mrb[0].mxu0 %v672
        %v722 = vpop.f32.mrb[0].mxu0
        %v723 = vadd.f32 0.0, %v722
        %v724 = vpop.f32.mrb[0].mxu0
        %v725 = vpop.f32.mrb[0].mxu0
        %v726 = vadd.f32 0.0, %v725
        %v727 = vpop.f32.mrb[0].mxu0
        %728 = vmatprep.mubr.bf16.mxu0 0
        %729 = vmatmul.mubr.bf16.gmra.mrb[0].mxu0 %v675
        %v730 = vpop.f32.mrb[0].mxu0
        %v731 = vadd.f32 0.0, %v730
        %v732 = vpop.f32.mrb[0].mxu0
        %v733 = vpop.f32.mrb[0].mxu0
        %v734 = vadd.f32 0.0, %v733
        %v735 = vpop.f32.mrb[0].mxu0
        %736 = vmatprep.mubr.bf16.mxu0 0
        %737 = vmatmul.mubr.bf16.gmra.mrb[0].mxu0 %v678
        %v738 = vpop.f32.mrb[0].mxu0
        %v739 = vadd.f32 0.0, %v738
        %v740 = vpop.f32.mrb[0].mxu0
        %v741 = vpop.f32.mrb[0].mxu0
        %v742 = vadd.f32 0.0, %v741
        %v743 = vpop.f32.mrb[0].mxu0
        %744 = vdwg.mxu0
        %v745 = vpack.c.bf16 %v718, %v715
        %v746 = vpack.c.bf16 %v726, %v723
        %v747 = vpack.c.bf16 %v734, %v731
        %v748 = vpack.c.bf16 %v742, %v739
        %v753 = vunpack.c.l.b16 %v745
        %v754 = vunpack.c.h.b16 %v745
        %v755 = vunpack.c.l.b16 %v746
        %v756 = vunpack.c.h.b16 %v746
        %v757 = vunpack.c.l.b16 %v747
        %v758 = vunpack.c.h.b16 %v747
        %v759 = vunpack.c.l.b16 %v748
        %v760 = vunpack.c.h.b16 %v748
        %v761 = vpack.c.b16 %v753, %v753
        %v762 = vpack.c.b16 %v754, %v754
        %v763 = vpack.c.b16 %v755, %v755
        %v764 = vpack.c.b16 %v756, %v756
        %v765 = vpack.c.b16 %v757, %v757
        %v766 = vpack.c.b16 %v758, %v758
        %v767 = vpack.c.b16 %v759, %v759
        %v768 = vpack.c.b16 %v760, %v760
        %s777 = scalar_lea.vmem %s344, 64 [#allocation3]
        %778 = vst.msk [vmem:[%s777] sm:$0xf] %vm507, %v761
        %779 = vst.msk [vmem:[%s777 + $0x4] sm:$0xf] %vm507, %v762
        %780 = vst.msk [vmem:[%s777 + $0x8] sm:$0xf] %vm507, %v763
        %781 = vst.msk [vmem:[%s777 + $0xc] sm:$0xf] %vm507, %v764
        %782 = vst.msk [vmem:[%s777 + $0x10] sm:$0xf] %vm507, %v765
        %783 = vst.msk [vmem:[%s777 + $0x14] sm:$0xf] %vm507, %v766
        %784 = vst.msk [vmem:[%s777 + $0x18] sm:$0xf] %vm507, %v767
        %785 = vst.msk [vmem:[%s777 + $0x1c] sm:$0xf] %vm507, %v768
        %v786 = vmax.f32 %v647, %v715
        %v787 = vmax.f32 %v648, %v718
        %v788 = vmax.f32 %v649, %v723
        %v789 = vmax.f32 %v650, %v726
        %v790 = vmax.f32 %v651, %v731
        %v791 = vmax.f32 %v652, %v734
        %v792 = vmax.f32 %v653, %v739
        %v793 = vmax.f32 %v654, %v742
        %s794 = scalar_lea.vmem %s327, 192 [#allocation2]
        %v795 = vld [vmem:[%s794] sm:$0xff]
        %v796 = vld [vmem:[%s794 + $0x8] sm:$0xff]
        %v797 = vld [vmem:[%s794 + $0x10] sm:$0xff]
        %v798 = vld [vmem:[%s794 + $0x18] sm:$0xff]
        %v799 = vld [vmem:[%s794 + $0x20] sm:$0xff]
        %v800 = vld [vmem:[%s794 + $0x28] sm:$0xff]
        %v801 = vld [vmem:[%s794 + $0x30] sm:$0xff]
        %v802 = vld [vmem:[%s794 + $0x38] sm:$0xff]
        %v803 = vpack.c.bf16 %v796, %v795
        %v804 = vpack.c.bf16 %v798, %v797
        %v805 = vpack.c.bf16 %v800, %v799
        %v806 = vpack.c.bf16 %v802, %v801
        %v808 = vsel %vm397, %v803, 0
        %v811 = vsel %vm397, %v804, 0
        %v814 = vsel %vm397, %v805, 0
        %v817 = vsel %vm397, %v806, 0
        %819 = vmatprep.subr.bf16.mxu0 0
        %820 = vmatpush1.bf16.msra.mxu0 %v393
        %821 = vmatprep.subr.bf16.mxu0 0
        %822 = vmatpush1.bf16.msra.mxu0 %v394
        %823 = vmatprep.subr.bf16.mxu0 0
        %824 = vmatpush1.bf16.msra.mxu0 0
        %825 = vmatprep.subr.bf16.mxu0 0
        %826 = vmatpush1.bf16.msra.mxu0 0
        %827 = vmatprep.subr.bf16.mxu0 0
        %828 = vmatpush1.bf16.msra.mxu0 0
        %829 = vmatprep.subr.bf16.mxu0 0
        %830 = vmatpush1.bf16.msra.mxu0 0
        %831 = vmatprep.subr.bf16.mxu0 0
        %832 = vmatpush1.bf16.msra.mxu0 0
        %833 = vmatprep.subr.bf16.mxu0 0
        %834 = vmatpush1.bf16.msra.mxu0 0
        %835 = vmatprep.subr.bf16.mxu0 0
        %836 = vmatpush1.bf16.msra.mxu0 0
        %837 = vmatprep.subr.bf16.mxu0 0
        %838 = vmatpush1.bf16.msra.mxu0 0
        %839 = vmatprep.subr.bf16.mxu0 0
        %840 = vmatpush1.bf16.msra.mxu0 0
        %841 = vmatprep.subr.bf16.mxu0 0
        %842 = vmatpush1.bf16.msra.mxu0 0
        %843 = vmatprep.subr.bf16.mxu0 0
        %844 = vmatpush1.bf16.msra.mxu0 0
        %845 = vmatprep.subr.bf16.mxu0 0
        %846 = vmatpush1.bf16.msra.mxu0 0
        %847 = vmatprep.subr.bf16.mxu0 0
        %848 = vmatpush1.bf16.msra.mxu0 0
        %849 = vmatprep.subr.bf16.mxu0 0
        %850 = vmatpush1.bf16.msra.mxu0 0
        %851 = vmatprep.mubr.bf16.mxu0 0
        %852 = vmatmul.mubr.bf16.gmra.mrb[0].mxu0 %v808
        %v853 = vpop.f32.mrb[0].mxu0
        %v854 = vadd.f32 0.0, %v853
        %v855 = vpop.f32.mrb[0].mxu0
        %v856 = vpop.f32.mrb[0].mxu0
        %v857 = vadd.f32 0.0, %v856
        %v858 = vpop.f32.mrb[0].mxu0
        %859 = vmatprep.mubr.bf16.mxu0 0
        %860 = vmatmul.mubr.bf16.gmra.mrb[0].mxu0 %v811
        %v861 = vpop.f32.mrb[0].mxu0
        %v862 = vadd.f32 0.0, %v861
        %v863 = vpop.f32.mrb[0].mxu0
        %v864 = vpop.f32.mrb[0].mxu0
        %v865 = vadd.f32 0.0, %v864
        %v866 = vpop.f32.mrb[0].mxu0
        %867 = vmatprep.mubr.bf16.mxu0 0
        %868 = vmatmul.mubr.bf16.gmra.mrb[0].mxu0 %v814
        %v869 = vpop.f32.mrb[0].mxu0
        %v870 = vadd.f32 0.0, %v869
        %v871 = vpop.f32.mrb[0].mxu0
        %v872 = vpop.f32.mrb[0].mxu0
        %v873 = vadd.f32 0.0, %v872
        %v874 = vpop.f32.mrb[0].mxu0
        %875 = vmatprep.mubr.bf16.mxu0 0
        %876 = vmatmul.mubr.bf16.gmra.mrb[0].mxu0 %v817
        %v877 = vpop.f32.mrb[0].mxu0
        %v878 = vadd.f32 0.0, %v877
        %v879 = vpop.f32.mrb[0].mxu0
        %v880 = vpop.f32.mrb[0].mxu0
        %v881 = vadd.f32 0.0, %v880
        %v882 = vpop.f32.mrb[0].mxu0
        %883 = vdwg.mxu0
        %v884 = vpack.c.bf16 %v857, %v854
        %v885 = vpack.c.bf16 %v865, %v862
        %v886 = vpack.c.bf16 %v873, %v870
        %v887 = vpack.c.bf16 %v881, %v878
        %v892 = vunpack.c.l.b16 %v884
        %v893 = vunpack.c.h.b16 %v884
        %v894 = vunpack.c.l.b16 %v885
        %v895 = vunpack.c.h.b16 %v885
        %v896 = vunpack.c.l.b16 %v886
        %v897 = vunpack.c.h.b16 %v886
        %v898 = vunpack.c.l.b16 %v887
        %v899 = vunpack.c.h.b16 %v887
        %v900 = vpack.c.b16 %v892, %v892
        %v901 = vpack.c.b16 %v893, %v893
        %v902 = vpack.c.b16 %v894, %v894
        %v903 = vpack.c.b16 %v895, %v895
        %v904 = vpack.c.b16 %v896, %v896
        %v905 = vpack.c.b16 %v897, %v897
        %v906 = vpack.c.b16 %v898, %v898
        %v907 = vpack.c.b16 %v899, %v899
        %s916 = scalar_lea.vmem %s344, 96 [#allocation3]
        %917 = vst.msk [vmem:[%s916] sm:$0xf] %vm507, %v900
        %918 = vst.msk [vmem:[%s916 + $0x4] sm:$0xf] %vm507, %v901
        %919 = vst.msk [vmem:[%s916 + $0x8] sm:$0xf] %vm507, %v902
        %920 = vst.msk [vmem:[%s916 + $0xc] sm:$0xf] %vm507, %v903
        %921 = vst.msk [vmem:[%s916 + $0x10] sm:$0xf] %vm507, %v904
        %922 = vst.msk [vmem:[%s916 + $0x14] sm:$0xf] %vm507, %v905
        %923 = vst.msk [vmem:[%s916 + $0x18] sm:$0xf] %vm507, %v906
        %924 = vst.msk [vmem:[%s916 + $0x1c] sm:$0xf] %vm507, %v907
        %v925 = vmax.f32 %v786, %v854
        %v926 = vmax.f32 %v787, %v857
        %v927 = vmax.f32 %v788, %v862
        %v928 = vmax.f32 %v789, %v865
        %v929 = vmax.f32 %v790, %v870
        %v930 = vmax.f32 %v791, %v873
        %v931 = vmax.f32 %v792, %v878
        %v932 = vmax.f32 %v793, %v881
        %v933 = vpack.c.bf16 %v926, %v925
        %v934 = vpack.c.bf16 %v928, %v927
        %v935 = vpack.c.bf16 %v930, %v929
        %v936 = vpack.c.bf16 %v932, %v931
        %v941 = vunpack.c.l.b16 %v933
        %v942 = vunpack.c.h.b16 %v933
        %v943 = vunpack.c.l.b16 %v934
        %v944 = vunpack.c.h.b16 %v934
        %v945 = vunpack.c.l.b16 %v935
        %v946 = vunpack.c.h.b16 %v935
        %v947 = vunpack.c.l.b16 %v936
        %v948 = vunpack.c.h.b16 %v936
        %v949 = vpack.c.b16 %v941, %v941
        %v950 = vpack.c.b16 %v942, %v942
        %v951 = vpack.c.b16 %v943, %v943
        %v952 = vpack.c.b16 %v944, %v944
        %v953 = vpack.c.b16 %v945, %v945
        %v954 = vpack.c.b16 %v946, %v946
        %v955 = vpack.c.b16 %v947, %v947
        %v956 = vpack.c.b16 %v948, %v948
        %957 = vrot.lane.b32.xlu0 %v949, 124
        %v958 = vpop.permute.xlu0 %957
        %959 = vrot.lane.b32.xlu0 %v950, 124
        %v960 = vpop.permute.xlu0 %959
        %961 = vrot.lane.b32.xlu0 %v951, 124
        %v962 = vpop.permute.xlu0 %961
        %963 = vrot.lane.b32.xlu0 %v952, 124
        %v964 = vpop.permute.xlu0 %963
        %965 = vrot.lane.b32.xlu0 %v953, 124
        %v966 = vpop.permute.xlu0 %965
        %967 = vrot.lane.b32.xlu0 %v954, 124
        %v968 = vpop.permute.xlu0 %967
        %969 = vrot.lane.b32.xlu0 %v955, 124
        %v970 = vpop.permute.xlu0 %969
        %971 = vrot.lane.b32.xlu0 %v956, 124
        %v972 = vpop.permute.xlu0 %971
        %vm981 = vcmask 158720
        %982 = vst.msk [vmem:[%s366] sm:$0xf] %vm981, %v958
        %983 = vst.msk [vmem:[%s366 + $0x4] sm:$0xf] %vm981, %v960
        %984 = vst.msk [vmem:[%s366 + $0x8] sm:$0xf] %vm981, %v962
        %985 = vst.msk [vmem:[%s366 + $0xc] sm:$0xf] %vm981, %v964
        %986 = vst.msk [vmem:[%s366 + $0x10] sm:$0xf] %vm981, %v966
        %987 = vst.msk [vmem:[%s366 + $0x14] sm:$0xf] %vm981, %v968
        %988 = vst.msk [vmem:[%s366 + $0x18] sm:$0xf] %vm981, %v970
        %989 = vst.msk [vmem:[%s366 + $0x1c] sm:$0xf] %vm981, %v972
        %s990 = sand.u32 %s86, 1
        %s991 = sand.u32 %s86, 1
        %s992 = smul.addr %s991, 128
        %s993 = scalar_lea.vmem [#allocation3], %s992
        %s994 = smul.u32 8, %s20
        %p995 = scmp.lt.s32.totalorder %s19, 1
        %s996 = scalar_select %p995, %s19, 1
        %p997 = scmp.lt.s32.totalorder %s994, 31
        %s998 = scalar_select %p997, %s994, 31
        %s999 = smul.addr %s996, 32
        %s1000 = sadd.s32 %s998, %s999
        %s1001 = smul.addr %s1000, 4
        %s1002 = scalar_lea.vmem %s3, %s1001
        // Predicated region
        $region67: #{self_attention_forward.2} parent=61 // pred_check
          %p1003 = pneg %p96
        $region68: #{self_attention_forward.2} parent=61 // pred_check_branch
          %1005 = sbr.rel (%p1003) target = $region70
        $region69: #{self_attention_forward.2} parent=61 // pred_region
          %s1006 = smul.u32 8, %s20
          %s1007 = smul.addr %s19, 128
          %s1008 = sadd.s32 %s1006, %s1007
          %s1009 = smul.addr %s1008, 4
          %s1010 = scalar_lea.vmem %s2, %s1009
          // Predicated region
          $region71: #{self_attention_forward.2} parent=69 // pred_check
            _
          $region72: #{self_attention_forward.2} parent=69 // pred_check_branch
            %1012 = sbr.rel (0) target = $region74
          $region73: #{self_attention_forward.2} parent=69 // pred_region
            // Predicated region
            $region75: #{self_attention_forward.2} parent=73 // pred_check
              _
            $region76: #{self_attention_forward.2} parent=73 // pred_check_branch
              %1014 = sbr.rel target = $region78
            $region77: #{self_attention_forward.2} parent=73 // pred_region
              // Predicated region
              $region90: #{self_attention_forward.2} parent=77 // pred_check
                _
              $region91: #{self_attention_forward.2} parent=77 // pred_check_branch
                %1091 = sbr.rel (0) target = $region93
              $region92: #{self_attention_forward.2} parent=77 // pred_region
                loop: start=0, step=1, limit=1
                $region94: #{self_attention_forward.2} parent=92 // loop_pre_header
                  _
                $region95: #{self_attention_forward.2} parent=92 // loop_header
                  %s1093 = sphi 0, %s1097
                  %p1094 = scmp.ge.s32.totalorder %s1093, 1
                  %s1098 = sphi %s993, %s993
                  %s1099 = sphi %s1010, %s1010
                $region96: #{self_attention_forward.2} parent=92 // loop_header_branch
                  %1096 = sbr.rel (%p1094) target = $region100
                $region97: #{self_attention_forward.2} parent=92 // loop_body
                  _
                $region98: #{self_attention_forward.2} parent=92 // loop_footer
                  %s1097 = sadd.s32 1, %s1093
                $region99: #{self_attention_forward.2} parent=92 // loop_footer_branch
                  %1092 = sbr.rel target = $region95
                $region100: #{self_attention_forward.2} parent=92 // loop_exit
                  _
                loop: start=0, step=1, limit=1
                $region101: #{self_attention_forward.2} parent=92 // loop_pre_header
                  _
                $region102: #{self_attention_forward.2} parent=92 // loop_header
                  %s1102 = sphi 0, %s1106
                  %p1103 = scmp.ge.s32.totalorder %s1102, 1
                  %s1107 = sphi %s993, %s993
                  %s1108 = sphi %s1010, %s1010
                $region103: #{self_attention_forward.2} parent=92 // loop_header_branch
                  %1105 = sbr.rel (%p1103) target = $region107
                $region104: #{self_attention_forward.2} parent=92 // loop_body
                  %v1109 = vld [vmem:[%s1107] sm:$0xf]
                  %1110 = vst [vmem:[%s1108] sm:$0xf] %v1109
                  %v1111 = vld [vmem:[%s1107 + $0x4] sm:$0xf]
                  %1112 = vst [vmem:[%s1108 + $0x4] sm:$0xf] %v1111
                  %v1113 = vld [vmem:[%s1107 + $0x8] sm:$0xf]
                  %1114 = vst [vmem:[%s1108 + $0x8] sm:$0xf] %v1113
                  %v1115 = vld [vmem:[%s1107 + $0xc] sm:$0xf]
                  %1116 = vst [vmem:[%s1108 + $0xc] sm:$0xf] %v1115
                  %v1117 = vld [vmem:[%s1107 + $0x10] sm:$0xf]
                  %1118 = vst [vmem:[%s1108 + $0x10] sm:$0xf] %v1117
                  %v1119 = vld [vmem:[%s1107 + $0x14] sm:$0xf]
                  %1120 = vst [vmem:[%s1108 + $0x14] sm:$0xf] %v1119
                  %v1121 = vld [vmem:[%s1107 + $0x18] sm:$0xf]
                  %1122 = vst [vmem:[%s1108 + $0x18] sm:$0xf] %v1121
                  %v1123 = vld [vmem:[%s1107 + $0x1c] sm:$0xf]
                  %1124 = vst [vmem:[%s1108 + $0x1c] sm:$0xf] %v1123
                  %v1125 = vld [vmem:[%s1107 + $0x20] sm:$0xf]
                  %1126 = vst [vmem:[%s1108 + $0x80] sm:$0xf] %v1125
                  %v1127 = vld [vmem:[%s1107 + $0x24] sm:$0xf]
                  %1128 = vst [vmem:[%s1108 + $0x84] sm:$0xf] %v1127
                  %v1129 = vld [vmem:[%s1107 + $0x28] sm:$0xf]
                  %1130 = vst [vmem:[%s1108 + $0x88] sm:$0xf] %v1129
                  %v1131 = vld [vmem:[%s1107 + $0x2c] sm:$0xf]
                  %1132 = vst [vmem:[%s1108 + $0x8c] sm:$0xf] %v1131
                  %v1133 = vld [vmem:[%s1107 + $0x30] sm:$0xf]
                  %1134 = vst [vmem:[%s1108 + $0x90] sm:$0xf] %v1133
                  %v1135 = vld [vmem:[%s1107 + $0x34] sm:$0xf]
                  %1136 = vst [vmem:[%s1108 + $0x94] sm:$0xf] %v1135
                  %v1137 = vld [vmem:[%s1107 + $0x38] sm:$0xf]
                  %1138 = vst [vmem:[%s1108 + $0x98] sm:$0xf] %v1137
                  %v1139 = vld [vmem:[%s1107 + $0x3c] sm:$0xf]
                  %1140 = vst [vmem:[%s1108 + $0x9c] sm:$0xf] %v1139
                  %v1141 = vld [vmem:[%s1107 + $0x40] sm:$0xf]
                  %1142 = vst [vmem:[%s1108 + $0x100] sm:$0xf] %v1141
                  %v1143 = vld [vmem:[%s1107 + $0x44] sm:$0xf]
                  %1144 = vst [vmem:[%s1108 + $0x104] sm:$0xf] %v1143
                  %v1145 = vld [vmem:[%s1107 + $0x48] sm:$0xf]
                  %1146 = vst [vmem:[%s1108 + $0x108] sm:$0xf] %v1145
                  %v1147 = vld [vmem:[%s1107 + $0x4c] sm:$0xf]
                  %1148 = vst [vmem:[%s1108 + $0x10c] sm:$0xf] %v1147
                  %v1149 = vld [vmem:[%s1107 + $0x50] sm:$0xf]
                  %1150 = vst [vmem:[%s1108 + $0x110] sm:$0xf] %v1149
                  %v1151 = vld [vmem:[%s1107 + $0x54] sm:$0xf]
                  %1152 = vst [vmem:[%s1108 + $0x114] sm:$0xf] %v1151
                  %v1153 = vld [vmem:[%s1107 + $0x58] sm:$0xf]
                  %1154 = vst [vmem:[%s1108 + $0x118] sm:$0xf] %v1153
                  %v1155 = vld [vmem:[%s1107 + $0x5c] sm:$0xf]
                  %1156 = vst [vmem:[%s1108 + $0x11c] sm:$0xf] %v1155
                  %v1157 = vld [vmem:[%s1107 + $0x60] sm:$0xf]
                  %1158 = vst [vmem:[%s1108 + $0x180] sm:$0xf] %v1157
                  %v1159 = vld [vmem:[%s1107 + $0x64] sm:$0xf]
                  %1160 = vst [vmem:[%s1108 + $0x184] sm:$0xf] %v1159
                  %v1161 = vld [vmem:[%s1107 + $0x68] sm:$0xf]
                  %1162 = vst [vmem:[%s1108 + $0x188] sm:$0xf] %v1161
                  %v1163 = vld [vmem:[%s1107 + $0x6c] sm:$0xf]
                  %1164 = vst [vmem:[%s1108 + $0x18c] sm:$0xf] %v1163
                  %v1165 = vld [vmem:[%s1107 + $0x70] sm:$0xf]
                  %1166 = vst [vmem:[%s1108 + $0x190] sm:$0xf] %v1165
                  %v1167 = vld [vmem:[%s1107 + $0x74] sm:$0xf]
                  %1168 = vst [vmem:[%s1108 + $0x194] sm:$0xf] %v1167
                  %v1169 = vld [vmem:[%s1107 + $0x78] sm:$0xf]
                  %1170 = vst [vmem:[%s1108 + $0x198] sm:$0xf] %v1169
                  %v1171 = vld [vmem:[%s1107 + $0x7c] sm:$0xf]
                  %1172 = vst [vmem:[%s1108 + $0x19c] sm:$0xf] %v1171
                $region105: #{self_attention_forward.2} parent=92 // loop_footer
                  %s1106 = sadd.s32 1, %s1102
                $region106: #{self_attention_forward.2} parent=92 // loop_footer_branch
                  %1101 = sbr.rel target = $region102
                $region107: #{self_attention_forward.2} parent=92 // loop_exit
                  _
              $region93: #{self_attention_forward.2} parent=77 // pred_fallthru
                _
            $region78: #{self_attention_forward.2} parent=73 // pred_fallthru
              _
            // Predicated region
            $region79: #{self_attention_forward.2} parent=73 // pred_check
              _
            $region80: #{self_attention_forward.2} parent=73 // pred_check_branch
              %1016 = sbr.rel (0) target = $region82
            $region81: #{self_attention_forward.2} parent=73 // pred_region
              loop: start=0, step=1, limit=1
              $region83: #{self_attention_forward.2} parent=81 // loop_pre_header
                _
              $region84: #{self_attention_forward.2} parent=81 // loop_header
                %s1019 = sphi 0, %s1023
                %p1020 = scmp.ge.s32.totalorder %s1019, 1
                %s1024 = sphi %s993, %s993
                %s1025 = sphi %s1010, %s1010
              $region85: #{self_attention_forward.2} parent=81 // loop_header_branch
                %1022 = sbr.rel (%p1020) target = $region89
              $region86: #{self_attention_forward.2} parent=81 // loop_body
                %v1026 = vld [vmem:[%s1024] sm:$0xf]
                %1027 = vst [vmem:[%s1025] sm:$0xf] %v1026
                %v1028 = vld [vmem:[%s1024 + $0x4] sm:$0xf]
                %1029 = vst [vmem:[%s1025 + $0x4] sm:$0xf] %v1028
                %v1030 = vld [vmem:[%s1024 + $0x8] sm:$0xf]
                %1031 = vst [vmem:[%s1025 + $0x8] sm:$0xf] %v1030
                %v1032 = vld [vmem:[%s1024 + $0xc] sm:$0xf]
                %1033 = vst [vmem:[%s1025 + $0xc] sm:$0xf] %v1032
                %v1034 = vld [vmem:[%s1024 + $0x10] sm:$0xf]
                %1035 = vst [vmem:[%s1025 + $0x10] sm:$0xf] %v1034
                %v1036 = vld [vmem:[%s1024 + $0x14] sm:$0xf]
                %1037 = vst [vmem:[%s1025 + $0x14] sm:$0xf] %v1036
                %v1038 = vld [vmem:[%s1024 + $0x18] sm:$0xf]
                %1039 = vst [vmem:[%s1025 + $0x18] sm:$0xf] %v1038
                %v1040 = vld [vmem:[%s1024 + $0x1c] sm:$0xf]
                %1041 = vst [vmem:[%s1025 + $0x1c] sm:$0xf] %v1040
                %v1042 = vld [vmem:[%s1024 + $0x20] sm:$0xf]
                %1043 = vst [vmem:[%s1025 + $0x80] sm:$0xf] %v1042
                %v1044 = vld [vmem:[%s1024 + $0x24] sm:$0xf]
                %1045 = vst [vmem:[%s1025 + $0x84] sm:$0xf] %v1044
                %v1046 = vld [vmem:[%s1024 + $0x28] sm:$0xf]
                %1047 = vst [vmem:[%s1025 + $0x88] sm:$0xf] %v1046
                %v1048 = vld [vmem:[%s1024 + $0x2c] sm:$0xf]
                %1049 = vst [vmem:[%s1025 + $0x8c] sm:$0xf] %v1048
                %v1050 = vld [vmem:[%s1024 + $0x30] sm:$0xf]
                %1051 = vst [vmem:[%s1025 + $0x90] sm:$0xf] %v1050
                %v1052 = vld [vmem:[%s1024 + $0x34] sm:$0xf]
                %1053 = vst [vmem:[%s1025 + $0x94] sm:$0xf] %v1052
                %v1054 = vld [vmem:[%s1024 + $0x38] sm:$0xf]
                %1055 = vst [vmem:[%s1025 + $0x98] sm:$0xf] %v1054
                %v1056 = vld [vmem:[%s1024 + $0x3c] sm:$0xf]
                %1057 = vst [vmem:[%s1025 + $0x9c] sm:$0xf] %v1056
                %v1058 = vld [vmem:[%s1024 + $0x40] sm:$0xf]
                %1059 = vst [vmem:[%s1025 + $0x100] sm:$0xf] %v1058
                %v1060 = vld [vmem:[%s1024 + $0x44] sm:$0xf]
                %1061 = vst [vmem:[%s1025 + $0x104] sm:$0xf] %v1060
                %v1062 = vld [vmem:[%s1024 + $0x48] sm:$0xf]
                %1063 = vst [vmem:[%s1025 + $0x108] sm:$0xf] %v1062
                %v1064 = vld [vmem:[%s1024 + $0x4c] sm:$0xf]
                %1065 = vst [vmem:[%s1025 + $0x10c] sm:$0xf] %v1064
                %v1066 = vld [vmem:[%s1024 + $0x50] sm:$0xf]
                %1067 = vst [vmem:[%s1025 + $0x110] sm:$0xf] %v1066
                %v1068 = vld [vmem:[%s1024 + $0x54] sm:$0xf]
                %1069 = vst [vmem:[%s1025 + $0x114] sm:$0xf] %v1068
                %v1070 = vld [vmem:[%s1024 + $0x58] sm:$0xf]
                %1071 = vst [vmem:[%s1025 + $0x118] sm:$0xf] %v1070
                %v1072 = vld [vmem:[%s1024 + $0x5c] sm:$0xf]
                %1073 = vst [vmem:[%s1025 + $0x11c] sm:$0xf] %v1072
                %v1074 = vld [vmem:[%s1024 + $0x60] sm:$0xf]
                %1075 = vst [vmem:[%s1025 + $0x180] sm:$0xf] %v1074
                %v1076 = vld [vmem:[%s1024 + $0x64] sm:$0xf]
                %1077 = vst [vmem:[%s1025 + $0x184] sm:$0xf] %v1076
                %v1078 = vld [vmem:[%s1024 + $0x68] sm:$0xf]
                %1079 = vst [vmem:[%s1025 + $0x188] sm:$0xf] %v1078
                %v1080 = vld [vmem:[%s1024 + $0x6c] sm:$0xf]
                %1081 = vst [vmem:[%s1025 + $0x18c] sm:$0xf] %v1080
                %v1082 = vld [vmem:[%s1024 + $0x70] sm:$0xf]
                %1083 = vst [vmem:[%s1025 + $0x190] sm:$0xf] %v1082
                %v1084 = vld [vmem:[%s1024 + $0x74] sm:$0xf]
                %1085 = vst [vmem:[%s1025 + $0x194] sm:$0xf] %v1084
                %v1086 = vld [vmem:[%s1024 + $0x78] sm:$0xf]
                %1087 = vst [vmem:[%s1025 + $0x198] sm:$0xf] %v1086
                %v1088 = vld [vmem:[%s1024 + $0x7c] sm:$0xf]
                %1089 = vst [vmem:[%s1025 + $0x19c] sm:$0xf] %v1088
              $region87: #{self_attention_forward.2} parent=81 // loop_footer
                %s1023 = sadd.s32 1, %s1019
              $region88: #{self_attention_forward.2} parent=81 // loop_footer_branch
                %1018 = sbr.rel target = $region84
              $region89: #{self_attention_forward.2} parent=81 // loop_exit
                _
            $region82: #{self_attention_forward.2} parent=73 // pred_fallthru
              _
          $region74: #{self_attention_forward.2} parent=69 // pred_fallthru
            _
          %1173 = vnop
        $region70: #{self_attention_forward.2} parent=61 // pred_fallthru
          _
        // Predicated region
        $region108: #{self_attention_forward.2} parent=61 // pred_check
          %p1174 = pneg %p124
        $region109: #{self_attention_forward.2} parent=61 // pred_check_branch
          %1176 = sbr.rel (%p1174) target = $region111
        $region110: #{self_attention_forward.2} parent=61 // pred_region
          %s1177 = smul.u32 8, %s20
        $region111: #{self_attention_forward.2} parent=61 // pred_fallthru
          _
      $region62: #{self_attention_forward.2} parent=5 // pred_fallthru
        _
      %p1178 = scmp.le.s32.totalorder 2, %s10
      // Predicated region
      $region112: #{self_attention_forward.2} parent=5 // pred_check
        %p1179 = pneg %p1178
      $region113: #{self_attention_forward.2} parent=5 // pred_check_branch
        %1181 = sbr.rel (%p1179) target = $region115
      $region114: #{self_attention_forward.2} parent=5 // pred_region
        %s1182 = ssub.s32 %s10, 2
        // Predicated region
        $region116: #{self_attention_forward.2} parent=114 // pred_check
          %p1183 = pneg %p102
        $region117: #{self_attention_forward.2} parent=114 // pred_check_branch
          %1185 = sbr.rel (%p1183) target = $region119
        $region118: #{self_attention_forward.2} parent=114 // pred_region
          %s1186 = sand.u32 %s87, 1
          %s1187 = sand.u32 %s87, 1
          %s1188 = smul.addr %s1187, 128
          %s1189 = scalar_lea.vmem [#allocation3], %s1188
        $region119: #{self_attention_forward.2} parent=114 // pred_fallthru
          _
        // Predicated region
        $region120: #{self_attention_forward.2} parent=114 // pred_check
          %p1190 = pneg %p130
        $region121: #{self_attention_forward.2} parent=114 // pred_check_branch
          %1192 = sbr.rel (%p1190) target = $region123
        $region122: #{self_attention_forward.2} parent=114 // pred_region
          %s1193 = smul.u32 8, %s22
          %p1194 = scmp.lt.s32.totalorder %s21, 1
          %s1195 = scalar_select %p1194, %s21, 1
          %p1196 = scmp.lt.s32.totalorder %s1193, 31
          %s1197 = scalar_select %p1196, %s1193, 31
          %s1198 = smul.addr %s1195, 32
          %s1199 = sadd.s32 %s1197, %s1198
          %s1200 = smul.addr %s1199, 4
          %s1201 = scalar_lea.vmem %s3, %s1200
        $region123: #{self_attention_forward.2} parent=114 // pred_fallthru
          _
      $region115: #{self_attention_forward.2} parent=5 // pred_fallthru
        _
    $region6: #{self_attention_forward.2} parent=1 // loop_footer
      %s14 = sadd.s32 1, %s10
    $region7: #{self_attention_forward.2} parent=1 // loop_footer_branch
      %9 = sbr.rel target = $region3
    $region8: #{self_attention_forward.2} parent=1 // loop_exit
      _

// kernel: self_attention_forward.3
$region0: #{self_attention_forward.3}
  #allocation0 [shape = 'u32[]', space=smem, size = 0x4, offset = 0x4, fixed_abs, tag = 'smem constant byte address 0x4 - core index']
  #allocation1 [shape = 'u32[144,128]{1,0:T(1,128)}', space=vmem, size = 0x12000, scoped, tag = 'internal scratch']
  #allocation2 [shape = 'f32[1]{0:T(128)S(6)}', space=smem, size = 0x200, scoped, tag = 'scoped memory for self_attention_forward.3']
  %s0 = inlined_call_operand.<no memory space> [shape: f32[1], index: 0, kind: input, shape index: {}]
  %s1 = inlined_call_operand.vmem [shape: f32[2,1024,32], index: 1, kind: input, shape index: {}, may-alias: {1,5}]
  %s2 = inlined_call_operand.vmem [shape: bf16[2,1024,4], index: 2, kind: input, shape index: {}]
  %s3 = inlined_call_operand.vmem [shape: bf16[2,256,20], index: 3, kind: input, shape index: {}]
  %s4 = inlined_call_operand.vmem [shape: bf16[16,32], index: 4, kind: input, shape index: {}]
  %s5 = inlined_call_operand.vmem [shape: f32[2,1024,32], index: 5, kind: output, shape index: {}, may-alias: {1,5}]
  %s6 = sld [smem:[#allocation0]]
  $region53: #{self_attention_forward.3} parent=0
    _
  %s8 = ssub.s32 1, %s6
  %s9 = scalar_select 0, %s8, %s6
  %10 = sst [smem:[#allocation2]] %s0
  loop: start=0, step=1, limit=10
  $region2: #{self_attention_forward.3} parent=0 // loop_pre_header
    _
  $region3: #{self_attention_forward.3} parent=0 // loop_header
    %s12 = sphi 0, %s16
    %p13 = scmp.ge.s32.totalorder %s12, 10
    %s19 = sphi 0, %s31
    %s20 = sphi 0, %s27
    %s21 = sphi 0, %s19
    %s22 = sphi 0, %s20
    %s23 = sphi 0, %s21
    %s24 = sphi 0, %s22
    %s32 = sphi 0, %s32
    %s34 = sphi 0, %s32
    %s35 = sphi 0, %s34
    %s49 = sphi 0, %s35
    %s57 = sphi 0, %s59
    %s60 = sphi 0, %s57
    %s61 = sphi 0, %s60
    %s77 = sphi 0, %s61
    %s85 = sphi 0, %s87
    %s88 = sphi 0, %s85
    %s89 = sphi 0, %s88
    %s105 = sphi 0, %s89
    %s111 = sphi 0, %s113
    %s114 = sphi 0, %s111
    %s115 = sphi 0, %s114
    %s131 = sphi 0, %s115
    %s135 = sphi 0, %s135
    %s137 = sphi 0, %s135
    %s138 = sphi 0, %s137
    %s152 = sphi 0, %s138
    %s160 = sphi 0, %s162
    %s163 = sphi 0, %s160
    %s164 = sphi 0, %s163
    %s180 = sphi 0, %s164
  $region4: #{self_attention_forward.3} parent=0 // loop_header_branch
    %15 = sbr.rel (%p13) target = $region8
  $region5: #{self_attention_forward.3} parent=0 // loop_body
    %s17 = ssub.s32 %s12, 1
    %s18 = ssub.s32 %s12, 2
    %s25 = sadd.s32 1, %s20
    %p26 = scmp.ge.s32.totalorder %s25, 4
    %s27 = scalar_select %p26, 0, %s25
    %s28 = sadd.s32 1, %s19
    %s29 = scalar_select %p26, %s28, %s19
    %p30 = scmp.ge.s32.totalorder %s29, 2
    %s31 = scalar_select %p30, 0, %s29
    %s33 = sadd.s32 %s32, 1
    %p36 = scmp.eq.s32.totalorder %s12, 7
    %p37 = scmp.ne.s32.totalorder %s32, %s34
    %p38 = scmp.eq.s32.totalorder %s12, 0
    %p39 = por %p37, %p38
    %p40 = scmp.ne.s32.totalorder %s32, %s34
    %p41 = scmp.eq.s32.totalorder %s17, 7
    %p42 = por %p40, %p41
    %p43 = scmp.ne.s32.totalorder %s34, %s35
    %p44 = scmp.eq.s32.totalorder %s17, 0
    %p45 = por %p43, %p44
    %p46 = scmp.ne.s32.totalorder %s34, %s35
    %p47 = scmp.eq.s32.totalorder %s18, 7
    %p48 = por %p46, %p47
    %p50 = scmp.ne.s32.totalorder %s35, %s49
    %p51 = scmp.eq.s32.totalorder %s18, 0
    %p52 = por %p50, %p51
    %s53 = ssub.s32 %s19, %s31
    %s54 = ssub.s32 %s20, %s27
    %s55 = sor.u32 %s53, %s54
    %p56 = scmp.eq.s32.totalorder %s55, 0
    %s58 = sadd.s32 %s57, 1
    %s59 = scalar_select %p56, %s57, %s58
    %p62 = pneg %p56
    %p63 = scmp.eq.s32.totalorder %s12, 7
    %p64 = por %p62, %p63
    %p65 = scmp.ne.s32.totalorder %s57, %s60
    %p66 = scmp.eq.s32.totalorder %s12, 0
    %p67 = por %p65, %p66
    %p68 = scmp.ne.s32.totalorder %s57, %s60
    %p69 = scmp.eq.s32.totalorder %s17, 7
    %p70 = por %p68, %p69
    %p71 = scmp.ne.s32.totalorder %s60, %s61
    %p72 = scmp.eq.s32.totalorder %s17, 0
    %p73 = por %p71, %p72
    %p74 = scmp.ne.s32.totalorder %s60, %s61
    %p75 = scmp.eq.s32.totalorder %s18, 7
    %p76 = por %p74, %p75
    %p78 = scmp.ne.s32.totalorder %s61, %s77
    %p79 = scmp.eq.s32.totalorder %s18, 0
    %p80 = por %p78, %p79
    %s81 = ssub.s32 %s19, %s31
    %s82 = ssub.s32 %s20, %s27
    %s83 = sor.u32 %s81, %s82
    %p84 = scmp.eq.s32.totalorder %s83, 0
    %s86 = sadd.s32 %s85, 1
    %s87 = scalar_select %p84, %s85, %s86
    %p90 = pneg %p84
    %p91 = scmp.eq.s32.totalorder %s12, 7
    %p92 = por %p90, %p91
    %p93 = scmp.ne.s32.totalorder %s85, %s88
    %p94 = scmp.eq.s32.totalorder %s12, 0
    %p95 = por %p93, %p94
    %p96 = scmp.ne.s32.totalorder %s85, %s88
    %p97 = scmp.eq.s32.totalorder %s17, 7
    %p98 = por %p96, %p97
    %p99 = scmp.ne.s32.totalorder %s88, %s89
    %p100 = scmp.eq.s32.totalorder %s17, 0
    %p101 = por %p99, %p100
    %p102 = scmp.ne.s32.totalorder %s88, %s89
    %p103 = scmp.eq.s32.totalorder %s18, 7
    %p104 = por %p102, %p103
    %p106 = scmp.ne.s32.totalorder %s89, %s105
    %p107 = scmp.eq.s32.totalorder %s18, 0
    %p108 = por %p106, %p107
    %s109 = ssub.s32 %s19, %s31
    %p110 = scmp.eq.s32.totalorder %s109, 0
    %s112 = sadd.s32 %s111, 1
    %s113 = scalar_select %p110, %s111, %s112
    %p116 = pneg %p110
    %p117 = scmp.eq.s32.totalorder %s12, 7
    %p118 = por %p116, %p117
    %p119 = scmp.ne.s32.totalorder %s111, %s114
    %p120 = scmp.eq.s32.totalorder %s12, 0
    %p121 = por %p119, %p120
    %p122 = scmp.ne.s32.totalorder %s111, %s114
    %p123 = scmp.eq.s32.totalorder %s17, 7
    %p124 = por %p122, %p123
    %p125 = scmp.ne.s32.totalorder %s114, %s115
    %p126 = scmp.eq.s32.totalorder %s17, 0
    %p127 = por %p125, %p126
    %p128 = scmp.ne.s32.totalorder %s114, %s115
    %p129 = scmp.eq.s32.totalorder %s18, 7
    %p130 = por %p128, %p129
    %p132 = scmp.ne.s32.totalorder %s115, %s131
    %p133 = scmp.eq.s32.totalorder %s18, 0
    %p134 = por %p132, %p133
    %s136 = sadd.s32 %s135, 1
    %p139 = scmp.eq.s32.totalorder %s12, 7
    %p140 = scmp.ne.s32.totalorder %s135, %s137
    %p141 = scmp.eq.s32.totalorder %s12, 0
    %p142 = por %p140, %p141
    %p143 = scmp.ne.s32.totalorder %s135, %s137
    %p144 = scmp.eq.s32.totalorder %s17, 7
    %p145 = por %p143, %p144
    %p146 = scmp.ne.s32.totalorder %s137, %s138
    %p147 = scmp.eq.s32.totalorder %s17, 0
    %p148 = por %p146, %p147
    %p149 = scmp.ne.s32.totalorder %s137, %s138
    %p150 = scmp.eq.s32.totalorder %s18, 7
    %p151 = por %p149, %p150
    %p153 = scmp.ne.s32.totalorder %s138, %s152
    %p154 = scmp.eq.s32.totalorder %s18, 0
    %p155 = por %p153, %p154
    %s156 = ssub.s32 %s19, %s31
    %s157 = ssub.s32 %s20, %s27
    %s158 = sor.u32 %s156, %s157
    %p159 = scmp.eq.s32.totalorder %s158, 0
    %s161 = sadd.s32 %s160, 1
    %s162 = scalar_select %p159, %s160, %s161
    %p165 = pneg %p159
    %p166 = scmp.eq.s32.totalorder %s12, 7
    %p167 = por %p165, %p166
    %p168 = scmp.ne.s32.totalorder %s160, %s163
    %p169 = scmp.eq.s32.totalorder %s12, 0
    %p170 = por %p168, %p169
    %p171 = scmp.ne.s32.totalorder %s160, %s163
    %p172 = scmp.eq.s32.totalorder %s17, 7
    %p173 = por %p171, %p172
    %p174 = scmp.ne.s32.totalorder %s163, %s164
    %p175 = scmp.eq.s32.totalorder %s17, 0
    %p176 = por %p174, %p175
    %p177 = scmp.ne.s32.totalorder %s163, %s164
    %p178 = scmp.eq.s32.totalorder %s18, 7
    %p179 = por %p177, %p178
    %p181 = scmp.ne.s32.totalorder %s164, %s180
    %p182 = scmp.eq.s32.totalorder %s18, 0
    %p183 = por %p181, %p182
    %p184 = scmp.le.s32.totalorder 1, %s12
    %p185 = scmp.lt.s32.totalorder %s12, 9
    %p186 = pnand %p184, %p185
    %p187 = pneg %p186
    // Predicated region
    $region9: #{self_attention_forward.3} parent=5 // pred_check
      _
    $region10: #{self_attention_forward.3} parent=5 // pred_check_branch
      %189 = sbr.rel (%p186) target = $region12
    $region11: #{self_attention_forward.3} parent=5 // pred_region
      %s190 = ssub.s32 %s12, 1
      // Predicated region
      $region13: #{self_attention_forward.3} parent=11 // pred_check
        %p191 = pneg %p45
      $region14: #{self_attention_forward.3} parent=11 // pred_check_branch
        %193 = sbr.rel (%p191) target = $region16
      $region15: #{self_attention_forward.3} parent=11 // pred_region
        _
      $region16: #{self_attention_forward.3} parent=11 // pred_fallthru
        _
      // Predicated region
      $region17: #{self_attention_forward.3} parent=11 // pred_check
        %p194 = pneg %p148
      $region18: #{self_attention_forward.3} parent=11 // pred_check_branch
        %196 = sbr.rel (%p194) target = $region20
      $region19: #{self_attention_forward.3} parent=11 // pred_region
        _
      $region20: #{self_attention_forward.3} parent=11 // pred_fallthru
        _
    $region12: #{self_attention_forward.3} parent=5 // pred_fallthru
      _
    %p197 = scmp.lt.s32.totalorder %s12, 8
    // Predicated region
    $region21: #{self_attention_forward.3} parent=5 // pred_check
      %p198 = pneg %p197
    $region22: #{self_attention_forward.3} parent=5 // pred_check_branch
      %200 = sbr.rel (%p198) target = $region24
    $region23: #{self_attention_forward.3} parent=5 // pred_region
      // Predicated region
      $region25: #{self_attention_forward.3} parent=23 // pred_check
        %p201 = pneg %p67
      $region26: #{self_attention_forward.3} parent=23 // pred_check_branch
        %203 = sbr.rel (%p201) target = $region28
      $region27: #{self_attention_forward.3} parent=23 // pred_region
        %s204 = smul.u32 32, %s20
        %p205 = scmp.lt.s32.totalorder %s19, 1
        %s206 = scalar_select %p205, %s19, 1
        %p207 = scmp.lt.s32.totalorder %s204, 127
        %s208 = scalar_select %p207, %s204, 127
        %s209 = smul.addr %s206, 128
        %s210 = sadd.s32 %s208, %s209
        %s211 = smul.addr %s210, 8
        %s212 = scalar_lea.vmem %s1, %s211
        %s213 = smul.u32 32, %s20
      $region28: #{self_attention_forward.3} parent=23 // pred_fallthru
        _
      // Predicated region
      $region29: #{self_attention_forward.3} parent=23 // pred_check
        %p214 = pneg %p95
      $region30: #{self_attention_forward.3} parent=23 // pred_check_branch
        %216 = sbr.rel (%p214) target = $region32
      $region31: #{self_attention_forward.3} parent=23 // pred_region
        %s217 = smul.u32 32, %s20
        %p218 = scmp.lt.s32.totalorder %s19, 1
        %s219 = scalar_select %p218, %s19, 1
        %p220 = scmp.lt.s32.totalorder %s217, 127
        %s221 = scalar_select %p220, %s217, 127
        %s222 = smul.addr %s219, 128
        %s223 = sadd.s32 %s221, %s222
        %s224 = smul.addr %s223, 4
        %s225 = scalar_lea.vmem %s2, %s224
        %s226 = smul.u32 32, %s20
      $region32: #{self_attention_forward.3} parent=23 // pred_fallthru
        _
      // Predicated region
      $region33: #{self_attention_forward.3} parent=23 // pred_check
        %p227 = pneg %p121
      $region34: #{self_attention_forward.3} parent=23 // pred_check_branch
        %229 = sbr.rel (%p227) target = $region36
      $region35: #{self_attention_forward.3} parent=23 // pred_region
        %p230 = scmp.lt.s32.totalorder %s19, 1
        %s231 = scalar_select %p230, %s19, 1
        %s232 = smul.addr %s231, 32
        %s233 = smul.addr %s232, 4
        %s234 = scalar_lea.vmem %s3, %s233
      $region36: #{self_attention_forward.3} parent=23 // pred_fallthru
        _
    $region24: #{self_attention_forward.3} parent=5 // pred_fallthru
      _
    %p235 = scmp.le.s32.totalorder 1, %s12
    %p236 = scmp.lt.s32.totalorder %s12, 9
    %p237 = pnand %p235, %p236
    %p238 = pneg %p237
    // Predicated region
    $region37: #{self_attention_forward.3} parent=5 // pred_check
      _
    $region38: #{self_attention_forward.3} parent=5 // pred_check_branch
      %240 = sbr.rel (%p237) target = $region40
    $region39: #{self_attention_forward.3} parent=5 // pred_region
      %s241 = ssub.s32 %s12, 1
      %p242 = pneg %p45
      %p243 = pneg %p42
      %s244 = smul.u32 32, %s22
      %p245 = scmp.lt.s32.totalorder %s21, 1
      %s246 = scalar_select %p245, %s21, 1
      %p247 = scmp.lt.s32.totalorder %s244, 127
      %s248 = scalar_select %p247, %s244, 127
      %s249 = smul.addr %s246, 128
      %s250 = sadd.s32 %s248, %s249
      %s251 = smul.addr %s250, 8
      %s252 = scalar_lea.vmem %s1, %s251
      %p253 = pneg %p73
      %p254 = pneg %p70
      %s255 = smul.u32 32, %s22
      %p256 = scmp.lt.s32.totalorder %s21, 1
      %s257 = scalar_select %p256, %s21, 1
      %p258 = scmp.lt.s32.totalorder %s255, 127
      %s259 = scalar_select %p258, %s255, 127
      %s260 = smul.addr %s257, 128
      %s261 = sadd.s32 %s259, %s260
      %s262 = smul.addr %s261, 4
      %s263 = scalar_lea.vmem %s2, %s262
      %p264 = pneg %p101
      %p265 = pneg %p98
      %p266 = scmp.lt.s32.totalorder %s21, 1
      %s267 = scalar_select %p266, %s21, 1
      %s268 = smul.addr %s267, 32
      %s269 = smul.addr %s268, 4
      %s270 = scalar_lea.vmem %s3, %s269
      %p271 = pneg %p127
      %p272 = pneg %p124
      %p273 = pneg %p148
      %p274 = pneg %p145
      %p275 = pneg %p176
      %p276 = pneg %p173
      %s277 = smul.u32 32, %s22
      %p278 = scmp.lt.s32.totalorder %s21, 1
      %s279 = scalar_select %p278, %s21, 1
      %p280 = scmp.lt.s32.totalorder %s277, 127
      %s281 = scalar_select %p280, %s277, 127
      %s282 = smul.addr %s279, 128
      %s283 = sadd.s32 %s281, %s282
      %s284 = smul.addr %s283, 8
      %s285 = scalar_lea.vmem %s5, %s284
      %s286 = smul.u32 32, %s22
      %p287 = scmp.lt.s32.totalorder %s21, 1
      %s288 = scalar_select %p287, %s21, 1
      %p289 = scmp.lt.s32.totalorder %s286, 127
      %s290 = scalar_select %p289, %s286, 127
      %s291 = smul.addr %s288, 128
      %s292 = sadd.s32 %s290, %s291
      %s293 = smul.addr %s292, 8
      %s294 = scalar_lea.vmem %s1, %s293
      %s295 = smul.u32 32, %s22
      %s296 = smul.u32 32, %s22
      %p297 = scmp.lt.s32.totalorder %s21, 1
      %s298 = scalar_select %p297, %s21, 1
      %p299 = scmp.lt.s32.totalorder %s296, 127
      %s300 = scalar_select %p299, %s296, 127
      %s301 = smul.addr %s298, 128
      %s302 = sadd.s32 %s300, %s301
      %s303 = smul.addr %s302, 4
      %s304 = scalar_lea.vmem %s2, %s303
      %s305 = smul.u32 32, %s22
      %p306 = scmp.lt.s32.totalorder %s21, 1
      %s307 = scalar_select %p306, %s21, 1
      %s308 = smul.addr %s307, 32
      %s309 = smul.addr %s308, 4
      %s310 = scalar_lea.vmem %s3, %s309
      %s311 = smul.u32 32, %s22
      %p312 = scmp.lt.s32.totalorder %s21, 1
      %s313 = scalar_select %p312, %s21, 1
      %p314 = scmp.lt.s32.totalorder %s311, 127
      %s315 = scalar_select %p314, %s311, 127
      %s316 = smul.addr %s313, 128
      %s317 = sadd.s32 %s315, %s316
      %s318 = smul.addr %s317, 8
      %s319 = scalar_lea.vmem %s5, %s318
      %s320 = smul.u32 32, %s22
      %v322 = vld [vmem:[%s304] sm:$0xf]
      %v323 = vld [vmem:[%s304 + $0x4] sm:$0xf]
      %v324 = vld [vmem:[%s304 + $0x8] sm:$0xf]
      %v325 = vld [vmem:[%s304 + $0xc] sm:$0xf]
      %v326 = vld [vmem:[%s304 + $0x10] sm:$0xf]
      %v327 = vld [vmem:[%s304 + $0x14] sm:$0xf]
      %v328 = vld [vmem:[%s304 + $0x18] sm:$0xf]
      %v329 = vld [vmem:[%s304 + $0x1c] sm:$0xf]
      %v330 = vld [vmem:[%s304 + $0x20] sm:$0xf]
      %v331 = vld [vmem:[%s304 + $0x24] sm:$0xf]
      %v332 = vld [vmem:[%s304 + $0x28] sm:$0xf]
      %v333 = vld [vmem:[%s304 + $0x2c] sm:$0xf]
      %v334 = vld [vmem:[%s304 + $0x30] sm:$0xf]
      %v335 = vld [vmem:[%s304 + $0x34] sm:$0xf]
      %v336 = vld [vmem:[%s304 + $0x38] sm:$0xf]
      %v337 = vld [vmem:[%s304 + $0x3c] sm:$0xf]
      %v338 = vld [vmem:[%s304 + $0x40] sm:$0xf]
      %v339 = vld [vmem:[%s304 + $0x44] sm:$0xf]
      %v340 = vld [vmem:[%s304 + $0x48] sm:$0xf]
      %v341 = vld [vmem:[%s304 + $0x4c] sm:$0xf]
      %v342 = vld [vmem:[%s304 + $0x50] sm:$0xf]
      %v343 = vld [vmem:[%s304 + $0x54] sm:$0xf]
      %v344 = vld [vmem:[%s304 + $0x58] sm:$0xf]
      %v345 = vld [vmem:[%s304 + $0x5c] sm:$0xf]
      %v346 = vld [vmem:[%s304 + $0x60] sm:$0xf]
      %v347 = vld [vmem:[%s304 + $0x64] sm:$0xf]
      %v348 = vld [vmem:[%s304 + $0x68] sm:$0xf]
      %v349 = vld [vmem:[%s304 + $0x6c] sm:$0xf]
      %v350 = vld [vmem:[%s304 + $0x70] sm:$0xf]
      %v351 = vld [vmem:[%s304 + $0x74] sm:$0xf]
      %v352 = vld [vmem:[%s304 + $0x78] sm:$0xf]
      %v353 = vld [vmem:[%s304 + $0x7c] sm:$0xf]
      %v354 = vld [vmem:[%s310] sm:$0xf]
      %v355 = vld [vmem:[%s310 + $0x4] sm:$0xf]
      %v356 = vld [vmem:[%s310 + $0x8] sm:$0xf]
      %v357 = vld [vmem:[%s310 + $0xc] sm:$0xf]
      %v358 = vld [vmem:[%s310 + $0x10] sm:$0xf]
      %v359 = vld [vmem:[%s310 + $0x14] sm:$0xf]
      %v360 = vld [vmem:[%s310 + $0x18] sm:$0xf]
      %v361 = vld [vmem:[%s310 + $0x1c] sm:$0xf]
      %v362 = vld [vmem:[%s310 + $0x20] sm:$0xf]
      %v363 = vld [vmem:[%s310 + $0x24] sm:$0xf]
      %v364 = vld [vmem:[%s310 + $0x28] sm:$0xf]
      %v365 = vld [vmem:[%s310 + $0x2c] sm:$0xf]
      %v366 = vld [vmem:[%s310 + $0x30] sm:$0xf]
      %v367 = vld [vmem:[%s310 + $0x34] sm:$0xf]
      %v368 = vld [vmem:[%s310 + $0x38] sm:$0xf]
      %v369 = vld [vmem:[%s310 + $0x3c] sm:$0xf]
      %v370 = vld [vmem:[%s310 + $0x40] sm:$0xf]
      %v371 = vld [vmem:[%s310 + $0x44] sm:$0xf]
      %v372 = vld [vmem:[%s310 + $0x48] sm:$0xf]
      %v373 = vld [vmem:[%s310 + $0x4c] sm:$0xf]
      %v374 = vld [vmem:[%s310 + $0x50] sm:$0xf]
      %v375 = vld [vmem:[%s310 + $0x54] sm:$0xf]
      %v376 = vld [vmem:[%s310 + $0x58] sm:$0xf]
      %v377 = vld [vmem:[%s310 + $0x5c] sm:$0xf]
      %v378 = vld [vmem:[%s310 + $0x60] sm:$0xf]
      %v379 = vld [vmem:[%s310 + $0x64] sm:$0xf]
      %v380 = vld [vmem:[%s310 + $0x68] sm:$0xf]
      %v381 = vld [vmem:[%s310 + $0x6c] sm:$0xf]
      %v382 = vld [vmem:[%s310 + $0x70] sm:$0xf]
      %v383 = vld [vmem:[%s310 + $0x74] sm:$0xf]
      %v384 = vld [vmem:[%s310 + $0x78] sm:$0xf]
      %v385 = vld [vmem:[%s310 + $0x7c] sm:$0xf]
      %v418 = vunpack.c.l.b16 %v322
      %v419 = vunpack.c.l.b16 %v323
      %v420 = vunpack.c.l.b16 %v324
      %v421 = vunpack.c.l.b16 %v325
      %v422 = vunpack.c.l.b16 %v326
      %v423 = vunpack.c.l.b16 %v327
      %v424 = vunpack.c.l.b16 %v328
      %v425 = vunpack.c.l.b16 %v329
      %v426 = vunpack.c.l.b16 %v330
      %v427 = vunpack.c.l.b16 %v331
      %v428 = vunpack.c.l.b16 %v332
      %v429 = vunpack.c.l.b16 %v333
      %v430 = vunpack.c.l.b16 %v334
      %v431 = vunpack.c.l.b16 %v335
      %v432 = vunpack.c.l.b16 %v336
      %v433 = vunpack.c.l.b16 %v337
      %v434 = vunpack.c.l.b16 %v338
      %v435 = vunpack.c.l.b16 %v339
      %v436 = vunpack.c.l.b16 %v340
      %v437 = vunpack.c.l.b16 %v341
      %v438 = vunpack.c.l.b16 %v342
      %v439 = vunpack.c.l.b16 %v343
      %v440 = vunpack.c.l.b16 %v344
      %v441 = vunpack.c.l.b16 %v345
      %v442 = vunpack.c.l.b16 %v346
      %v443 = vunpack.c.l.b16 %v347
      %v444 = vunpack.c.l.b16 %v348
      %v445 = vunpack.c.l.b16 %v349
      %v446 = vunpack.c.l.b16 %v350
      %v447 = vunpack.c.l.b16 %v351
      %v448 = vunpack.c.l.b16 %v352
      %v449 = vunpack.c.l.b16 %v353
      %v450 = vpack.c.b16 %v419, %v418
      %v451 = vpack.c.b16 %v421, %v420
      %v452 = vpack.c.b16 %v423, %v422
      %v453 = vpack.c.b16 %v425, %v424
      %v454 = vpack.c.b16 %v427, %v426
      %v455 = vpack.c.b16 %v429, %v428
      %v456 = vpack.c.b16 %v431, %v430
      %v457 = vpack.c.b16 %v433, %v432
      %v458 = vpack.c.b16 %v435, %v434
      %v459 = vpack.c.b16 %v437, %v436
      %v460 = vpack.c.b16 %v439, %v438
      %v461 = vpack.c.b16 %v441, %v440
      %v462 = vpack.c.b16 %v443, %v442
      %v463 = vpack.c.b16 %v445, %v444
      %v464 = vpack.c.b16 %v447, %v446
      %v465 = vpack.c.b16 %v449, %v448
      %v498 = vunpack.c.l.b16 %v354
      %v499 = vunpack.c.l.b16 %v355
      %v500 = vunpack.c.l.b16 %v356
      %v501 = vunpack.c.l.b16 %v357
      %v502 = vunpack.c.l.b16 %v358
      %v503 = vunpack.c.l.b16 %v359
      %v504 = vunpack.c.l.b16 %v360
      %v505 = vunpack.c.l.b16 %v361
      %v506 = vunpack.c.l.b16 %v362
      %v507 = vunpack.c.l.b16 %v363
      %v508 = vunpack.c.l.b16 %v364
      %v509 = vunpack.c.l.b16 %v365
      %v510 = vunpack.c.l.b16 %v366
      %v511 = vunpack.c.l.b16 %v367
      %v512 = vunpack.c.l.b16 %v368
      %v513 = vunpack.c.l.b16 %v369
      %v514 = vunpack.c.l.b16 %v370
      %v515 = vunpack.c.l.b16 %v371
      %v516 = vunpack.c.l.b16 %v372
      %v517 = vunpack.c.l.b16 %v373
      %v518 = vunpack.c.l.b16 %v374
      %v519 = vunpack.c.l.b16 %v375
      %v520 = vunpack.c.l.b16 %v376
      %v521 = vunpack.c.l.b16 %v377
      %v522 = vunpack.c.l.b16 %v378
      %v523 = vunpack.c.l.b16 %v379
      %v524 = vunpack.c.l.b16 %v380
      %v525 = vunpack.c.l.b16 %v381
      %v526 = vunpack.c.l.b16 %v382
      %v527 = vunpack.c.l.b16 %v383
      %v528 = vunpack.c.l.b16 %v384
      %v529 = vunpack.c.l.b16 %v385
      %v530 = vpack.c.b16 %v499, %v498
      %v531 = vpack.c.b16 %v501, %v500
      %v532 = vpack.c.b16 %v503, %v502
      %v533 = vpack.c.b16 %v505, %v504
      %v534 = vpack.c.b16 %v507, %v506
      %v535 = vpack.c.b16 %v509, %v508
      %v536 = vpack.c.b16 %v511, %v510
      %v537 = vpack.c.b16 %v513, %v512
      %v538 = vpack.c.b16 %v515, %v514
      %v539 = vpack.c.b16 %v517, %v516
      %v540 = vpack.c.b16 %v519, %v518
      %v541 = vpack.c.b16 %v521, %v520
      %v542 = vpack.c.b16 %v523, %v522
      %v543 = vpack.c.b16 %v525, %v524
      %v544 = vpack.c.b16 %v527, %v526
      %v545 = vpack.c.b16 %v529, %v528
      %vm546 = vcmask 31744
      %v548 = vsel %vm546, %v450, 0
      %v551 = vsel %vm546, %v451, 0
      %v554 = vsel %vm546, %v452, 0
      %v557 = vsel %vm546, %v453, 0
      %v560 = vsel %vm546, %v454, 0
      %v563 = vsel %vm546, %v455, 0
      %v566 = vsel %vm546, %v456, 0
      %v569 = vsel %vm546, %v457, 0
      %v572 = vsel %vm546, %v458, 0
      %v575 = vsel %vm546, %v459, 0
      %v578 = vsel %vm546, %v460, 0
      %v581 = vsel %vm546, %v461, 0
      %v584 = vsel %vm546, %v462, 0
      %v587 = vsel %vm546, %v463, 0
      %v590 = vsel %vm546, %v464, 0
      %v593 = vsel %vm546, %v465, 0
      %v596 = vsel %vm546, %v530, 0
      %v599 = vsel %vm546, %v531, 0
      %v602 = vsel %vm546, %v532, 0
      %v605 = vsel %vm546, %v533, 0
      %v608 = vsel %vm546, %v534, 0
      %v611 = vsel %vm546, %v535, 0
      %v614 = vsel %vm546, %v536, 0
      %v617 = vsel %vm546, %v537, 0
      %v620 = vsel %vm546, %v538, 0
      %v623 = vsel %vm546, %v539, 0
      %v626 = vsel %vm546, %v540, 0
      %v629 = vsel %vm546, %v541, 0
      %v632 = vsel %vm546, %v542, 0
      %v635 = vsel %vm546, %v543, 0
      %v638 = vsel %vm546, %v544, 0
      %v641 = vsel %vm546, %v545, 0
      %643 = vmatprep.subr.bf16.mxu0 0
      %644 = vmatpush1.bf16.xpose.msra.mxu0 %v596
      %645 = vmatprep.subr.bf16.mxu0 0
      %646 = vmatpush1.bf16.xpose.msra.mxu0 %v599
      %647 = vmatprep.subr.bf16.mxu0 0
      %648 = vmatpush1.bf16.xpose.msra.mxu0 %v602
      %649 = vmatprep.subr.bf16.mxu0 0
      %650 = vmatpush1.bf16.xpose.msra.mxu0 %v605
      %651 = vmatprep.subr.bf16.mxu0 0
      %652 = vmatpush1.bf16.xpose.msra.mxu0 %v608
      %653 = vmatprep.subr.bf16.mxu0 0
      %654 = vmatpush1.bf16.xpose.msra.mxu0 %v611
      %655 = vmatprep.subr.bf16.mxu0 0
      %656 = vmatpush1.bf16.xpose.msra.mxu0 %v614
      %657 = vmatprep.subr.bf16.mxu0 0
      %658 = vmatpush1.bf16.xpose.msra.mxu0 %v617
      %659 = vmatprep.subr.bf16.mxu0 0
      %660 = vmatpush1.bf16.xpose.msra.mxu0 %v620
      %661 = vmatprep.subr.bf16.mxu0 0
      %662 = vmatpush1.bf16.xpose.msra.mxu0 %v623
      %663 = vmatprep.subr.bf16.mxu0 0
      %664 = vmatpush1.bf16.xpose.msra.mxu0 %v626
      %665 = vmatprep.subr.bf16.mxu0 0
      %666 = vmatpush1.bf16.xpose.msra.mxu0 %v629
      %667 = vmatprep.subr.bf16.mxu0 0
      %668 = vmatpush1.bf16.xpose.msra.mxu0 %v632
      %669 = vmatprep.subr.bf16.mxu0 0
      %670 = vmatpush1.bf16.xpose.msra.mxu0 %v635
      %671 = vmatprep.subr.bf16.mxu0 0
      %672 = vmatpush1.bf16.xpose.msra.mxu0 %v638
      %673 = vmatprep.subr.bf16.mxu0 0
      %674 = vmatpush1.bf16.xpose.msra.mxu0 %v641
      %675 = vmatprep.mubr.bf16.mxu0 0
      %676 = vmatmul.mubr.bf16.gmra.mrb[0].mxu0 %v548
      %v677 = vpop.f32.mrb[0].mxu0
      %v678 = vadd.f32 0.0, %v677
      %v679 = vpop.f32.mrb[0].mxu0
      %v680 = vadd.f32 0.0, %v679
      %v681 = vpop.f32.mrb[0].mxu0
      %v682 = vadd.f32 0.0, %v681
      %v683 = vpop.f32.mrb[0].mxu0
      %v684 = vadd.f32 0.0, %v683
      %685 = vmatprep.mubr.bf16.mxu0 0
      %686 = vmatmul.mubr.bf16.gmra.mrb[0].mxu0 %v551
      %v687 = vpop.f32.mrb[0].mxu0
      %v688 = vadd.f32 0.0, %v687
      %v689 = vpop.f32.mrb[0].mxu0
      %v690 = vadd.f32 0.0, %v689
      %v691 = vpop.f32.mrb[0].mxu0
      %v692 = vadd.f32 0.0, %v691
      %v693 = vpop.f32.mrb[0].mxu0
      %v694 = vadd.f32 0.0, %v693
      %695 = vmatprep.mubr.bf16.mxu0 0
      %696 = vmatmul.mubr.bf16.gmra.mrb[0].mxu0 %v554
      %v697 = vpop.f32.mrb[0].mxu0
      %v698 = vadd.f32 0.0, %v697
      %v699 = vpop.f32.mrb[0].mxu0
      %v700 = vadd.f32 0.0, %v699
      %v701 = vpop.f32.mrb[0].mxu0
      %v702 = vadd.f32 0.0, %v701
      %v703 = vpop.f32.mrb[0].mxu0
      %v704 = vadd.f32 0.0, %v703
      %705 = vmatprep.mubr.bf16.mxu0 0
      %706 = vmatmul.mubr.bf16.gmra.mrb[0].mxu0 %v557
      %v707 = vpop.f32.mrb[0].mxu0
      %v708 = vadd.f32 0.0, %v707
      %v709 = vpop.f32.mrb[0].mxu0
      %v710 = vadd.f32 0.0, %v709
      %v711 = vpop.f32.mrb[0].mxu0
      %v712 = vadd.f32 0.0, %v711
      %v713 = vpop.f32.mrb[0].mxu0
      %v714 = vadd.f32 0.0, %v713
      %715 = vmatprep.mubr.bf16.mxu0 0
      %716 = vmatmul.mubr.bf16.gmra.mrb[0].mxu0 %v560
      %v717 = vpop.f32.mrb[0].mxu0
      %v718 = vadd.f32 0.0, %v717
      %v719 = vpop.f32.mrb[0].mxu0
      %v720 = vadd.f32 0.0, %v719
      %v721 = vpop.f32.mrb[0].mxu0
      %v722 = vadd.f32 0.0, %v721
      %v723 = vpop.f32.mrb[0].mxu0
      %v724 = vadd.f32 0.0, %v723
      %725 = vmatprep.mubr.bf16.mxu0 0
      %726 = vmatmul.mubr.bf16.gmra.mrb[0].mxu0 %v563
      %v727 = vpop.f32.mrb[0].mxu0
      %v728 = vadd.f32 0.0, %v727
      %v729 = vpop.f32.mrb[0].mxu0
      %v730 = vadd.f32 0.0, %v729
      %v731 = vpop.f32.mrb[0].mxu0
      %v732 = vadd.f32 0.0, %v731
      %v733 = vpop.f32.mrb[0].mxu0
      %v734 = vadd.f32 0.0, %v733
      %735 = vmatprep.mubr.bf16.mxu0 0
      %736 = vmatmul.mubr.bf16.gmra.mrb[0].mxu0 %v566
      %v737 = vpop.f32.mrb[0].mxu0
      %v738 = vadd.f32 0.0, %v737
      %v739 = vpop.f32.mrb[0].mxu0
      %v740 = vadd.f32 0.0, %v739
      %v741 = vpop.f32.mrb[0].mxu0
      %v742 = vadd.f32 0.0, %v741
      %v743 = vpop.f32.mrb[0].mxu0
      %v744 = vadd.f32 0.0, %v743
      %745 = vmatprep.mubr.bf16.mxu0 0
      %746 = vmatmul.mubr.bf16.gmra.mrb[0].mxu0 %v569
      %v747 = vpop.f32.mrb[0].mxu0
      %v748 = vadd.f32 0.0, %v747
      %v749 = vpop.f32.mrb[0].mxu0
      %v750 = vadd.f32 0.0, %v749
      %v751 = vpop.f32.mrb[0].mxu0
      %v752 = vadd.f32 0.0, %v751
      %v753 = vpop.f32.mrb[0].mxu0
      %v754 = vadd.f32 0.0, %v753
      %755 = vmatprep.mubr.bf16.mxu0 0
      %756 = vmatmul.mubr.bf16.gmra.mrb[0].mxu0 %v572
      %v757 = vpop.f32.mrb[0].mxu0
      %v758 = vadd.f32 0.0, %v757
      %v759 = vpop.f32.mrb[0].mxu0
      %v760 = vadd.f32 0.0, %v759
      %v761 = vpop.f32.mrb[0].mxu0
      %v762 = vadd.f32 0.0, %v761
      %v763 = vpop.f32.mrb[0].mxu0
      %v764 = vadd.f32 0.0, %v763
      %765 = vmatprep.mubr.bf16.mxu0 0
      %766 = vmatmul.mubr.bf16.gmra.mrb[0].mxu0 %v575
      %v767 = vpop.f32.mrb[0].mxu0
      %v768 = vadd.f32 0.0, %v767
      %v769 = vpop.f32.mrb[0].mxu0
      %v770 = vadd.f32 0.0, %v769
      %v771 = vpop.f32.mrb[0].mxu0
      %v772 = vadd.f32 0.0, %v771
      %v773 = vpop.f32.mrb[0].mxu0
      %v774 = vadd.f32 0.0, %v773
      %775 = vmatprep.mubr.bf16.mxu0 0
      %776 = vmatmul.mubr.bf16.gmra.mrb[0].mxu0 %v578
      %v777 = vpop.f32.mrb[0].mxu0
      %v778 = vadd.f32 0.0, %v777
      %v779 = vpop.f32.mrb[0].mxu0
      %v780 = vadd.f32 0.0, %v779
      %v781 = vpop.f32.mrb[0].mxu0
      %v782 = vadd.f32 0.0, %v781
      %v783 = vpop.f32.mrb[0].mxu0
      %v784 = vadd.f32 0.0, %v783
      %785 = vmatprep.mubr.bf16.mxu0 0
      %786 = vmatmul.mubr.bf16.gmra.mrb[0].mxu0 %v581
      %v787 = vpop.f32.mrb[0].mxu0
      %v788 = vadd.f32 0.0, %v787
      %v789 = vpop.f32.mrb[0].mxu0
      %v790 = vadd.f32 0.0, %v789
      %v791 = vpop.f32.mrb[0].mxu0
      %v792 = vadd.f32 0.0, %v791
      %v793 = vpop.f32.mrb[0].mxu0
      %v794 = vadd.f32 0.0, %v793
      %795 = vmatprep.mubr.bf16.mxu0 0
      %796 = vmatmul.mubr.bf16.gmra.mrb[0].mxu0 %v584
      %v797 = vpop.f32.mrb[0].mxu0
      %v798 = vadd.f32 0.0, %v797
      %v799 = vpop.f32.mrb[0].mxu0
      %v800 = vadd.f32 0.0, %v799
      %v801 = vpop.f32.mrb[0].mxu0
      %v802 = vadd.f32 0.0, %v801
      %v803 = vpop.f32.mrb[0].mxu0
      %v804 = vadd.f32 0.0, %v803
      %805 = vmatprep.mubr.bf16.mxu0 0
      %806 = vmatmul.mubr.bf16.gmra.mrb[0].mxu0 %v587
      %v807 = vpop.f32.mrb[0].mxu0
      %v808 = vadd.f32 0.0, %v807
      %v809 = vpop.f32.mrb[0].mxu0
      %v810 = vadd.f32 0.0, %v809
      %v811 = vpop.f32.mrb[0].mxu0
      %v812 = vadd.f32 0.0, %v811
      %v813 = vpop.f32.mrb[0].mxu0
      %v814 = vadd.f32 0.0, %v813
      %815 = vmatprep.mubr.bf16.mxu0 0
      %816 = vmatmul.mubr.bf16.gmra.mrb[0].mxu0 %v590
      %v817 = vpop.f32.mrb[0].mxu0
      %v818 = vadd.f32 0.0, %v817
      %v819 = vpop.f32.mrb[0].mxu0
      %v820 = vadd.f32 0.0, %v819
      %v821 = vpop.f32.mrb[0].mxu0
      %v822 = vadd.f32 0.0, %v821
      %v823 = vpop.f32.mrb[0].mxu0
      %v824 = vadd.f32 0.0, %v823
      %825 = vmatprep.mubr.bf16.mxu0 0
      %826 = vmatmul.mubr.bf16.gmra.mrb[0].mxu0 %v593
      %v827 = vpop.f32.mrb[0].mxu0
      %v828 = vadd.f32 0.0, %v827
      %v829 = vpop.f32.mrb[0].mxu0
      %v830 = vadd.f32 0.0, %v829
      %v831 = vpop.f32.mrb[0].mxu0
      %v832 = vadd.f32 0.0, %v831
      %v833 = vpop.f32.mrb[0].mxu0
      %v834 = vadd.f32 0.0, %v833
      %835 = vdwg.mxu0
      %v836 = vmax.f32 %v678, %v680
      %837 = vmax.xlane.f32.xlu0 %v836
      %v838 = vpop.xlane.xlu0 %837
      %v839 = vmax.f32 %v682, %v684
      %840 = vmax.xlane.f32.xlu0 %v839
      %v841 = vpop.xlane.xlu0 %840
      %v842 = vmax.f32 %v688, %v690
      %843 = vmax.xlane.f32.xlu0 %v842
      %v844 = vpop.xlane.xlu0 %843
      %v845 = vmax.f32 %v692, %v694
      %846 = vmax.xlane.f32.xlu0 %v845
      %v847 = vpop.xlane.xlu0 %846
      %v848 = vmax.f32 %v698, %v700
      %849 = vmax.xlane.f32.xlu0 %v848
      %v850 = vpop.xlane.xlu0 %849
      %v851 = vmax.f32 %v702, %v704
      %852 = vmax.xlane.f32.xlu0 %v851
      %v853 = vpop.xlane.xlu0 %852
      %v854 = vmax.f32 %v708, %v710
      %855 = vmax.xlane.f32.xlu0 %v854
      %v856 = vpop.xlane.xlu0 %855
      %v857 = vmax.f32 %v712, %v714
      %858 = vmax.xlane.f32.xlu0 %v857
      %v859 = vpop.xlane.xlu0 %858
      %v860 = vmax.f32 %v718, %v720
      %861 = vmax.xlane.f32.xlu0 %v860
      %v862 = vpop.xlane.xlu0 %861
      %v863 = vmax.f32 %v722, %v724
      %864 = vmax.xlane.f32.xlu0 %v863
      %v865 = vpop.xlane.xlu0 %864
      %v866 = vmax.f32 %v728, %v730
      %867 = vmax.xlane.f32.xlu0 %v866
      %v868 = vpop.xlane.xlu0 %867
      %v869 = vmax.f32 %v732, %v734
      %870 = vmax.xlane.f32.xlu0 %v869
      %v871 = vpop.xlane.xlu0 %870
      %v872 = vmax.f32 %v738, %v740
      %873 = vmax.xlane.f32.xlu0 %v872
      %v874 = vpop.xlane.xlu0 %873
      %v875 = vmax.f32 %v742, %v744
      %876 = vmax.xlane.f32.xlu0 %v875
      %v877 = vpop.xlane.xlu0 %876
      %v878 = vmax.f32 %v748, %v750
      %879 = vmax.xlane.f32.xlu0 %v878
      %v880 = vpop.xlane.xlu0 %879
      %v881 = vmax.f32 %v752, %v754
      %882 = vmax.xlane.f32.xlu0 %v881
      %v883 = vpop.xlane.xlu0 %882
      %v884 = vmax.f32 %v758, %v760
      %885 = vmax.xlane.f32.xlu0 %v884
      %v886 = vpop.xlane.xlu0 %885
      %v887 = vmax.f32 %v762, %v764
      %888 = vmax.xlane.f32.xlu0 %v887
      %v889 = vpop.xlane.xlu0 %888
      %v890 = vmax.f32 %v768, %v770
      %891 = vmax.xlane.f32.xlu0 %v890
      %v892 = vpop.xlane.xlu0 %891
      %v893 = vmax.f32 %v772, %v774
      %894 = vmax.xlane.f32.xlu0 %v893
      %v895 = vpop.xlane.xlu0 %894
      %v896 = vmax.f32 %v778, %v780
      %897 = vmax.xlane.f32.xlu0 %v896
      %v898 = vpop.xlane.xlu0 %897
      %v899 = vmax.f32 %v782, %v784
      %900 = vmax.xlane.f32.xlu0 %v899
      %v901 = vpop.xlane.xlu0 %900
      %v902 = vmax.f32 %v788, %v790
      %903 = vmax.xlane.f32.xlu0 %v902
      %v904 = vpop.xlane.xlu0 %903
      %v905 = vmax.f32 %v792, %v794
      %906 = vmax.xlane.f32.xlu0 %v905
      %v907 = vpop.xlane.xlu0 %906
      %v908 = vmax.f32 %v798, %v800
      %909 = vmax.xlane.f32.xlu0 %v908
      %v910 = vpop.xlane.xlu0 %909
      %v911 = vmax.f32 %v802, %v804
      %912 = vmax.xlane.f32.xlu0 %v911
      %v913 = vpop.xlane.xlu0 %912
      %v914 = vmax.f32 %v808, %v810
      %915 = vmax.xlane.f32.xlu0 %v914
      %v916 = vpop.xlane.xlu0 %915
      %v917 = vmax.f32 %v812, %v814
      %918 = vmax.xlane.f32.xlu0 %v917
      %v919 = vpop.xlane.xlu0 %918
      %v920 = vmax.f32 %v818, %v820
      %921 = vmax.xlane.f32.xlu0 %v920
      %v922 = vpop.xlane.xlu0 %921
      %v923 = vmax.f32 %v822, %v824
      %924 = vmax.xlane.f32.xlu0 %v923
      %v925 = vpop.xlane.xlu0 %924
      %v926 = vmax.f32 %v828, %v830
      %927 = vmax.xlane.f32.xlu0 %v926
      %v928 = vpop.xlane.xlu0 %927
      %v929 = vmax.f32 %v832, %v834
      %930 = vmax.xlane.f32.xlu0 %v929
      %v931 = vpop.xlane.xlu0 %930
      %v932 = vsub.f32 %v678, %v838
      %v933 = vsub.f32 %v680, %v838
      %v934 = vsub.f32 %v682, %v841
      %v935 = vsub.f32 %v684, %v841
      %v936 = vsub.f32 %v688, %v844
      %v937 = vsub.f32 %v690, %v844
      %v938 = vsub.f32 %v692, %v847
      %v939 = vsub.f32 %v694, %v847
      %v940 = vsub.f32 %v698, %v850
      %v941 = vsub.f32 %v700, %v850
      %v942 = vsub.f32 %v702, %v853
      %v943 = vsub.f32 %v704, %v853
      %v944 = vsub.f32 %v708, %v856
      %v945 = vsub.f32 %v710, %v856
      %v946 = vsub.f32 %v712, %v859
      %v947 = vsub.f32 %v714, %v859
      %v948 = vsub.f32 %v718, %v862
      %v949 = vsub.f32 %v720, %v862
      %v950 = vsub.f32 %v722, %v865
      %v951 = vsub.f32 %v724, %v865
      %v952 = vsub.f32 %v728, %v868
      %v953 = vsub.f32 %v730, %v868
      %v954 = vsub.f32 %v732, %v871
      %v955 = vsub.f32 %v734, %v871
      %v956 = vsub.f32 %v738, %v874
      %v957 = vsub.f32 %v740, %v874
      %v958 = vsub.f32 %v742, %v877
      %v959 = vsub.f32 %v744, %v877
      %v960 = vsub.f32 %v748, %v880
      %v961 = vsub.f32 %v750, %v880
      %v962 = vsub.f32 %v752, %v883
      %v963 = vsub.f32 %v754, %v883
      %v964 = vsub.f32 %v758, %v886
      %v965 = vsub.f32 %v760, %v886
      %v966 = vsub.f32 %v762, %v889
      %v967 = vsub.f32 %v764, %v889
      %v968 = vsub.f32 %v768, %v892
      %v969 = vsub.f32 %v770, %v892
      %v970 = vsub.f32 %v772, %v895
      %v971 = vsub.f32 %v774, %v895
      %v972 = vsub.f32 %v778, %v898
      %v973 = vsub.f32 %v780, %v898
      %v974 = vsub.f32 %v782, %v901
      %v975 = vsub.f32 %v784, %v901
      %v976 = vsub.f32 %v788, %v904
      %v977 = vsub.f32 %v790, %v904
      %v978 = vsub.f32 %v792, %v907
      %v979 = vsub.f32 %v794, %v907
      %v980 = vsub.f32 %v798, %v910
      %v981 = vsub.f32 %v800, %v910
      %v982 = vsub.f32 %v802, %v913
      %v983 = vsub.f32 %v804, %v913
      %v984 = vsub.f32 %v808, %v916
      %v985 = vsub.f32 %v810, %v916
      %v986 = vsub.f32 %v812, %v919
      %v987 = vsub.f32 %v814, %v919
      %v988 = vsub.f32 %v818, %v922
      %v989 = vsub.f32 %v820, %v922
      %v990 = vsub.f32 %v822, %v925
      %v991 = vsub.f32 %v824, %v925
      %v992 = vsub.f32 %v828, %v928
      %v993 = vsub.f32 %v830, %v928
      %v994 = vsub.f32 %v832, %v931
      %v995 = vsub.f32 %v834, %v931
      %v996 = vmul.f32 %v932, 1.442695
      %v997 = vpow.pop %v996
      %v998 = vmul.f32 %v933, 1.442695
      %v999 = vpow.pop %v998
      %v1000 = vmul.f32 %v934, 1.442695
      %v1001 = vpow.pop %v1000
      %v1002 = vmul.f32 %v935, 1.442695
      %v1003 = vpow.pop %v1002
      %v1004 = vmul.f32 %v936, 1.442695
      %v1005 = vpow.pop %v1004
      %v1006 = vmul.f32 %v937, 1.442695
      %v1007 = vpow.pop %v1006
      %v1008 = vmul.f32 %v938, 1.442695
      %v1009 = vpow.pop %v1008
      %v1010 = vmul.f32 %v939, 1.442695
      %v1011 = vpow.pop %v1010
      %v1012 = vmul.f32 %v940, 1.442695
      %v1013 = vpow.pop %v1012
      %v1014 = vmul.f32 %v941, 1.442695
      %v1015 = vpow.pop %v1014
      %v1016 = vmul.f32 %v942, 1.442695
      %v1017 = vpow.pop %v1016
      %v1018 = vmul.f32 %v943, 1.442695
      %v1019 = vpow.pop %v1018
      %v1020 = vmul.f32 %v944, 1.442695
      %v1021 = vpow.pop %v1020
      %v1022 = vmul.f32 %v945, 1.442695
      %v1023 = vpow.pop %v1022
      %v1024 = vmul.f32 %v946, 1.442695
      %v1025 = vpow.pop %v1024
      %v1026 = vmul.f32 %v947, 1.442695
      %v1027 = vpow.pop %v1026
      %v1028 = vmul.f32 %v948, 1.442695
      %v1029 = vpow.pop %v1028
      %v1030 = vmul.f32 %v949, 1.442695
      %v1031 = vpow.pop %v1030
      %v1032 = vmul.f32 %v950, 1.442695
      %v1033 = vpow.pop %v1032
      %v1034 = vmul.f32 %v951, 1.442695
      %v1035 = vpow.pop %v1034
      %v1036 = vmul.f32 %v952, 1.442695
      %v1037 = vpow.pop %v1036
      %v1038 = vmul.f32 %v953, 1.442695
      %v1039 = vpow.pop %v1038
      %v1040 = vmul.f32 %v954, 1.442695
      %v1041 = vpow.pop %v1040
      %v1042 = vmul.f32 %v955, 1.442695
      %v1043 = vpow.pop %v1042
      %v1044 = vmul.f32 %v956, 1.442695
      %v1045 = vpow.pop %v1044
      %v1046 = vmul.f32 %v957, 1.442695
      %v1047 = vpow.pop %v1046
      %v1048 = vmul.f32 %v958, 1.442695
      %v1049 = vpow.pop %v1048
      %v1050 = vmul.f32 %v959, 1.442695
      %v1051 = vpow.pop %v1050
      %v1052 = vmul.f32 %v960, 1.442695
      %v1053 = vpow.pop %v1052
      %v1054 = vmul.f32 %v961, 1.442695
      %v1055 = vpow.pop %v1054
      %v1056 = vmul.f32 %v962, 1.442695
      %v1057 = vpow.pop %v1056
      %v1058 = vmul.f32 %v963, 1.442695
      %v1059 = vpow.pop %v1058
      %v1060 = vmul.f32 %v964, 1.442695
      %v1061 = vpow.pop %v1060
      %v1062 = vmul.f32 %v965, 1.442695
      %v1063 = vpow.pop %v1062
      %v1064 = vmul.f32 %v966, 1.442695
      %v1065 = vpow.pop %v1064
      %v1066 = vmul.f32 %v967, 1.442695
      %v1067 = vpow.pop %v1066
      %v1068 = vmul.f32 %v968, 1.442695
      %v1069 = vpow.pop %v1068
      %v1070 = vmul.f32 %v969, 1.442695
      %v1071 = vpow.pop %v1070
      %v1072 = vmul.f32 %v970, 1.442695
      %v1073 = vpow.pop %v1072
      %v1074 = vmul.f32 %v971, 1.442695
      %v1075 = vpow.pop %v1074
      %v1076 = vmul.f32 %v972, 1.442695
      %v1077 = vpow.pop %v1076
      %v1078 = vmul.f32 %v973, 1.442695
      %v1079 = vpow.pop %v1078
      %v1080 = vmul.f32 %v974, 1.442695
      %v1081 = vpow.pop %v1080
      %v1082 = vmul.f32 %v975, 1.442695
      %v1083 = vpow.pop %v1082
      %v1084 = vmul.f32 %v976, 1.442695
      %v1085 = vpow.pop %v1084
      %v1086 = vmul.f32 %v977, 1.442695
      %v1087 = vpow.pop %v1086
      %v1088 = vmul.f32 %v978, 1.442695
      %v1089 = vpow.pop %v1088
      %v1090 = vmul.f32 %v979, 1.442695
      %v1091 = vpow.pop %v1090
      %v1092 = vmul.f32 %v980, 1.442695
      %v1093 = vpow.pop %v1092
      %v1094 = vmul.f32 %v981, 1.442695
      %v1095 = vpow.pop %v1094
      %v1096 = vmul.f32 %v982, 1.442695
      %v1097 = vpow.pop %v1096
      %v1098 = vmul.f32 %v983, 1.442695
      %v1099 = vpow.pop %v1098
      %v1100 = vmul.f32 %v984, 1.442695
      %v1101 = vpow.pop %v1100
      %v1102 = vmul.f32 %v985, 1.442695
      %v1103 = vpow.pop %v1102
      %v1104 = vmul.f32 %v986, 1.442695
      %v1105 = vpow.pop %v1104
      %v1106 = vmul.f32 %v987, 1.442695
      %v1107 = vpow.pop %v1106
      %v1108 = vmul.f32 %v988, 1.442695
      %v1109 = vpow.pop %v1108
      %v1110 = vmul.f32 %v989, 1.442695
      %v1111 = vpow.pop %v1110
      %v1112 = vmul.f32 %v990, 1.442695
      %v1113 = vpow.pop %v1112
      %v1114 = vmul.f32 %v991, 1.442695
      %v1115 = vpow.pop %v1114
      %v1116 = vmul.f32 %v992, 1.442695
      %v1117 = vpow.pop %v1116
      %v1118 = vmul.f32 %v993, 1.442695
      %v1119 = vpow.pop %v1118
      %v1120 = vmul.f32 %v994, 1.442695
      %v1121 = vpow.pop %v1120
      %v1122 = vmul.f32 %v995, 1.442695
      %v1123 = vpow.pop %v1122
      %v1124 = vadd.f32 %v997, %v999
      %1125 = vadd.xlane.f32.xlu0 %v1124
      %v1126 = vpop.xlane.xlu0 %1125
      %v1127 = vadd.f32 %v1001, %v1003
      %1128 = vadd.xlane.f32.xlu0 %v1127
      %v1129 = vpop.xlane.xlu0 %1128
      %v1130 = vadd.f32 %v1005, %v1007
      %1131 = vadd.xlane.f32.xlu0 %v1130
      %v1132 = vpop.xlane.xlu0 %1131
      %v1133 = vadd.f32 %v1009, %v1011
      %1134 = vadd.xlane.f32.xlu0 %v1133
      %v1135 = vpop.xlane.xlu0 %1134
      %v1136 = vadd.f32 %v1013, %v1015
      %1137 = vadd.xlane.f32.xlu0 %v1136
      %v1138 = vpop.xlane.xlu0 %1137
      %v1139 = vadd.f32 %v1017, %v1019
      %1140 = vadd.xlane.f32.xlu0 %v1139
      %v1141 = vpop.xlane.xlu0 %1140
      %v1142 = vadd.f32 %v1021, %v1023
      %1143 = vadd.xlane.f32.xlu0 %v1142
      %v1144 = vpop.xlane.xlu0 %1143
      %v1145 = vadd.f32 %v1025, %v1027
      %1146 = vadd.xlane.f32.xlu0 %v1145
      %v1147 = vpop.xlane.xlu0 %1146
      %v1148 = vadd.f32 %v1029, %v1031
      %1149 = vadd.xlane.f32.xlu0 %v1148
      %v1150 = vpop.xlane.xlu0 %1149
      %v1151 = vadd.f32 %v1033, %v1035
      %1152 = vadd.xlane.f32.xlu0 %v1151
      %v1153 = vpop.xlane.xlu0 %1152
      %v1154 = vadd.f32 %v1037, %v1039
      %1155 = vadd.xlane.f32.xlu0 %v1154
      %v1156 = vpop.xlane.xlu0 %1155
      %v1157 = vadd.f32 %v1041, %v1043
      %1158 = vadd.xlane.f32.xlu0 %v1157
      %v1159 = vpop.xlane.xlu0 %1158
      %v1160 = vadd.f32 %v1045, %v1047
      %1161 = vadd.xlane.f32.xlu0 %v1160
      %v1162 = vpop.xlane.xlu0 %1161
      %v1163 = vadd.f32 %v1049, %v1051
      %1164 = vadd.xlane.f32.xlu0 %v1163
      %v1165 = vpop.xlane.xlu0 %1164
      %v1166 = vadd.f32 %v1053, %v1055
      %1167 = vadd.xlane.f32.xlu0 %v1166
      %v1168 = vpop.xlane.xlu0 %1167
      %v1169 = vadd.f32 %v1057, %v1059
      %1170 = vadd.xlane.f32.xlu0 %v1169
      %v1171 = vpop.xlane.xlu0 %1170
      %v1172 = vadd.f32 %v1061, %v1063
      %1173 = vadd.xlane.f32.xlu0 %v1172
      %v1174 = vpop.xlane.xlu0 %1173
      %v1175 = vadd.f32 %v1065, %v1067
      %1176 = vadd.xlane.f32.xlu0 %v1175
      %v1177 = vpop.xlane.xlu0 %1176
      %v1178 = vadd.f32 %v1069, %v1071
      %1179 = vadd.xlane.f32.xlu0 %v1178
      %v1180 = vpop.xlane.xlu0 %1179
      %v1181 = vadd.f32 %v1073, %v1075
      %1182 = vadd.xlane.f32.xlu0 %v1181
      %v1183 = vpop.xlane.xlu0 %1182
      %v1184 = vadd.f32 %v1077, %v1079
      %1185 = vadd.xlane.f32.xlu0 %v1184
      %v1186 = vpop.xlane.xlu0 %1185
      %v1187 = vadd.f32 %v1081, %v1083
      %1188 = vadd.xlane.f32.xlu0 %v1187
      %v1189 = vpop.xlane.xlu0 %1188
      %v1190 = vadd.f32 %v1085, %v1087
      %1191 = vadd.xlane.f32.xlu0 %v1190
      %v1192 = vpop.xlane.xlu0 %1191
      %v1193 = vadd.f32 %v1089, %v1091
      %1194 = vadd.xlane.f32.xlu0 %v1193
      %v1195 = vpop.xlane.xlu0 %1194
      %v1196 = vadd.f32 %v1093, %v1095
      %1197 = vadd.xlane.f32.xlu0 %v1196
      %v1198 = vpop.xlane.xlu0 %1197
      %v1199 = vadd.f32 %v1097, %v1099
      %1200 = vadd.xlane.f32.xlu0 %v1199
      %v1201 = vpop.xlane.xlu0 %1200
      %v1202 = vadd.f32 %v1101, %v1103
      %1203 = vadd.xlane.f32.xlu0 %v1202
      %v1204 = vpop.xlane.xlu0 %1203
      %v1205 = vadd.f32 %v1105, %v1107
      %1206 = vadd.xlane.f32.xlu0 %v1205
      %v1207 = vpop.xlane.xlu0 %1206
      %v1208 = vadd.f32 %v1109, %v1111
      %1209 = vadd.xlane.f32.xlu0 %v1208
      %v1210 = vpop.xlane.xlu0 %1209
      %v1211 = vadd.f32 %v1113, %v1115
      %1212 = vadd.xlane.f32.xlu0 %v1211
      %v1213 = vpop.xlane.xlu0 %1212
      %v1214 = vadd.f32 %v1117, %v1119
      %1215 = vadd.xlane.f32.xlu0 %v1214
      %v1216 = vpop.xlane.xlu0 %1215
      %v1217 = vadd.f32 %v1121, %v1123
      %1218 = vadd.xlane.f32.xlu0 %v1217
      %v1219 = vpop.xlane.xlu0 %1218
      %v1220 = vpack.c.bf16 %v1001, %v997
      %v1221 = vpack.c.bf16 %v1003, %v999
      %v1222 = vpack.c.bf16 %v1009, %v1005
      %v1223 = vpack.c.bf16 %v1011, %v1007
      %v1224 = vpack.c.bf16 %v1017, %v1013
      %v1225 = vpack.c.bf16 %v1019, %v1015
      %v1226 = vpack.c.bf16 %v1025, %v1021
      %v1227 = vpack.c.bf16 %v1027, %v1023
      %v1228 = vpack.c.bf16 %v1033, %v1029
      %v1229 = vpack.c.bf16 %v1035, %v1031
      %v1230 = vpack.c.bf16 %v1041, %v1037
      %v1231 = vpack.c.bf16 %v1043, %v1039
      %v1232 = vpack.c.bf16 %v1049, %v1045
      %v1233 = vpack.c.bf16 %v1051, %v1047
      %v1234 = vpack.c.bf16 %v1057, %v1053
      %v1235 = vpack.c.bf16 %v1059, %v1055
      %v1236 = vpack.c.bf16 %v1065, %v1061
      %v1237 = vpack.c.bf16 %v1067, %v1063
      %v1238 = vpack.c.bf16 %v1073, %v1069
      %v1239 = vpack.c.bf16 %v1075, %v1071
      %v1240 = vpack.c.bf16 %v1081, %v1077
      %v1241 = vpack.c.bf16 %v1083, %v1079
      %v1242 = vpack.c.bf16 %v1089, %v1085
      %v1243 = vpack.c.bf16 %v1091, %v1087
      %v1244 = vpack.c.bf16 %v1097, %v1093
      %v1245 = vpack.c.bf16 %v1099, %v1095
      %v1246 = vpack.c.bf16 %v1105, %v1101
      %v1247 = vpack.c.bf16 %v1107, %v1103
      %v1248 = vpack.c.bf16 %v1113, %v1109
      %v1249 = vpack.c.bf16 %v1115, %v1111
      %v1250 = vpack.c.bf16 %v1121, %v1117
      %v1251 = vpack.c.bf16 %v1123, %v1119
      %1252 = vrot.lane.b32.xlu0 %v530, 124
      %v1253 = vpop.permute.xlu0 %1252
      %1254 = vrot.lane.b32.xlu0 %v531, 124
      %v1255 = vpop.permute.xlu0 %1254
      %1256 = vrot.lane.b32.xlu0 %v532, 124
      %v1257 = vpop.permute.xlu0 %1256
      %1258 = vrot.lane.b32.xlu0 %v533, 124
      %v1259 = vpop.permute.xlu0 %1258
      %1260 = vrot.lane.b32.xlu0 %v534, 124
      %v1261 = vpop.permute.xlu0 %1260
      %1262 = vrot.lane.b32.xlu0 %v535, 124
      %v1263 = vpop.permute.xlu0 %1262
      %1264 = vrot.lane.b32.xlu0 %v536, 124
      %v1265 = vpop.permute.xlu0 %1264
      %1266 = vrot.lane.b32.xlu0 %v537, 124
      %v1267 = vpop.permute.xlu0 %1266
      %1268 = vrot.lane.b32.xlu0 %v538, 124
      %v1269 = vpop.permute.xlu0 %1268
      %1270 = vrot.lane.b32.xlu0 %v539, 124
      %v1271 = vpop.permute.xlu0 %1270
      %1272 = vrot.lane.b32.xlu0 %v540, 124
      %v1273 = vpop.permute.xlu0 %1272
      %1274 = vrot.lane.b32.xlu0 %v541, 124
      %v1275 = vpop.permute.xlu0 %1274
      %1276 = vrot.lane.b32.xlu0 %v542, 124
      %v1277 = vpop.permute.xlu0 %1276
      %1278 = vrot.lane.b32.xlu0 %v543, 124
      %v1279 = vpop.permute.xlu0 %1278
      %1280 = vrot.lane.b32.xlu0 %v544, 124
      %v1281 = vpop.permute.xlu0 %1280
      %1282 = vrot.lane.b32.xlu0 %v545, 124
      %v1283 = vpop.permute.xlu0 %1282
      %1300 = vmatprep.subr.bf16.mxu0 0
      %1301 = vmatpush1.bf16.msra.mxu0 %v1253
      %1302 = vmatprep.subr.bf16.mxu0 0
      %1303 = vmatpush1.bf16.msra.mxu0 %v1255
      %1304 = vmatprep.subr.bf16.mxu0 0
      %1305 = vmatpush1.bf16.msra.mxu0 %v1257
      %1306 = vmatprep.subr.bf16.mxu0 0
      %1307 = vmatpush1.bf16.msra.mxu0 %v1259
      %1308 = vmatprep.subr.bf16.mxu0 0
      %1309 = vmatpush1.bf16.msra.mxu0 %v1261
      %1310 = vmatprep.subr.bf16.mxu0 0
      %1311 = vmatpush1.bf16.msra.mxu0 %v1263
      %1312 = vmatprep.subr.bf16.mxu0 0
      %1313 = vmatpush1.bf16.msra.mxu0 %v1265
      %1314 = vmatprep.subr.bf16.mxu0 0
      %1315 = vmatpush1.bf16.msra.mxu0 %v1267
      %1316 = vmatprep.subr.bf16.mxu0 0
      %1317 = vmatpush1.bf16.msra.mxu0 %v1269
      %1318 = vmatprep.subr.bf16.mxu0 0
      %1319 = vmatpush1.bf16.msra.mxu0 %v1271
      %1320 = vmatprep.subr.bf16.mxu0 0
      %1321 = vmatpush1.bf16.msra.mxu0 %v1273
      %1322 = vmatprep.subr.bf16.mxu0 0
      %1323 = vmatpush1.bf16.msra.mxu0 %v1275
      %1324 = vmatprep.subr.bf16.mxu0 0
      %1325 = vmatpush1.bf16.msra.mxu0 %v1277
      %1326 = vmatprep.subr.bf16.mxu0 0
      %1327 = vmatpush1.bf16.msra.mxu0 %v1279
      %1328 = vmatprep.subr.bf16.mxu0 0
      %1329 = vmatpush1.bf16.msra.mxu0 %v1281
      %1330 = vmatprep.subr.bf16.mxu0 0
      %1331 = vmatpush1.bf16.msra.mxu0 %v1283
      %1332 = vmatprep.mubr.bf16.mxu0 %v1221
      %1333 = vmatmul.mubr.bf16.gmra.mrb[0].mxu0 %v1220
      %v1334 = vpop.f32.mrb[0].mxu0
      %v1335 = vadd.f32 0.0, %v1334
      %v1336 = vpop.f32.mrb[0].mxu0
      %v1337 = vpop.f32.mrb[0].mxu0
      %v1338 = vadd.f32 0.0, %v1337
      %v1339 = vpop.f32.mrb[0].mxu0
      %1340 = vmatprep.mubr.bf16.mxu0 %v1223
      %1341 = vmatmul.mubr.bf16.gmra.mrb[0].mxu0 %v1222
      %v1342 = vpop.f32.mrb[0].mxu0
      %v1343 = vadd.f32 0.0, %v1342
      %v1344 = vpop.f32.mrb[0].mxu0
      %v1345 = vpop.f32.mrb[0].mxu0
      %v1346 = vadd.f32 0.0, %v1345
      %v1347 = vpop.f32.mrb[0].mxu0
      %1348 = vmatprep.mubr.bf16.mxu0 %v1225
      %1349 = vmatmul.mubr.bf16.gmra.mrb[0].mxu0 %v1224
      %v1350 = vpop.f32.mrb[0].mxu0
      %v1351 = vadd.f32 0.0, %v1350
      %v1352 = vpop.f32.mrb[0].mxu0
      %v1353 = vpop.f32.mrb[0].mxu0
      %v1354 = vadd.f32 0.0, %v1353
      %v1355 = vpop.f32.mrb[0].mxu0
      %1356 = vmatprep.mubr.bf16.mxu0 %v1227
      %1357 = vmatmul.mubr.bf16.gmra.mrb[0].mxu0 %v1226
      %v1358 = vpop.f32.mrb[0].mxu0
      %v1359 = vadd.f32 0.0, %v1358
      %v1360 = vpop.f32.mrb[0].mxu0
      %v1361 = vpop.f32.mrb[0].mxu0
      %v1362 = vadd.f32 0.0, %v1361
      %v1363 = vpop.f32.mrb[0].mxu0
      %1364 = vmatprep.mubr.bf16.mxu0 %v1229
      %1365 = vmatmul.mubr.bf16.gmra.mrb[0].mxu0 %v1228
      %v1366 = vpop.f32.mrb[0].mxu0
      %v1367 = vadd.f32 0.0, %v1366
      %v1368 = vpop.f32.mrb[0].mxu0
      %v1369 = vpop.f32.mrb[0].mxu0
      %v1370 = vadd.f32 0.0, %v1369
      %v1371 = vpop.f32.mrb[0].mxu0
      %1372 = vmatprep.mubr.bf16.mxu0 %v1231
      %1373 = vmatmul.mubr.bf16.gmra.mrb[0].mxu0 %v1230
      %v1374 = vpop.f32.mrb[0].mxu0
      %v1375 = vadd.f32 0.0, %v1374
      %v1376 = vpop.f32.mrb[0].mxu0
      %v1377 = vpop.f32.mrb[0].mxu0
      %v1378 = vadd.f32 0.0, %v1377
      %v1379 = vpop.f32.mrb[0].mxu0
      %1380 = vmatprep.mubr.bf16.mxu0 %v1233
      %1381 = vmatmul.mubr.bf16.gmra.mrb[0].mxu0 %v1232
      %v1382 = vpop.f32.mrb[0].mxu0
      %v1383 = vadd.f32 0.0, %v1382
      %v1384 = vpop.f32.mrb[0].mxu0
      %v1385 = vpop.f32.mrb[0].mxu0
      %v1386 = vadd.f32 0.0, %v1385
      %v1387 = vpop.f32.mrb[0].mxu0
      %1388 = vmatprep.mubr.bf16.mxu0 %v1235
      %1389 = vmatmul.mubr.bf16.gmra.mrb[0].mxu0 %v1234
      %v1390 = vpop.f32.mrb[0].mxu0
      %v1391 = vadd.f32 0.0, %v1390
      %v1392 = vpop.f32.mrb[0].mxu0
      %v1393 = vpop.f32.mrb[0].mxu0
      %v1394 = vadd.f32 0.0, %v1393
      %v1395 = vpop.f32.mrb[0].mxu0
      %1396 = vmatprep.mubr.bf16.mxu0 %v1237
      %1397 = vmatmul.mubr.bf16.gmra.mrb[0].mxu0 %v1236
      %v1398 = vpop.f32.mrb[0].mxu0
      %v1399 = vadd.f32 0.0, %v1398
      %v1400 = vpop.f32.mrb[0].mxu0
      %v1401 = vpop.f32.mrb[0].mxu0
      %v1402 = vadd.f32 0.0, %v1401
      %v1403 = vpop.f32.mrb[0].mxu0
      %1404 = vmatprep.mubr.bf16.mxu0 %v1239
      %1405 = vmatmul.mubr.bf16.gmra.mrb[0].mxu0 %v1238
      %v1406 = vpop.f32.mrb[0].mxu0
      %v1407 = vadd.f32 0.0, %v1406
      %v1408 = vpop.f32.mrb[0].mxu0
      %v1409 = vpop.f32.mrb[0].mxu0
      %v1410 = vadd.f32 0.0, %v1409
      %v1411 = vpop.f32.mrb[0].mxu0
      %1412 = vmatprep.mubr.bf16.mxu0 %v1241
      %1413 = vmatmul.mubr.bf16.gmra.mrb[0].mxu0 %v1240
      %v1414 = vpop.f32.mrb[0].mxu0
      %v1415 = vadd.f32 0.0, %v1414
      %v1416 = vpop.f32.mrb[0].mxu0
      %v1417 = vpop.f32.mrb[0].mxu0
      %v1418 = vadd.f32 0.0, %v1417
      %v1419 = vpop.f32.mrb[0].mxu0
      %1420 = vmatprep.mubr.bf16.mxu0 %v1243
      %1421 = vmatmul.mubr.bf16.gmra.mrb[0].mxu0 %v1242
      %v1422 = vpop.f32.mrb[0].mxu0
      %v1423 = vadd.f32 0.0, %v1422
      %v1424 = vpop.f32.mrb[0].mxu0
      %v1425 = vpop.f32.mrb[0].mxu0
      %v1426 = vadd.f32 0.0, %v1425
      %v1427 = vpop.f32.mrb[0].mxu0
      %1428 = vmatprep.mubr.bf16.mxu0 %v1245
      %1429 = vmatmul.mubr.bf16.gmra.mrb[0].mxu0 %v1244
      %v1430 = vpop.f32.mrb[0].mxu0
      %v1431 = vadd.f32 0.0, %v1430
      %v1432 = vpop.f32.mrb[0].mxu0
      %v1433 = vpop.f32.mrb[0].mxu0
      %v1434 = vadd.f32 0.0, %v1433
      %v1435 = vpop.f32.mrb[0].mxu0
      %1436 = vmatprep.mubr.bf16.mxu0 %v1247
      %1437 = vmatmul.mubr.bf16.gmra.mrb[0].mxu0 %v1246
      %v1438 = vpop.f32.mrb[0].mxu0
      %v1439 = vadd.f32 0.0, %v1438
      %v1440 = vpop.f32.mrb[0].mxu0
      %v1441 = vpop.f32.mrb[0].mxu0
      %v1442 = vadd.f32 0.0, %v1441
      %v1443 = vpop.f32.mrb[0].mxu0
      %1444 = vmatprep.mubr.bf16.mxu0 %v1249
      %1445 = vmatmul.mubr.bf16.gmra.mrb[0].mxu0 %v1248
      %v1446 = vpop.f32.mrb[0].mxu0
      %v1447 = vadd.f32 0.0, %v1446
      %v1448 = vpop.f32.mrb[0].mxu0
      %v1449 = vpop.f32.mrb[0].mxu0
      %v1450 = vadd.f32 0.0, %v1449
      %v1451 = vpop.f32.mrb[0].mxu0
      %1452 = vmatprep.mubr.bf16.mxu0 %v1251
      %1453 = vmatmul.mubr.bf16.gmra.mrb[0].mxu0 %v1250
      %v1454 = vpop.f32.mrb[0].mxu0
      %v1455 = vadd.f32 0.0, %v1454
      %v1456 = vpop.f32.mrb[0].mxu0
      %v1457 = vpop.f32.mrb[0].mxu0
      %v1458 = vadd.f32 0.0, %v1457
      %v1459 = vpop.f32.mrb[0].mxu0
      %1460 = vdwg.mxu0
      %v1461 = vrcp.pop %v1126
      %v1462 = vrcp.pop %v1129
      %v1463 = vrcp.pop %v1132
      %v1464 = vrcp.pop %v1135
      %v1465 = vrcp.pop %v1138
      %v1466 = vrcp.pop %v1141
      %v1467 = vrcp.pop %v1144
      %v1468 = vrcp.pop %v1147
      %v1469 = vrcp.pop %v1150
      %v1470 = vrcp.pop %v1153
      %v1471 = vrcp.pop %v1156
      %v1472 = vrcp.pop %v1159
      %v1473 = vrcp.pop %v1162
      %v1474 = vrcp.pop %v1165
      %v1475 = vrcp.pop %v1168
      %v1476 = vrcp.pop %v1171
      %v1477 = vrcp.pop %v1174
      %v1478 = vrcp.pop %v1177
      %v1479 = vrcp.pop %v1180
      %v1480 = vrcp.pop %v1183
      %v1481 = vrcp.pop %v1186
      %v1482 = vrcp.pop %v1189
      %v1483 = vrcp.pop %v1192
      %v1484 = vrcp.pop %v1195
      %v1485 = vrcp.pop %v1198
      %v1486 = vrcp.pop %v1201
      %v1487 = vrcp.pop %v1204
      %v1488 = vrcp.pop %v1207
      %v1489 = vrcp.pop %v1210
      %v1490 = vrcp.pop %v1213
      %v1491 = vrcp.pop %v1216
      %v1492 = vrcp.pop %v1219
      %v1493 = vmul.f32 %v1335, %v1461
      %v1494 = vmul.f32 %v1338, %v1462
      %v1495 = vmul.f32 %v1343, %v1463
      %v1496 = vmul.f32 %v1346, %v1464
      %v1497 = vmul.f32 %v1351, %v1465
      %v1498 = vmul.f32 %v1354, %v1466
      %v1499 = vmul.f32 %v1359, %v1467
      %v1500 = vmul.f32 %v1362, %v1468
      %v1501 = vmul.f32 %v1367, %v1469
      %v1502 = vmul.f32 %v1370, %v1470
      %v1503 = vmul.f32 %v1375, %v1471
      %v1504 = vmul.f32 %v1378, %v1472
      %v1505 = vmul.f32 %v1383, %v1473
      %v1506 = vmul.f32 %v1386, %v1474
      %v1507 = vmul.f32 %v1391, %v1475
      %v1508 = vmul.f32 %v1394, %v1476
      %v1509 = vmul.f32 %v1399, %v1477
      %v1510 = vmul.f32 %v1402, %v1478
      %v1511 = vmul.f32 %v1407, %v1479
      %v1512 = vmul.f32 %v1410, %v1480
      %v1513 = vmul.f32 %v1415, %v1481
      %v1514 = vmul.f32 %v1418, %v1482
      %v1515 = vmul.f32 %v1423, %v1483
      %v1516 = vmul.f32 %v1426, %v1484
      %v1517 = vmul.f32 %v1431, %v1485
      %v1518 = vmul.f32 %v1434, %v1486
      %v1519 = vmul.f32 %v1439, %v1487
      %v1520 = vmul.f32 %v1442, %v1488
      %v1521 = vmul.f32 %v1447, %v1489
      %v1522 = vmul.f32 %v1450, %v1490
      %v1523 = vmul.f32 %v1455, %v1491
      %v1524 = vmul.f32 %v1458, %v1492
      %v1525 = vpack.c.bf16 %v1494, %v1493
      %v1526 = vpack.c.bf16 %v1496, %v1495
      %v1527 = vpack.c.bf16 %v1498, %v1497
      %v1528 = vpack.c.bf16 %v1500, %v1499
      %v1529 = vpack.c.bf16 %v1502, %v1501
      %v1530 = vpack.c.bf16 %v1504, %v1503
      %v1531 = vpack.c.bf16 %v1506, %v1505
      %v1532 = vpack.c.bf16 %v1508, %v1507
      %v1533 = vpack.c.bf16 %v1510, %v1509
      %v1534 = vpack.c.bf16 %v1512, %v1511
      %v1535 = vpack.c.bf16 %v1514, %v1513
      %v1536 = vpack.c.bf16 %v1516, %v1515
      %v1537 = vpack.c.bf16 %v1518, %v1517
      %v1538 = vpack.c.bf16 %v1520, %v1519
      %v1539 = vpack.c.bf16 %v1522, %v1521
      %v1540 = vpack.c.bf16 %v1524, %v1523
      %v1541 = vld [vmem:[%s4] sm:$0xf]
      %v1542 = vld [vmem:[%s4 + $0x4] sm:$0xf]
      %v1545 = vunpack.c.l.b16 %v1541
      %v1546 = vunpack.c.l.b16 %v1542
      %v1547 = vpack.c.b16 %v1546, %v1545
      %vm1549 = vcmask 130048
      %v1551 = vsel %vm1549, %v1525, 0
      %v1554 = vsel %vm1549, %v1526, 0
      %v1557 = vsel %vm1549, %v1527, 0
      %v1560 = vsel %vm1549, %v1528, 0
      %v1563 = vsel %vm1549, %v1529, 0
      %v1566 = vsel %vm1549, %v1530, 0
      %v1569 = vsel %vm1549, %v1531, 0
      %v1572 = vsel %vm1549, %v1532, 0
      %v1575 = vsel %vm1549, %v1533, 0
      %v1578 = vsel %vm1549, %v1534, 0
      %v1581 = vsel %vm1549, %v1535, 0
      %v1584 = vsel %vm1549, %v1536, 0
      %v1587 = vsel %vm1549, %v1537, 0
      %v1590 = vsel %vm1549, %v1538, 0
      %v1593 = vsel %vm1549, %v1539, 0
      %v1596 = vsel %vm1549, %v1540, 0
      %1598 = vmatprep.subr.bf16.mxu0 0
      %1599 = vmatpush1.bf16.msra.mxu0 %v1547
      %1600 = vmatprep.subr.bf16.mxu0 0
      %1601 = vmatpush1.bf16.msra.mxu0 0
      %1602 = vmatprep.subr.bf16.mxu0 0
      %1603 = vmatpush1.bf16.msra.mxu0 0
      %1604 = vmatprep.subr.bf16.mxu0 0
      %1605 = vmatpush1.bf16.msra.mxu0 0
      %1606 = vmatprep.subr.bf16.mxu0 0
      %1607 = vmatpush1.bf16.msra.mxu0 0
      %1608 = vmatprep.subr.bf16.mxu0 0
      %1609 = vmatpush1.bf16.msra.mxu0 0
      %1610 = vmatprep.subr.bf16.mxu0 0
      %1611 = vmatpush1.bf16.msra.mxu0 0
      %1612 = vmatprep.subr.bf16.mxu0 0
      %1613 = vmatpush1.bf16.msra.mxu0 0
      %1614 = vmatprep.subr.bf16.mxu0 0
      %1615 = vmatpush1.bf16.msra.mxu0 0
      %1616 = vmatprep.subr.bf16.mxu0 0
      %1617 = vmatpush1.bf16.msra.mxu0 0
      %1618 = vmatprep.subr.bf16.mxu0 0
      %1619 = vmatpush1.bf16.msra.mxu0 0
      %1620 = vmatprep.subr.bf16.mxu0 0
      %1621 = vmatpush1.bf16.msra.mxu0 0
      %1622 = vmatprep.subr.bf16.mxu0 0
      %1623 = vmatpush1.bf16.msra.mxu0 0
      %1624 = vmatprep.subr.bf16.mxu0 0
      %1625 = vmatpush1.bf16.msra.mxu0 0
      %1626 = vmatprep.subr.bf16.mxu0 0
      %1627 = vmatpush1.bf16.msra.mxu0 0
      %1628 = vmatprep.subr.bf16.mxu0 0
      %1629 = vmatpush1.bf16.msra.mxu0 0
      %1630 = vmatprep.mubr.bf16.mxu0 0
      %1631 = vmatmul.mubr.bf16.gmra.mrb[0].mxu0 %v1551
      %v1632 = vpop.f32.mrb[0].mxu0
      %v1633 = vadd.f32 0.0, %v1632
      %v1634 = vpop.f32.mrb[0].mxu0
      %v1635 = vpop.f32.mrb[0].mxu0
      %v1636 = vadd.f32 0.0, %v1635
      %v1637 = vpop.f32.mrb[0].mxu0
      %1638 = vmatprep.mubr.bf16.mxu0 0
      %1639 = vmatmul.mubr.bf16.gmra.mrb[0].mxu0 %v1554
      %v1640 = vpop.f32.mrb[0].mxu0
      %v1641 = vadd.f32 0.0, %v1640
      %v1642 = vpop.f32.mrb[0].mxu0
      %v1643 = vpop.f32.mrb[0].mxu0
      %v1644 = vadd.f32 0.0, %v1643
      %v1645 = vpop.f32.mrb[0].mxu0
      %1646 = vmatprep.mubr.bf16.mxu0 0
      %1647 = vmatmul.mubr.bf16.gmra.mrb[0].mxu0 %v1557
      %v1648 = vpop.f32.mrb[0].mxu0
      %v1649 = vadd.f32 0.0, %v1648
      %v1650 = vpop.f32.mrb[0].mxu0
      %v1651 = vpop.f32.mrb[0].mxu0
      %v1652 = vadd.f32 0.0, %v1651
      %v1653 = vpop.f32.mrb[0].mxu0
      %1654 = vmatprep.mubr.bf16.mxu0 0
      %1655 = vmatmul.mubr.bf16.gmra.mrb[0].mxu0 %v1560
      %v1656 = vpop.f32.mrb[0].mxu0
      %v1657 = vadd.f32 0.0, %v1656
      %v1658 = vpop.f32.mrb[0].mxu0
      %v1659 = vpop.f32.mrb[0].mxu0
      %v1660 = vadd.f32 0.0, %v1659
      %v1661 = vpop.f32.mrb[0].mxu0
      %1662 = vmatprep.mubr.bf16.mxu0 0
      %1663 = vmatmul.mubr.bf16.gmra.mrb[0].mxu0 %v1563
      %v1664 = vpop.f32.mrb[0].mxu0
      %v1665 = vadd.f32 0.0, %v1664
      %v1666 = vpop.f32.mrb[0].mxu0
      %v1667 = vpop.f32.mrb[0].mxu0
      %v1668 = vadd.f32 0.0, %v1667
      %v1669 = vpop.f32.mrb[0].mxu0
      %1670 = vmatprep.mubr.bf16.mxu0 0
      %1671 = vmatmul.mubr.bf16.gmra.mrb[0].mxu0 %v1566
      %v1672 = vpop.f32.mrb[0].mxu0
      %v1673 = vadd.f32 0.0, %v1672
      %v1674 = vpop.f32.mrb[0].mxu0
      %v1675 = vpop.f32.mrb[0].mxu0
      %v1676 = vadd.f32 0.0, %v1675
      %v1677 = vpop.f32.mrb[0].mxu0
      %1678 = vmatprep.mubr.bf16.mxu0 0
      %1679 = vmatmul.mubr.bf16.gmra.mrb[0].mxu0 %v1569
      %v1680 = vpop.f32.mrb[0].mxu0
      %v1681 = vadd.f32 0.0, %v1680
      %v1682 = vpop.f32.mrb[0].mxu0
      %v1683 = vpop.f32.mrb[0].mxu0
      %v1684 = vadd.f32 0.0, %v1683
      %v1685 = vpop.f32.mrb[0].mxu0
      %1686 = vmatprep.mubr.bf16.mxu0 0
      %1687 = vmatmul.mubr.bf16.gmra.mrb[0].mxu0 %v1572
      %v1688 = vpop.f32.mrb[0].mxu0
      %v1689 = vadd.f32 0.0, %v1688
      %v1690 = vpop.f32.mrb[0].mxu0
      %v1691 = vpop.f32.mrb[0].mxu0
      %v1692 = vadd.f32 0.0, %v1691
      %v1693 = vpop.f32.mrb[0].mxu0
      %1694 = vmatprep.mubr.bf16.mxu0 0
      %1695 = vmatmul.mubr.bf16.gmra.mrb[0].mxu0 %v1575
      %v1696 = vpop.f32.mrb[0].mxu0
      %v1697 = vadd.f32 0.0, %v1696
      %v1698 = vpop.f32.mrb[0].mxu0
      %v1699 = vpop.f32.mrb[0].mxu0
      %v1700 = vadd.f32 0.0, %v1699
      %v1701 = vpop.f32.mrb[0].mxu0
      %1702 = vmatprep.mubr.bf16.mxu0 0
      %1703 = vmatmul.mubr.bf16.gmra.mrb[0].mxu0 %v1578
      %v1704 = vpop.f32.mrb[0].mxu0
      %v1705 = vadd.f32 0.0, %v1704
      %v1706 = vpop.f32.mrb[0].mxu0
      %v1707 = vpop.f32.mrb[0].mxu0
      %v1708 = vadd.f32 0.0, %v1707
      %v1709 = vpop.f32.mrb[0].mxu0
      %1710 = vmatprep.mubr.bf16.mxu0 0
      %1711 = vmatmul.mubr.bf16.gmra.mrb[0].mxu0 %v1581
      %v1712 = vpop.f32.mrb[0].mxu0
      %v1713 = vadd.f32 0.0, %v1712
      %v1714 = vpop.f32.mrb[0].mxu0
      %v1715 = vpop.f32.mrb[0].mxu0
      %v1716 = vadd.f32 0.0, %v1715
      %v1717 = vpop.f32.mrb[0].mxu0
      %1718 = vmatprep.mubr.bf16.mxu0 0
      %1719 = vmatmul.mubr.bf16.gmra.mrb[0].mxu0 %v1584
      %v1720 = vpop.f32.mrb[0].mxu0
      %v1721 = vadd.f32 0.0, %v1720
      %v1722 = vpop.f32.mrb[0].mxu0
      %v1723 = vpop.f32.mrb[0].mxu0
      %v1724 = vadd.f32 0.0, %v1723
      %v1725 = vpop.f32.mrb[0].mxu0
      %1726 = vmatprep.mubr.bf16.mxu0 0
      %1727 = vmatmul.mubr.bf16.gmra.mrb[0].mxu0 %v1587
      %v1728 = vpop.f32.mrb[0].mxu0
      %v1729 = vadd.f32 0.0, %v1728
      %v1730 = vpop.f32.mrb[0].mxu0
      %v1731 = vpop.f32.mrb[0].mxu0
      %v1732 = vadd.f32 0.0, %v1731
      %v1733 = vpop.f32.mrb[0].mxu0
      %1734 = vmatprep.mubr.bf16.mxu0 0
      %1735 = vmatmul.mubr.bf16.gmra.mrb[0].mxu0 %v1590
      %v1736 = vpop.f32.mrb[0].mxu0
      %v1737 = vadd.f32 0.0, %v1736
      %v1738 = vpop.f32.mrb[0].mxu0
      %v1739 = vpop.f32.mrb[0].mxu0
      %v1740 = vadd.f32 0.0, %v1739
      %v1741 = vpop.f32.mrb[0].mxu0
      %1742 = vmatprep.mubr.bf16.mxu0 0
      %1743 = vmatmul.mubr.bf16.gmra.mrb[0].mxu0 %v1593
      %v1744 = vpop.f32.mrb[0].mxu0
      %v1745 = vadd.f32 0.0, %v1744
      %v1746 = vpop.f32.mrb[0].mxu0
      %v1747 = vpop.f32.mrb[0].mxu0
      %v1748 = vadd.f32 0.0, %v1747
      %v1749 = vpop.f32.mrb[0].mxu0
      %1750 = vmatprep.mubr.bf16.mxu0 0
      %1751 = vmatmul.mubr.bf16.gmra.mrb[0].mxu0 %v1596
      %v1752 = vpop.f32.mrb[0].mxu0
      %v1753 = vadd.f32 0.0, %v1752
      %v1754 = vpop.f32.mrb[0].mxu0
      %v1755 = vpop.f32.mrb[0].mxu0
      %v1756 = vadd.f32 0.0, %v1755
      %v1757 = vpop.f32.mrb[0].mxu0
      %1758 = vdwg.mxu0
      %s1759 = sld [smem:[#allocation2]]
      %v1760 = vstv %s1759
      %v1761 = vmul.f32 %v1760, %v1633
      %v1762 = vmul.f32 %v1760, %v1636
      %v1763 = vmul.f32 %v1760, %v1641
      %v1764 = vmul.f32 %v1760, %v1644
      %v1765 = vmul.f32 %v1760, %v1649
      %v1766 = vmul.f32 %v1760, %v1652
      %v1767 = vmul.f32 %v1760, %v1657
      %v1768 = vmul.f32 %v1760, %v1660
      %v1769 = vmul.f32 %v1760, %v1665
      %v1770 = vmul.f32 %v1760, %v1668
      %v1771 = vmul.f32 %v1760, %v1673
      %v1772 = vmul.f32 %v1760, %v1676
      %v1773 = vmul.f32 %v1760, %v1681
      %v1774 = vmul.f32 %v1760, %v1684
      %v1775 = vmul.f32 %v1760, %v1689
      %v1776 = vmul.f32 %v1760, %v1692
      %v1777 = vmul.f32 %v1760, %v1697
      %v1778 = vmul.f32 %v1760, %v1700
      %v1779 = vmul.f32 %v1760, %v1705
      %v1780 = vmul.f32 %v1760, %v1708
      %v1781 = vmul.f32 %v1760, %v1713
      %v1782 = vmul.f32 %v1760, %v1716
      %v1783 = vmul.f32 %v1760, %v1721
      %v1784 = vmul.f32 %v1760, %v1724
      %v1785 = vmul.f32 %v1760, %v1729
      %v1786 = vmul.f32 %v1760, %v1732
      %v1787 = vmul.f32 %v1760, %v1737
      %v1788 = vmul.f32 %v1760, %v1740
      %v1789 = vmul.f32 %v1760, %v1745
      %v1790 = vmul.f32 %v1760, %v1748
      %v1791 = vmul.f32 %v1760, %v1753
      %v1792 = vmul.f32 %v1760, %v1756
      %v1793 = vld [vmem:[%s294] sm:$0xff]
      %v1794 = vld [vmem:[%s294 + $0x8] sm:$0xff]
      %v1795 = vld [vmem:[%s294 + $0x10] sm:$0xff]
      %v1796 = vld [vmem:[%s294 + $0x18] sm:$0xff]
      %v1797 = vld [vmem:[%s294 + $0x20] sm:$0xff]
      %v1798 = vld [vmem:[%s294 + $0x28] sm:$0xff]
      %v1799 = vld [vmem:[%s294 + $0x30] sm:$0xff]
      %v1800 = vld [vmem:[%s294 + $0x38] sm:$0xff]
      %v1801 = vld [vmem:[%s294 + $0x40] sm:$0xff]
      %v1802 = vld [vmem:[%s294 + $0x48] sm:$0xff]
      %v1803 = vld [vmem:[%s294 + $0x50] sm:$0xff]
      %v1804 = vld [vmem:[%s294 + $0x58] sm:$0xff]
      %v1805 = vld [vmem:[%s294 + $0x60] sm:$0xff]
      %v1806 = vld [vmem:[%s294 + $0x68] sm:$0xff]
      %v1807 = vld [vmem:[%s294 + $0x70] sm:$0xff]
      %v1808 = vld [vmem:[%s294 + $0x78] sm:$0xff]
      %v1809 = vld [vmem:[%s294 + $0x80] sm:$0xff]
      %v1810 = vld [vmem:[%s294 + $0x88] sm:$0xff]
      %v1811 = vld [vmem:[%s294 + $0x90] sm:$0xff]
      %v1812 = vld [vmem:[%s294 + $0x98] sm:$0xff]
      %v1813 = vld [vmem:[%s294 + $0xa0] sm:$0xff]
      %v1814 = vld [vmem:[%s294 + $0xa8] sm:$0xff]
      %v1815 = vld [vmem:[%s294 + $0xb0] sm:$0xff]
      %v1816 = vld [vmem:[%s294 + $0xb8] sm:$0xff]
      %v1817 = vld [vmem:[%s294 + $0xc0] sm:$0xff]
      %v1818 = vld [vmem:[%s294 + $0xc8] sm:$0xff]
      %v1819 = vld [vmem:[%s294 + $0xd0] sm:$0xff]
      %v1820 = vld [vmem:[%s294 + $0xd8] sm:$0xff]
      %v1821 = vld [vmem:[%s294 + $0xe0] sm:$0xff]
      %v1822 = vld [vmem:[%s294 + $0xe8] sm:$0xff]
      %v1823 = vld [vmem:[%s294 + $0xf0] sm:$0xff]
      %v1824 = vld [vmem:[%s294 + $0xf8] sm:$0xff]
      %v1825 = vadd.f32 %v1761, %v1793
      %v1826 = vadd.f32 %v1762, %v1794
      %v1827 = vadd.f32 %v1763, %v1795
      %v1828 = vadd.f32 %v1764, %v1796
      %v1829 = vadd.f32 %v1765, %v1797
      %v1830 = vadd.f32 %v1766, %v1798
      %v1831 = vadd.f32 %v1767, %v1799
      %v1832 = vadd.f32 %v1768, %v1800
      %v1833 = vadd.f32 %v1769, %v1801
      %v1834 = vadd.f32 %v1770, %v1802
      %v1835 = vadd.f32 %v1771, %v1803
      %v1836 = vadd.f32 %v1772, %v1804
      %v1837 = vadd.f32 %v1773, %v1805
      %v1838 = vadd.f32 %v1774, %v1806
      %v1839 = vadd.f32 %v1775, %v1807
      %v1840 = vadd.f32 %v1776, %v1808
      %v1841 = vadd.f32 %v1777, %v1809
      %v1842 = vadd.f32 %v1778, %v1810
      %v1843 = vadd.f32 %v1779, %v1811
      %v1844 = vadd.f32 %v1780, %v1812
      %v1845 = vadd.f32 %v1781, %v1813
      %v1846 = vadd.f32 %v1782, %v1814
      %v1847 = vadd.f32 %v1783, %v1815
      %v1848 = vadd.f32 %v1784, %v1816
      %v1849 = vadd.f32 %v1785, %v1817
      %v1850 = vadd.f32 %v1786, %v1818
      %v1851 = vadd.f32 %v1787, %v1819
      %v1852 = vadd.f32 %v1788, %v1820
      %v1853 = vadd.f32 %v1789, %v1821
      %v1854 = vadd.f32 %v1790, %v1822
      %v1855 = vadd.f32 %v1791, %v1823
      %v1856 = vadd.f32 %v1792, %v1824
      %vm1857 = vcmask 261120
      %1858 = vst.msk [vmem:[%s319] sm:$0xff] %vm1857, %v1825
      %1859 = vst.msk [vmem:[%s319 + $0x8] sm:$0xff] %vm1857, %v1826
      %1860 = vst.msk [vmem:[%s319 + $0x10] sm:$0xff] %vm1857, %v1827
      %1861 = vst.msk [vmem:[%s319 + $0x18] sm:$0xff] %vm1857, %v1828
      %1862 = vst.msk [vmem:[%s319 + $0x20] sm:$0xff] %vm1857, %v1829
      %1863 = vst.msk [vmem:[%s319 + $0x28] sm:$0xff] %vm1857, %v1830
      %1864 = vst.msk [vmem:[%s319 + $0x30] sm:$0xff] %vm1857, %v1831
      %1865 = vst.msk [vmem:[%s319 + $0x38] sm:$0xff] %vm1857, %v1832
      %1866 = vst.msk [vmem:[%s319 + $0x40] sm:$0xff] %vm1857, %v1833
      %1867 = vst.msk [vmem:[%s319 + $0x48] sm:$0xff] %vm1857, %v1834
      %1868 = vst.msk [vmem:[%s319 + $0x50] sm:$0xff] %vm1857, %v1835
      %1869 = vst.msk [vmem:[%s319 + $0x58] sm:$0xff] %vm1857, %v1836
      %1870 = vst.msk [vmem:[%s319 + $0x60] sm:$0xff] %vm1857, %v1837
      %1871 = vst.msk [vmem:[%s319 + $0x68] sm:$0xff] %vm1857, %v1838
      %1872 = vst.msk [vmem:[%s319 + $0x70] sm:$0xff] %vm1857, %v1839
      %1873 = vst.msk [vmem:[%s319 + $0x78] sm:$0xff] %vm1857, %v1840
      %1874 = vst.msk [vmem:[%s319 + $0x80] sm:$0xff] %vm1857, %v1841
      %1875 = vst.msk [vmem:[%s319 + $0x88] sm:$0xff] %vm1857, %v1842
      %1876 = vst.msk [vmem:[%s319 + $0x90] sm:$0xff] %vm1857, %v1843
      %1877 = vst.msk [vmem:[%s319 + $0x98] sm:$0xff] %vm1857, %v1844
      %1878 = vst.msk [vmem:[%s319 + $0xa0] sm:$0xff] %vm1857, %v1845
      %1879 = vst.msk [vmem:[%s319 + $0xa8] sm:$0xff] %vm1857, %v1846
      %1880 = vst.msk [vmem:[%s319 + $0xb0] sm:$0xff] %vm1857, %v1847
      %1881 = vst.msk [vmem:[%s319 + $0xb8] sm:$0xff] %vm1857, %v1848
      %1882 = vst.msk [vmem:[%s319 + $0xc0] sm:$0xff] %vm1857, %v1849
      %1883 = vst.msk [vmem:[%s319 + $0xc8] sm:$0xff] %vm1857, %v1850
      %1884 = vst.msk [vmem:[%s319 + $0xd0] sm:$0xff] %vm1857, %v1851
      %1885 = vst.msk [vmem:[%s319 + $0xd8] sm:$0xff] %vm1857, %v1852
      %1886 = vst.msk [vmem:[%s319 + $0xe0] sm:$0xff] %vm1857, %v1853
      %1887 = vst.msk [vmem:[%s319 + $0xe8] sm:$0xff] %vm1857, %v1854
      %1888 = vst.msk [vmem:[%s319 + $0xf0] sm:$0xff] %vm1857, %v1855
      %1889 = vst.msk [vmem:[%s319 + $0xf8] sm:$0xff] %vm1857, %v1856
      %s1890 = smul.u32 32, %s22
      %p1891 = scmp.lt.s32.totalorder %s21, 1
      %s1892 = scalar_select %p1891, %s21, 1
      %p1893 = scmp.lt.s32.totalorder %s1890, 127
      %s1894 = scalar_select %p1893, %s1890, 127
      %s1895 = smul.addr %s1892, 128
      %s1896 = sadd.s32 %s1894, %s1895
      %s1897 = smul.addr %s1896, 8
      %s1898 = scalar_lea.vmem %s5, %s1897
      // Predicated region
      $region41: #{self_attention_forward.3} parent=39 // pred_check
        %p1899 = pneg %p173
      $region42: #{self_attention_forward.3} parent=39 // pred_check_branch
        %1901 = sbr.rel (%p1899) target = $region44
      $region43: #{self_attention_forward.3} parent=39 // pred_region
        %s1902 = smul.u32 32, %s22
      $region44: #{self_attention_forward.3} parent=39 // pred_fallthru
        _
    $region40: #{self_attention_forward.3} parent=5 // pred_fallthru
      _
    %p1903 = scmp.le.s32.totalorder 2, %s12
    // Predicated region
    $region45: #{self_attention_forward.3} parent=5 // pred_check
      %p1904 = pneg %p1903
    $region46: #{self_attention_forward.3} parent=5 // pred_check_branch
      %1906 = sbr.rel (%p1904) target = $region48
    $region47: #{self_attention_forward.3} parent=5 // pred_region
      %s1907 = ssub.s32 %s12, 2
      // Predicated region
      $region49: #{self_attention_forward.3} parent=47 // pred_check
        %p1908 = pneg %p179
      $region50: #{self_attention_forward.3} parent=47 // pred_check_branch
        %1910 = sbr.rel (%p1908) target = $region52
      $region51: #{self_attention_forward.3} parent=47 // pred_region
        %s1911 = smul.u32 32, %s24
        %p1912 = scmp.lt.s32.totalorder %s23, 1
        %s1913 = scalar_select %p1912, %s23, 1
        %p1914 = scmp.lt.s32.totalorder %s1911, 127
        %s1915 = scalar_select %p1914, %s1911, 127
        %s1916 = smul.addr %s1913, 128
        %s1917 = sadd.s32 %s1915, %s1916
        %s1918 = smul.addr %s1917, 8
        %s1919 = scalar_lea.vmem %s5, %s1918
      $region52: #{self_attention_forward.3} parent=47 // pred_fallthru
        _
    $region48: #{self_attention_forward.3} parent=5 // pred_fallthru
      _
  $region6: #{self_attention_forward.3} parent=0 // loop_footer
    %s16 = sadd.s32 1, %s12
  $region7: #{self_attention_forward.3} parent=0 // loop_footer_branch
    %11 = sbr.rel target = $region3
  $region8: #{self_attention_forward.3} parent=0 // loop_exit
    _

</llo_original>
